<compile_context>
chip_gen: v7x
topology: tpu7x:2x2x1
jax: 0.10.0
libtpu: 0.0.40
codegen_flags: <defaults>
</compile_context>

<pallas_src>
import functools

import jax
import jax.numpy as jnp
from jax.experimental import pallas as pl
from jax.experimental.pallas import tpu as pltpu

WIN = 2          # unfold / fold window (F.fold in the module hard-codes 2, stride 2)
BR_DILS = (1, 4, 6)   # conv2 / conv3 / conv4 dilations (conv2: 3x3, pad 1, dil 1)


# ----------------------------------------------------------------------------
# Static "plans": for every conv tap, which polyphase input / roll amount /
# mask row to use.  Pure-Python, resolved at trace time.
# ----------------------------------------------------------------------------
def _build_plans(H2, W2):
    P2 = H2 * W2
    shift_list = []
    shift_idx = {}

    def entry(sy, sx):
        roll_amt = (-(sy * W2 + sx)) % P2
        if sy == 0 and sx == 0:
            return roll_amt, None
        if (sy, sx) not in shift_idx:
            shift_idx[(sy, sx)] = len(shift_list)
            shift_list.append((sy, sx))
        return roll_amt, shift_idx[(sy, sx)]

    # down_conv (3x3, pad 1) evaluated on output pixel (2*h2+ky, 2*w2+kx):
    # each tap reads one polyphase component of x shifted by (sa, sb) on the
    # H2 x W2 grid.
    down_plan = []
    for ky in range(WIN):
        for kx in range(WIN):
            ent = []
            for dy in range(3):
                for dx in range(3):
                    sa, al = divmod(ky + dy - 1, WIN)
                    sb, be = divmod(kx + dx - 1, WIN)
                    roll_amt, mrow = entry(sa, sb)
                    ent.append((dy * 3 + dx, al * WIN + be, roll_amt, mrow))
            down_plan.append(tuple(ent))

    # ASPP 3x3 branches with dilation d (padding == d): shift (dy-1)*d, (dx-1)*d.
    br_plan = []
    for dil in BR_DILS:
        ent = []
        for dy in range(3):
            for dx in range(3):
                roll_amt, mrow = entry((dy - 1) * dil, (dx - 1) * dil)
                ent.append((dy * 3 + dx, roll_amt, mrow))
        br_plan.append(tuple(ent))
    return tuple(down_plan), tuple(br_plan), shift_list


# ----------------------------------------------------------------------------
# Fused kernel: one batch element per grid step, everything stays in VMEM.
# Activation layout: (channels, pixels) -- pixels on lanes.
# ----------------------------------------------------------------------------
def _fused_kernel(xph_ref, msk_ref, dw_ref, db_ref, w1_ref, w234_ref, w5_ref,
                  b15_ref, wfa_ref, wfg_ref, bfu_ref, wfold_ref, ub_ref, a_ref,
                  o_ref,
                  u_scr, cat_scr,
                  *, Cd, D, down_plan, br_plan):
    f32 = jnp.float32
    bf16 = jnp.bfloat16

    def prelu(v, a):
        return jnp.where(v >= 0, v, a * v)

    def tap(base_f32, roll_amt, mrow):
        v = base_f32
        if roll_amt:
            v = pltpu.roll(v, shift=roll_amt, axis=1)        # XLU rotate (cheap)
        if mrow is not None:
            v = v * msk_ref[mrow:mrow + 1, :]                 # exact zero-padding
        return v.astype(bf16)                                 # bf16 into the MXU

    # ---- down_conv (3x3 pad 1, BN folded) fused with unfold(2, stride 2):
    # computed directly on the 4 polyphase components of x, so the result is
    # already in unfold layout (channel = q*Cd + c, pixel = h2*W2 + w2).
    phases = [xph_ref[0, i] for i in range(WIN * WIN)]        # 4 x (Cin, P2) f32
    for q in range(WIN * WIN):
        acc = None
        for (t, ph, roll_amt, mrow) in down_plan[q]:
            d = jnp.dot(dw_ref[t], tap(phases[ph], roll_amt, mrow),
                        preferred_element_type=f32)
            acc = d if acc is None else acc + d
        u_scr[q * Cd:(q + 1) * Cd, :] = prelu(acc + db_ref[...], a_ref[0])
    u_f32 = u_scr[...]                                        # (FC, P2) f32
    u_bf = u_f32.astype(bf16)

    # ---- ASPP branches
    # conv1: 1x1
    cat_scr[0:D, :] = prelu(
        jnp.dot(w1_ref[...], u_bf, preferred_element_type=f32) + b15_ref[0],
        a_ref[1])
    # conv2/3/4: 3x3 with dilation 1 / 4 / 6, tap-accumulated (no im2col slab)
    for bi in range(3):
        acc = None
        for (t, roll_amt, mrow) in br_plan[bi]:
            d = jnp.dot(w234_ref[bi, t], tap(u_f32, roll_amt, mrow),
                        preferred_element_type=f32)
            acc = d if acc is None else acc + d
        cat_scr[(bi + 1) * D:(bi + 2) * D, :] = prelu(acc + b15_ref[bi + 1],
                                                      a_ref[2 + bi])
    # conv5: GAP -> 1x1 -> PReLU; bilinear upsample of a 1x1 map == broadcast.
    gap = jnp.mean(u_f32, axis=1, keepdims=True)              # (FC, 1)
    g = prelu(jnp.dot(w5_ref[...], gap.astype(bf16),
                      preferred_element_type=f32) + b15_ref[4], a_ref[5])  # (D, 1)

    # ---- fuse: one (FC, 4D) x (4D, P2) matmul + rank-1 GAP contribution
    cat4 = cat_scr[...].astype(bf16)                          # (4D, P2)
    z = prelu(jnp.dot(wfa_ref[...], cat4, preferred_element_type=f32)
              + jnp.dot(wfg_ref[...], g.astype(bf16), preferred_element_type=f32)
              + bfu_ref[...], a_ref[6])                       # (FC, P2)

    # ---- fold(2, stride 2) + up_conv(1x1), fused into one (4*Cb, FC) matrix
    o_ref[0] = (jnp.dot(wfold_ref[...], z.astype(bf16),
                        preferred_element_type=f32) + ub_ref[...])


# ----------------------------------------------------------------------------
# Parameters (deterministic, synthetic).  BN (inference) folded into conv.
# ----------------------------------------------------------------------------
def _conv_init(key, K, cin, cout, scale=0.2):
    kw, kb = jax.random.split(key)
    w = scale * jax.random.normal(kw, (K * K, cin, cout), jnp.float32)
    b = scale * jax.random.normal(kb, (cout,), jnp.float32)
    return w, b


def _bn_fold(w, b, key, cout, eps=1e-5):
    k1, k2, k3, k4 = jax.random.split(key, 4)
    gamma = 1.0 + 0.1 * jax.random.normal(k1, (cout,), jnp.float32)
    beta = 0.1 * jax.random.normal(k2, (cout,), jnp.float32)
    mean = 0.1 * jax.random.normal(k3, (cout,), jnp.float32)
    var = 1.0 + 0.1 * jnp.abs(jax.random.normal(k4, (cout,), jnp.float32))
    s = gamma / jnp.sqrt(var + eps)
    return w * s, (b - mean) * s + beta


def make_params(key, in_ch, out_ch, win=WIN):
    fold_c = out_ch * win * win
    D = fold_c // 2
    ks = jax.random.split(key, 16)
    p = {}
    w, b = _conv_init(ks[0], 3, in_ch, out_ch)
    p['down_w'], p['down_b'] = _bn_fold(w, b, ks[1], out_ch)
    p['down_a'] = jnp.float32(0.25)

    w, b = _conv_init(ks[2], 1, fold_c, D); p['w1'], p['b1'] = _bn_fold(w, b, ks[3], D)
    w, b = _conv_init(ks[4], 3, fold_c, D); p['w2'], p['b2'] = _bn_fold(w, b, ks[5], D)
    w, b = _conv_init(ks[6], 3, fold_c, D); p['w3'], p['b3'] = _bn_fold(w, b, ks[7], D)
    w, b = _conv_init(ks[8], 3, fold_c, D); p['w4'], p['b4'] = _bn_fold(w, b, ks[9], D)
    w, b = _conv_init(ks[10], 1, fold_c, D); p['w5'], p['b5'] = _bn_fold(w, b, ks[11], D)
    p['w1'] = p['w1'][0]                       # (fold_c, D)
    p['w5'] = p['w5'][0]

    w, b = _conv_init(ks[12], 1, 5 * D, fold_c)
    w, b = _bn_fold(w, b, ks[13], fold_c)
    p['wf'] = w[0].reshape(5, D, fold_c)       # split along concat order (f1..f5)
    p['bf'] = b
    for name in ('a1', 'a2', 'a3', 'a4', 'a5', 'af'):
        p[name] = jnp.float32(0.25)

    w, b = _conv_init(ks[14], 1, out_ch, out_ch)
    p['up_w'], p['up_b'] = w, b                # plain conv, no BN / activation
    return p


# ----------------------------------------------------------------------------
# Full forward (matches FoldConv_aspp.forward)
# ----------------------------------------------------------------------------
@jax.jit
def foldconv_aspp_forward(x_nchw, params):
    N, Cin, H, W = x_nchw.shape
    assert H % WIN == 0 and W % WIN == 0
    H2, W2 = H // WIN, W // WIN
    P2 = H2 * W2

    Cd = params['down_b'].shape[0]             # down_conv out channels
    FC = Cd * WIN * WIN                        # fold_C
    D = FC // 2                                # ASPP down_dim
    Cb = Cd                                    # up_conv channels

    # ---- input polyphase decomposition (pure relayout, done by XLA on host)
    x = x_nchw.astype(jnp.float32)
    xph = jnp.stack([x[:, :, a::WIN, b::WIN].reshape(N, Cin, P2)
                     for a in range(WIN) for b in range(WIN)], axis=1)  # (N,4,Cin,P2)

    # ---- static tap plans + 0/1 padding masks
    down_plan, br_plan, shift_list = _build_plans(H2, W2)
    hh = jnp.arange(H2).reshape(H2, 1)
    ww = jnp.arange(W2).reshape(1, W2)
    mrows = []
    for (sy, sx) in shift_list:
        m = ((hh + sy >= 0) & (hh + sy < H2) & (ww + sx >= 0) & (ww + sx < W2))
        mrows.append(m.reshape(P2))
    masks = jnp.stack(mrows).astype(jnp.float32)               # (NSH, P2)

    # ---- kernel-ready weights (channels-first, bf16 for the MXU) -----------
    dw = jnp.transpose(params['down_w'], (0, 2, 1)).astype(jnp.bfloat16)  # (9,Cd,Cin)
    db = params['down_b'].reshape(Cd, 1).astype(jnp.float32)

    # unfold channel permutation: ours (q*Cd + c)  <->  torch (c*4 + q)
    j = jnp.arange(FC)
    perm = (j % Cd) * (WIN * WIN) + (j // Cd)
    w1 = params['w1'].T[:, perm].astype(jnp.bfloat16)          # (D, FC)
    w5 = params['w5'].T[:, perm].astype(jnp.bfloat16)          # (D, FC)
    w234 = jnp.stack([params['w2'], params['w3'], params['w4']])        # (3,9,FC,D)
    w234 = jnp.transpose(w234, (0, 1, 3, 2))[:, :, :, perm].astype(jnp.bfloat16)
    b15 = jnp.stack([params['b1'], params['b2'], params['b3'],
                     params['b4'], params['b5']]).reshape(5, D, 1).astype(jnp.float32)

    wf_full = jnp.transpose(params['wf'], (2, 0, 1)).reshape(FC, 5 * D)  # (FC,5D)
    wfa = wf_full[:, :4 * D].astype(jnp.bfloat16)              # spatial branches
    wfg = wf_full[:, 4 * D:].astype(jnp.bfloat16)              # GAP branch column
    bfu = params['bf'].reshape(FC, 1).astype(jnp.float32)

    # fold(2,2) + up_conv(1x1) fused:
    #   out[q*Cb+co, p] = sum_c up_w[c, co] * z[c*4+q, p] + up_b[co]
    up_w = params['up_w'][0]                                    # (Cb_in, Cb_out)
    wfold = jnp.zeros((WIN * WIN * Cb, FC), jnp.float32)
    for q in range(WIN * WIN):
        for c in range(Cd):
            wfold = wfold.at[q * Cb:(q + 1) * Cb, c * WIN * WIN + q].set(up_w[c, :])
    wfold = wfold.astype(jnp.bfloat16)
    ub = jnp.tile(params['up_b'], WIN * WIN).reshape(WIN * WIN * Cb, 1).astype(jnp.float32)

    alphas = jnp.stack([params['down_a'], params['a1'], params['a2'],
                        params['a3'], params['a4'], params['a5'],
                        params['af']]).astype(jnp.float32)      # (7,)

    kern = functools.partial(_fused_kernel, Cd=Cd, D=D,
                             down_plan=down_plan, br_plan=br_plan)

    flops = N * 2 * (P2 * (WIN * WIN * 9 * Cin * Cd       # down_conv (per phase)
                           + FC * D                        # conv1
                           + 3 * 9 * FC * D                # conv2/3/4
                           + 4 * D * FC                    # fuse (spatial part)
                           + FC * WIN * WIN * Cb)          # fold + up_conv
                     + 2 * FC * D)                         # GAP matvecs
    operands = (xph, masks, dw, db, w1, w234, w5, b15, wfa, wfg, bfu, wfold,
                ub, alphas)
    bytes_accessed = (sum(int(o.size) * o.dtype.itemsize for o in operands)
                      + N * WIN * WIN * Cb * P2 * 4)

    out_blocks = pl.pallas_call(
        kern,
        out_shape=jax.ShapeDtypeStruct((N, WIN * WIN * Cb, P2), jnp.float32),
        grid=(N,),
        in_specs=[
            pl.BlockSpec((1, WIN * WIN, Cin, P2), lambda n: (n, 0, 0, 0)),
            pl.BlockSpec(masks.shape, lambda n: (0, 0)),
            pl.BlockSpec(dw.shape, lambda n: (0, 0, 0)),
            pl.BlockSpec(db.shape, lambda n: (0, 0)),
            pl.BlockSpec(w1.shape, lambda n: (0, 0)),
            pl.BlockSpec(w234.shape, lambda n: (0, 0, 0, 0)),
            pl.BlockSpec(w5.shape, lambda n: (0, 0)),
            pl.BlockSpec(b15.shape, lambda n: (0, 0, 0)),
            pl.BlockSpec(wfa.shape, lambda n: (0, 0)),
            pl.BlockSpec(wfg.shape, lambda n: (0, 0)),
            pl.BlockSpec(bfu.shape, lambda n: (0, 0)),
            pl.BlockSpec(wfold.shape, lambda n: (0, 0)),
            pl.BlockSpec(ub.shape, lambda n: (0, 0)),
            pl.BlockSpec(memory_space=pltpu.MemorySpace.SMEM),   # 7 PReLU alphas
        ],
        out_specs=pl.BlockSpec((1, WIN * WIN * Cb, P2), lambda n: (n, 0, 0)),
        scratch_shapes=[
            pltpu.VMEM((FC, P2), jnp.float32),          # unfolded activation u
            pltpu.VMEM((4 * D, P2), jnp.float32),       # concat(f1..f4) for fuse
        ],
        compiler_params=pltpu.CompilerParams(
            dimension_semantics=("parallel",),
            vmem_limit_bytes=48 * 1024 * 1024),
        cost_estimate=pl.CostEstimate(flops=flops, transcendentals=0,
                                      bytes_accessed=bytes_accessed),
    )(*operands)

    # window-position-blocked, lane-dense output  ->  NCHW
    out = out_blocks.reshape(N, WIN, WIN, Cb, H2, W2)
    out = jnp.transpose(out, (0, 3, 4, 1, 5, 2)).reshape(N, Cb, H, W)
    return out


if __name__ == "__main__":
    key = jax.random.PRNGKey(0)
    kx_, kp = jax.random.split(key)
    N, Cin, H, W = 2, 4, 16, 16
    out_ch = 4
    x = jax.random.normal(kx_, (N, Cin, H, W), jnp.float32)
    params = make_params(kp, Cin, out_ch)
    y = foldconv_aspp_forward(x, params)
    y = jax.block_until_ready(y)
    assert y.shape == (N, out_ch, H, W), y.shape
    assert bool(jnp.all(jnp.isfinite(y)))
    print("KERNEL_OK")
</pallas_src>

<mosaic_0001>
module attributes {stable_mosaic.version = 11 : i64} {
  func.func @_fused_kernel(%arg0: i32, %arg1: memref<1x4x4x64xf32, #tpu.memory_space<vmem>>, %arg2: memref<24x64xf32, #tpu.memory_space<vmem>>, %arg3: memref<9x4x4xbf16, #tpu.memory_space<vmem>>, %arg4: memref<4x1xf32, #tpu.memory_space<vmem>>, %arg5: memref<8x16xbf16, #tpu.memory_space<vmem>>, %arg6: memref<3x9x8x16xbf16, #tpu.memory_space<vmem>>, %arg7: memref<8x16xbf16, #tpu.memory_space<vmem>>, %arg8: memref<5x8x1xf32, #tpu.memory_space<vmem>>, %arg9: memref<16x32xbf16, #tpu.memory_space<vmem>>, %arg10: memref<16x8xbf16, #tpu.memory_space<vmem>>, %arg11: memref<16x1xf32, #tpu.memory_space<vmem>>, %arg12: memref<16x16xbf16, #tpu.memory_space<vmem>>, %arg13: memref<16x1xf32, #tpu.memory_space<vmem>>, %arg14: memref<7xf32, #tpu.memory_space<smem>>, %arg15: memref<1x16x64xf32, #tpu.memory_space<vmem>>, %arg16: memref<16x64xf32, #tpu.memory_space<vmem>>, %arg17: memref<32x64xf32, #tpu.memory_space<vmem>>) attributes {dimension_semantics = [#tpu.dimension_semantics<parallel>], iteration_bounds = array<i64: 2>, scalar_prefetch = 0 : i64, scratch_operands = 2 : i64, tpu.core_type = #tpu.core_type<tc>, window_params = [{transform_indices = @transform_0, window_bounds = array<i64: 1, 4, 4, 64>}, {pipeline_mode = #tpu.pipeline_mode<synchronous>, transform_indices = @transform_1, window_bounds = array<i64: 24, 64>}, {pipeline_mode = #tpu.pipeline_mode<synchronous>, transform_indices = @transform_2, window_bounds = array<i64: 9, 4, 4>}, {pipeline_mode = #tpu.pipeline_mode<synchronous>, transform_indices = @transform_3, window_bounds = array<i64: 4, 1>}, {pipeline_mode = #tpu.pipeline_mode<synchronous>, transform_indices = @transform_4, window_bounds = array<i64: 8, 16>}, {pipeline_mode = #tpu.pipeline_mode<synchronous>, transform_indices = @transform_5, window_bounds = array<i64: 3, 9, 8, 16>}, {pipeline_mode = #tpu.pipeline_mode<synchronous>, transform_indices = @transform_6, window_bounds = array<i64: 8, 16>}, {pipeline_mode = #tpu.pipeline_mode<synchronous>, transform_indices = @transform_7, window_bounds = array<i64: 5, 8, 1>}, {pipeline_mode = #tpu.pipeline_mode<synchronous>, transform_indices = @transform_8, window_bounds = array<i64: 16, 32>}, {pipeline_mode = #tpu.pipeline_mode<synchronous>, transform_indices = @transform_9, window_bounds = array<i64: 16, 8>}, {pipeline_mode = #tpu.pipeline_mode<synchronous>, transform_indices = @transform_10, window_bounds = array<i64: 16, 1>}, {pipeline_mode = #tpu.pipeline_mode<synchronous>, transform_indices = @transform_11, window_bounds = array<i64: 16, 16>}, {pipeline_mode = #tpu.pipeline_mode<synchronous>, transform_indices = @transform_12, window_bounds = array<i64: 16, 1>}, {transform_indices = @transform_13, window_bounds = array<i64: 7>}, {transform_indices = @transform_14, window_bounds = array<i64: 1, 16, 64>}]} {
    %c0 = arith.constant 0 : index
    %c0_0 = arith.constant 0 : index
    %c0_1 = arith.constant 0 : index
    %c0_2 = arith.constant 0 : index
    %0 = vector.load %arg1[%c0, %c0_0, %c0_1, %c0_2] : memref<1x4x4x64xf32, #tpu.memory_space<vmem>>, vector<1x1x4x64xf32>
    %1 = vector.shape_cast %0 : vector<1x1x4x64xf32> to vector<4x64xf32>
    %c0_3 = arith.constant 0 : index
    %c1 = arith.constant 1 : index
    %c0_4 = arith.constant 0 : index
    %c0_5 = arith.constant 0 : index
    %2 = vector.load %arg1[%c0_3, %c1, %c0_4, %c0_5] : memref<1x4x4x64xf32, #tpu.memory_space<vmem>>, vector<1x1x4x64xf32>
    %3 = vector.shape_cast %2 : vector<1x1x4x64xf32> to vector<4x64xf32>
    %c0_6 = arith.constant 0 : index
    %c2 = arith.constant 2 : index
    %c0_7 = arith.constant 0 : index
    %c0_8 = arith.constant 0 : index
    %4 = vector.load %arg1[%c0_6, %c2, %c0_7, %c0_8] : memref<1x4x4x64xf32, #tpu.memory_space<vmem>>, vector<1x1x4x64xf32>
    %5 = vector.shape_cast %4 : vector<1x1x4x64xf32> to vector<4x64xf32>
    %c0_9 = arith.constant 0 : index
    %c3 = arith.constant 3 : index
    %c0_10 = arith.constant 0 : index
    %c0_11 = arith.constant 0 : index
    %6 = vector.load %arg1[%c0_9, %c3, %c0_10, %c0_11] : memref<1x4x4x64xf32, #tpu.memory_space<vmem>>, vector<1x1x4x64xf32>
    %7 = vector.shape_cast %6 : vector<1x1x4x64xf32> to vector<4x64xf32>
    %c0_12 = arith.constant 0 : index
    %c0_13 = arith.constant 0 : index
    %c0_14 = arith.constant 0 : index
    %8 = vector.load %arg3[%c0_12, %c0_13, %c0_14] : memref<9x4x4xbf16, #tpu.memory_space<vmem>>, vector<1x4x4xbf16>
    %9 = vector.shape_cast %8 : vector<1x4x4xbf16> to vector<4x4xbf16>
    %c9_i32 = arith.constant 9 : i32
    %10 = tpu.dynamic_rotate %7 by %c9_i32 dim 1 : vector<4x64xf32>, i32 -> vector<4x64xf32>
    %c0_15 = arith.constant 0 : index
    %c0_16 = arith.constant 0 : index
    %11 = vector.load %arg2[%c0_15, %c0_16] : memref<24x64xf32, #tpu.memory_space<vmem>>, vector<1x64xf32>
    %12 = vector.broadcast %11 : vector<1x64xf32> to vector<4x64xf32>
    %13 = arith.mulf %10, %12 : vector<4x64xf32>
    %14 = arith.truncf %13 : vector<4x64xf32> to vector<4x64xbf16>
    %cst = arith.constant dense<0.000000e+00> : vector<4x64xf32>
    %15 = tpu.matmul %9, %14, %cst {dimension_numbers = #tpu.dot_dimension_numbers<[1], [0], [0], [1], [0, 0, 1, 1], [], []>} : vector<4x4xbf16>, vector<4x64xbf16>, vector<4x64xf32> -> vector<4x64xf32>
    %c1_17 = arith.constant 1 : index
    %c0_18 = arith.constant 0 : index
    %c0_19 = arith.constant 0 : index
    %16 = vector.load %arg3[%c1_17, %c0_18, %c0_19] : memref<9x4x4xbf16, #tpu.memory_space<vmem>>, vector<1x4x4xbf16>
    %17 = vector.shape_cast %16 : vector<1x4x4xbf16> to vector<4x4xbf16>
    %c8_i32 = arith.constant 8 : i32
    %18 = tpu.dynamic_rotate %5 by %c8_i32 dim 1 : vector<4x64xf32>, i32 -> vector<4x64xf32>
    %c1_20 = arith.constant 1 : index
    %c0_21 = arith.constant 0 : index
    %19 = vector.load %arg2[%c1_20, %c0_21] : memref<24x64xf32, #tpu.memory_space<vmem>>, vector<1x64xf32>
    %20 = vector.broadcast %19 : vector<1x64xf32> to vector<4x64xf32>
    %21 = arith.mulf %18, %20 : vector<4x64xf32>
    %22 = arith.truncf %21 : vector<4x64xf32> to vector<4x64xbf16>
    %cst_22 = arith.constant dense<0.000000e+00> : vector<4x64xf32>
    %23 = tpu.matmul %17, %22, %cst_22 {dimension_numbers = #tpu.dot_dimension_numbers<[1], [0], [0], [1], [0, 0, 1, 1], [], []>} : vector<4x4xbf16>, vector<4x64xbf16>, vector<4x64xf32> -> vector<4x64xf32>
    %24 = arith.addf %15, %23 : vector<4x64xf32>
    %c2_23 = arith.constant 2 : index
    %c0_24 = arith.constant 0 : index
    %c0_25 = arith.constant 0 : index
    %25 = vector.load %arg3[%c2_23, %c0_24, %c0_25] : memref<9x4x4xbf16, #tpu.memory_space<vmem>>, vector<1x4x4xbf16>
    %26 = vector.shape_cast %25 : vector<1x4x4xbf16> to vector<4x4xbf16>
    %c8_i32_26 = arith.constant 8 : i32
    %27 = tpu.dynamic_rotate %7 by %c8_i32_26 dim 1 : vector<4x64xf32>, i32 -> vector<4x64xf32>
    %c1_27 = arith.constant 1 : index
    %c0_28 = arith.constant 0 : index
    %28 = vector.load %arg2[%c1_27, %c0_28] : memref<24x64xf32, #tpu.memory_space<vmem>>, vector<1x64xf32>
    %29 = vector.broadcast %28 : vector<1x64xf32> to vector<4x64xf32>
    %30 = arith.mulf %27, %29 : vector<4x64xf32>
    %31 = arith.truncf %30 : vector<4x64xf32> to vector<4x64xbf16>
    %cst_29 = arith.constant dense<0.000000e+00> : vector<4x64xf32>
    %32 = tpu.matmul %26, %31, %cst_29 {dimension_numbers = #tpu.dot_dimension_numbers<[1], [0], [0], [1], [0, 0, 1, 1], [], []>} : vector<4x4xbf16>, vector<4x64xbf16>, vector<4x64xf32> -> vector<4x64xf32>
    %33 = arith.addf %24, %32 : vector<4x64xf32>
    %c3_30 = arith.constant 3 : index
    %c0_31 = arith.constant 0 : index
    %c0_32 = arith.constant 0 : index
    %34 = vector.load %arg3[%c3_30, %c0_31, %c0_32] : memref<9x4x4xbf16, #tpu.memory_space<vmem>>, vector<1x4x4xbf16>
    %35 = vector.shape_cast %34 : vector<1x4x4xbf16> to vector<4x4xbf16>
    %c1_i32 = arith.constant 1 : i32
    %36 = tpu.dynamic_rotate %3 by %c1_i32 dim 1 : vector<4x64xf32>, i32 -> vector<4x64xf32>
    %c2_33 = arith.constant 2 : index
    %c0_34 = arith.constant 0 : index
    %37 = vector.load %arg2[%c2_33, %c0_34] : memref<24x64xf32, #tpu.memory_space<vmem>>, vector<1x64xf32>
    %38 = vector.broadcast %37 : vector<1x64xf32> to vector<4x64xf32>
    %39 = arith.mulf %36, %38 : vector<4x64xf32>
    %40 = arith.truncf %39 : vector<4x64xf32> to vector<4x64xbf16>
    %cst_35 = arith.constant dense<0.000000e+00> : vector<4x64xf32>
    %41 = tpu.matmul %35, %40, %cst_35 {dimension_numbers = #tpu.dot_dimension_numbers<[1], [0], [0], [1], [0, 0, 1, 1], [], []>} : vector<4x4xbf16>, vector<4x64xbf16>, vector<4x64xf32> -> vector<4x64xf32>
    %42 = arith.addf %33, %41 : vector<4x64xf32>
    %c4 = arith.constant 4 : index
    %c0_36 = arith.constant 0 : index
    %c0_37 = arith.constant 0 : index
    %43 = vector.load %arg3[%c4, %c0_36, %c0_37] : memref<9x4x4xbf16, #tpu.memory_space<vmem>>, vector<1x4x4xbf16>
    %44 = vector.shape_cast %43 : vector<1x4x4xbf16> to vector<4x4xbf16>
    %45 = arith.truncf %1 : vector<4x64xf32> to vector<4x64xbf16>
    %cst_38 = arith.constant dense<0.000000e+00> : vector<4x64xf32>
    %46 = tpu.matmul %44, %45, %cst_38 {dimension_numbers = #tpu.dot_dimension_numbers<[1], [0], [0], [1], [0, 0, 1, 1], [], []>} : vector<4x4xbf16>, vector<4x64xbf16>, vector<4x64xf32> -> vector<4x64xf32>
    %47 = arith.addf %42, %46 : vector<4x64xf32>
    %c5 = arith.constant 5 : index
    %c0_39 = arith.constant 0 : index
    %c0_40 = arith.constant 0 : index
    %48 = vector.load %arg3[%c5, %c0_39, %c0_40] : memref<9x4x4xbf16, #tpu.memory_space<vmem>>, vector<1x4x4xbf16>
    %49 = vector.shape_cast %48 : vector<1x4x4xbf16> to vector<4x4xbf16>
    %50 = arith.truncf %3 : vector<4x64xf32> to vector<4x64xbf16>
    %cst_41 = arith.constant dense<0.000000e+00> : vector<4x64xf32>
    %51 = tpu.matmul %49, %50, %cst_41 {dimension_numbers = #tpu.dot_dimension_numbers<[1], [0], [0], [1], [0, 0, 1, 1], [], []>} : vector<4x4xbf16>, vector<4x64xbf16>, vector<4x64xf32> -> vector<4x64xf32>
    %52 = arith.addf %47, %51 : vector<4x64xf32>
    %c6 = arith.constant 6 : index
    %c0_42 = arith.constant 0 : index
    %c0_43 = arith.constant 0 : index
    %53 = vector.load %arg3[%c6, %c0_42, %c0_43] : memref<9x4x4xbf16, #tpu.memory_space<vmem>>, vector<1x4x4xbf16>
    %54 = vector.shape_cast %53 : vector<1x4x4xbf16> to vector<4x4xbf16>
    %c1_i32_44 = arith.constant 1 : i32
    %55 = tpu.dynamic_rotate %7 by %c1_i32_44 dim 1 : vector<4x64xf32>, i32 -> vector<4x64xf32>
    %c2_45 = arith.constant 2 : index
    %c0_46 = arith.constant 0 : index
    %56 = vector.load %arg2[%c2_45, %c0_46] : memref<24x64xf32, #tpu.memory_space<vmem>>, vector<1x64xf32>
    %57 = vector.broadcast %56 : vector<1x64xf32> to vector<4x64xf32>
    %58 = arith.mulf %55, %57 : vector<4x64xf32>
    %59 = arith.truncf %58 : vector<4x64xf32> to vector<4x64xbf16>
    %cst_47 = arith.constant dense<0.000000e+00> : vector<4x64xf32>
    %60 = tpu.matmul %54, %59, %cst_47 {dimension_numbers = #tpu.dot_dimension_numbers<[1], [0], [0], [1], [0, 0, 1, 1], [], []>} : vector<4x4xbf16>, vector<4x64xbf16>, vector<4x64xf32> -> vector<4x64xf32>
    %61 = arith.addf %52, %60 : vector<4x64xf32>
    %c7 = arith.constant 7 : index
    %c0_48 = arith.constant 0 : index
    %c0_49 = arith.constant 0 : index
    %62 = vector.load %arg3[%c7, %c0_48, %c0_49] : memref<9x4x4xbf16, #tpu.memory_space<vmem>>, vector<1x4x4xbf16>
    %63 = vector.shape_cast %62 : vector<1x4x4xbf16> to vector<4x4xbf16>
    %64 = arith.truncf %5 : vector<4x64xf32> to vector<4x64xbf16>
    %cst_50 = arith.constant dense<0.000000e+00> : vector<4x64xf32>
    %65 = tpu.matmul %63, %64, %cst_50 {dimension_numbers = #tpu.dot_dimension_numbers<[1], [0], [0], [1], [0, 0, 1, 1], [], []>} : vector<4x4xbf16>, vector<4x64xbf16>, vector<4x64xf32> -> vector<4x64xf32>
    %66 = arith.addf %61, %65 : vector<4x64xf32>
    %c8 = arith.constant 8 : index
    %c0_51 = arith.constant 0 : index
    %c0_52 = arith.constant 0 : index
    %67 = vector.load %arg3[%c8, %c0_51, %c0_52] : memref<9x4x4xbf16, #tpu.memory_space<vmem>>, vector<1x4x4xbf16>
    %68 = vector.shape_cast %67 : vector<1x4x4xbf16> to vector<4x4xbf16>
    %69 = arith.truncf %7 : vector<4x64xf32> to vector<4x64xbf16>
    %cst_53 = arith.constant dense<0.000000e+00> : vector<4x64xf32>
    %70 = tpu.matmul %68, %69, %cst_53 {dimension_numbers = #tpu.dot_dimension_numbers<[1], [0], [0], [1], [0, 0, 1, 1], [], []>} : vector<4x4xbf16>, vector<4x64xbf16>, vector<4x64xf32> -> vector<4x64xf32>
    %71 = arith.addf %66, %70 : vector<4x64xf32>
    %c0_54 = arith.constant 0 : index
    %c0_55 = arith.constant 0 : index
    %72 = vector.load %arg4[%c0_54, %c0_55] : memref<4x1xf32, #tpu.memory_space<vmem>>, vector<4x1xf32>
    %73 = vector.broadcast %72 : vector<4x1xf32> to vector<4x64xf32>
    %74 = arith.addf %71, %73 : vector<4x64xf32>
    %c0_56 = arith.constant 0 : index
    %75 = memref.load %arg14[%c0_56] : memref<7xf32, #tpu.memory_space<smem>>
    %cst_57 = arith.constant 0.000000e+00 : f32
    %76 = vector.broadcast %cst_57 : f32 to vector<4x64xf32>
    %77 = arith.cmpf oge, %74, %76 : vector<4x64xf32>
    %78 = vector.broadcast %75 : f32 to vector<4x64xf32>
    %79 = arith.mulf %78, %74 : vector<4x64xf32>
    %80 = arith.select %77, %74, %79 : vector<4x64xi1>, vector<4x64xf32>
    %c0_58 = arith.constant 0 : index
    %c0_59 = arith.constant 0 : index
    %81 = vector.load %arg16[%c0_58, %c0_59] : memref<16x64xf32, #tpu.memory_space<vmem>>, vector<4x64xf32>
    tpu.vector_store %arg16[%c0_58, %c0_59], %80 {strides = array<i32>} : memref<16x64xf32, #tpu.memory_space<vmem>>, vector<4x64xf32>,
    %c0_60 = arith.constant 0 : index
    %c0_61 = arith.constant 0 : index
    %c0_62 = arith.constant 0 : index
    %82 = vector.load %arg3[%c0_60, %c0_61, %c0_62] : memref<9x4x4xbf16, #tpu.memory_space<vmem>>, vector<1x4x4xbf16>
    %83 = vector.shape_cast %82 : vector<1x4x4xbf16> to vector<4x4xbf16>
    %c8_i32_63 = arith.constant 8 : i32
    %84 = tpu.dynamic_rotate %5 by %c8_i32_63 dim 1 : vector<4x64xf32>, i32 -> vector<4x64xf32>
    %c1_64 = arith.constant 1 : index
    %c0_65 = arith.constant 0 : index
    %85 = vector.load %arg2[%c1_64, %c0_65] : memref<24x64xf32, #tpu.memory_space<vmem>>, vector<1x64xf32>
    %86 = vector.broadcast %85 : vector<1x64xf32> to vector<4x64xf32>
    %87 = arith.mulf %84, %86 : vector<4x64xf32>
    %88 = arith.truncf %87 : vector<4x64xf32> to vector<4x64xbf16>
    %cst_66 = arith.constant dense<0.000000e+00> : vector<4x64xf32>
    %89 = tpu.matmul %83, %88, %cst_66 {dimension_numbers = #tpu.dot_dimension_numbers<[1], [0], [0], [1], [0, 0, 1, 1], [], []>} : vector<4x4xbf16>, vector<4x64xbf16>, vector<4x64xf32> -> vector<4x64xf32>
    %c1_67 = arith.constant 1 : index
    %c0_68 = arith.constant 0 : index
    %c0_69 = arith.constant 0 : index
    %90 = vector.load %arg3[%c1_67, %c0_68, %c0_69] : memref<9x4x4xbf16, #tpu.memory_space<vmem>>, vector<1x4x4xbf16>
    %91 = vector.shape_cast %90 : vector<1x4x4xbf16> to vector<4x4xbf16>
    %c8_i32_70 = arith.constant 8 : i32
    %92 = tpu.dynamic_rotate %7 by %c8_i32_70 dim 1 : vector<4x64xf32>, i32 -> vector<4x64xf32>
    %c1_71 = arith.constant 1 : index
    %c0_72 = arith.constant 0 : index
    %93 = vector.load %arg2[%c1_71, %c0_72] : memref<24x64xf32, #tpu.memory_space<vmem>>, vector<1x64xf32>
    %94 = vector.broadcast %93 : vector<1x64xf32> to vector<4x64xf32>
    %95 = arith.mulf %92, %94 : vector<4x64xf32>
    %96 = arith.truncf %95 : vector<4x64xf32> to vector<4x64xbf16>
    %cst_73 = arith.constant dense<0.000000e+00> : vector<4x64xf32>
    %97 = tpu.matmul %91, %96, %cst_73 {dimension_numbers = #tpu.dot_dimension_numbers<[1], [0], [0], [1], [0, 0, 1, 1], [], []>} : vector<4x4xbf16>, vector<4x64xbf16>, vector<4x64xf32> -> vector<4x64xf32>
    %98 = arith.addf %89, %97 : vector<4x64xf32>
    %c2_74 = arith.constant 2 : index
    %c0_75 = arith.constant 0 : index
    %c0_76 = arith.constant 0 : index
    %99 = vector.load %arg3[%c2_74, %c0_75, %c0_76] : memref<9x4x4xbf16, #tpu.memory_space<vmem>>, vector<1x4x4xbf16>
    %100 = vector.shape_cast %99 : vector<1x4x4xbf16> to vector<4x4xbf16>
    %c7_i32 = arith.constant 7 : i32
    %101 = tpu.dynamic_rotate %5 by %c7_i32 dim 1 : vector<4x64xf32>, i32 -> vector<4x64xf32>
    %c3_77 = arith.constant 3 : index
    %c0_78 = arith.constant 0 : index
    %102 = vector.load %arg2[%c3_77, %c0_78] : memref<24x64xf32, #tpu.memory_space<vmem>>, vector<1x64xf32>
    %103 = vector.broadcast %102 : vector<1x64xf32> to vector<4x64xf32>
    %104 = arith.mulf %101, %103 : vector<4x64xf32>
    %105 = arith.truncf %104 : vector<4x64xf32> to vector<4x64xbf16>
    %cst_79 = arith.constant dense<0.000000e+00> : vector<4x64xf32>
    %106 = tpu.matmul %100, %105, %cst_79 {dimension_numbers = #tpu.dot_dimension_numbers<[1], [0], [0], [1], [0, 0, 1, 1], [], []>} : vector<4x4xbf16>, vector<4x64xbf16>, vector<4x64xf32> -> vector<4x64xf32>
    %107 = arith.addf %98, %106 : vector<4x64xf32>
    %c3_80 = arith.constant 3 : index
    %c0_81 = arith.constant 0 : index
    %c0_82 = arith.constant 0 : index
    %108 = vector.load %arg3[%c3_80, %c0_81, %c0_82] : memref<9x4x4xbf16, #tpu.memory_space<vmem>>, vector<1x4x4xbf16>
    %109 = vector.shape_cast %108 : vector<1x4x4xbf16> to vector<4x4xbf16>
    %110 = arith.truncf %1 : vector<4x64xf32> to vector<4x64xbf16>
    %cst_83 = arith.constant dense<0.000000e+00> : vector<4x64xf32>
    %111 = tpu.matmul %109, %110, %cst_83 {dimension_numbers = #tpu.dot_dimension_numbers<[1], [0], [0], [1], [0, 0, 1, 1], [], []>} : vector<4x4xbf16>, vector<4x64xbf16>, vector<4x64xf32> -> vector<4x64xf32>
    %112 = arith.addf %107, %111 : vector<4x64xf32>
    %c4_84 = arith.constant 4 : index
    %c0_85 = arith.constant 0 : index
    %c0_86 = arith.constant 0 : index
    %113 = vector.load %arg3[%c4_84, %c0_85, %c0_86] : memref<9x4x4xbf16, #tpu.memory_space<vmem>>, vector<1x4x4xbf16>
    %114 = vector.shape_cast %113 : vector<1x4x4xbf16> to vector<4x4xbf16>
    %115 = arith.truncf %3 : vector<4x64xf32> to vector<4x64xbf16>
    %cst_87 = arith.constant dense<0.000000e+00> : vector<4x64xf32>
    %116 = tpu.matmul %114, %115, %cst_87 {dimension_numbers = #tpu.dot_dimension_numbers<[1], [0], [0], [1], [0, 0, 1, 1], [], []>} : vector<4x4xbf16>, vector<4x64xbf16>, vector<4x64xf32> -> vector<4x64xf32>
    %117 = arith.addf %112, %116 : vector<4x64xf32>
    %c5_88 = arith.constant 5 : index
    %c0_89 = arith.constant 0 : index
    %c0_90 = arith.constant 0 : index
    %118 = vector.load %arg3[%c5_88, %c0_89, %c0_90] : memref<9x4x4xbf16, #tpu.memory_space<vmem>>, vector<1x4x4xbf16>
    %119 = vector.shape_cast %118 : vector<1x4x4xbf16> to vector<4x4xbf16>
    %c63_i32 = arith.constant 63 : i32
    %120 = tpu.dynamic_rotate %1 by %c63_i32 dim 1 : vector<4x64xf32>, i32 -> vector<4x64xf32>
    %c4_91 = arith.constant 4 : index
    %c0_92 = arith.constant 0 : index
    %121 = vector.load %arg2[%c4_91, %c0_92] : memref<24x64xf32, #tpu.memory_space<vmem>>, vector<1x64xf32>
    %122 = vector.broadcast %121 : vector<1x64xf32> to vector<4x64xf32>
    %123 = arith.mulf %120, %122 : vector<4x64xf32>
    %124 = arith.truncf %123 : vector<4x64xf32> to vector<4x64xbf16>
    %cst_93 = arith.constant dense<0.000000e+00> : vector<4x64xf32>
    %125 = tpu.matmul %119, %124, %cst_93 {dimension_numbers = #tpu.dot_dimension_numbers<[1], [0], [0], [1], [0, 0, 1, 1], [], []>} : vector<4x4xbf16>, vector<4x64xbf16>, vector<4x64xf32> -> vector<4x64xf32>
    %126 = arith.addf %117, %125 : vector<4x64xf32>
    %c6_94 = arith.constant 6 : index
    %c0_95 = arith.constant 0 : index
    %c0_96 = arith.constant 0 : index
    %127 = vector.load %arg3[%c6_94, %c0_95, %c0_96] : memref<9x4x4xbf16, #tpu.memory_space<vmem>>, vector<1x4x4xbf16>
    %128 = vector.shape_cast %127 : vector<1x4x4xbf16> to vector<4x4xbf16>
    %129 = arith.truncf %5 : vector<4x64xf32> to vector<4x64xbf16>
    %cst_97 = arith.constant dense<0.000000e+00> : vector<4x64xf32>
    %130 = tpu.matmul %128, %129, %cst_97 {dimension_numbers = #tpu.dot_dimension_numbers<[1], [0], [0], [1], [0, 0, 1, 1], [], []>} : vector<4x4xbf16>, vector<4x64xbf16>, vector<4x64xf32> -> vector<4x64xf32>
    %131 = arith.addf %126, %130 : vector<4x64xf32>
    %c7_98 = arith.constant 7 : index
    %c0_99 = arith.constant 0 : index
    %c0_100 = arith.constant 0 : index
    %132 = vector.load %arg3[%c7_98, %c0_99, %c0_100] : memref<9x4x4xbf16, #tpu.memory_space<vmem>>, vector<1x4x4xbf16>
    %133 = vector.shape_cast %132 : vector<1x4x4xbf16> to vector<4x4xbf16>
    %134 = arith.truncf %7 : vector<4x64xf32> to vector<4x64xbf16>
    %cst_101 = arith.constant dense<0.000000e+00> : vector<4x64xf32>
    %135 = tpu.matmul %133, %134, %cst_101 {dimension_numbers = #tpu.dot_dimension_numbers<[1], [0], [0], [1], [0, 0, 1, 1], [], []>} : vector<4x4xbf16>, vector<4x64xbf16>, vector<4x64xf32> -> vector<4x64xf32>
    %136 = arith.addf %131, %135 : vector<4x64xf32>
    %c8_102 = arith.constant 8 : index
    %c0_103 = arith.constant 0 : index
    %c0_104 = arith.constant 0 : index
    %137 = vector.load %arg3[%c8_102, %c0_103, %c0_104] : memref<9x4x4xbf16, #tpu.memory_space<vmem>>, vector<1x4x4xbf16>
    %138 = vector.shape_cast %137 : vector<1x4x4xbf16> to vector<4x4xbf16>
    %c63_i32_105 = arith.constant 63 : i32
    %139 = tpu.dynamic_rotate %5 by %c63_i32_105 dim 1 : vector<4x64xf32>, i32 -> vector<4x64xf32>
    %c4_106 = arith.constant 4 : index
    %c0_107 = arith.constant 0 : index
    %140 = vector.load %arg2[%c4_106, %c0_107] : memref<24x64xf32, #tpu.memory_space<vmem>>, vector<1x64xf32>
    %141 = vector.broadcast %140 : vector<1x64xf32> to vector<4x64xf32>
    %142 = arith.mulf %139, %141 : vector<4x64xf32>
    %143 = arith.truncf %142 : vector<4x64xf32> to vector<4x64xbf16>
    %cst_108 = arith.constant dense<0.000000e+00> : vector<4x64xf32>
    %144 = tpu.matmul %138, %143, %cst_108 {dimension_numbers = #tpu.dot_dimension_numbers<[1], [0], [0], [1], [0, 0, 1, 1], [], []>} : vector<4x4xbf16>, vector<4x64xbf16>, vector<4x64xf32> -> vector<4x64xf32>
    %145 = arith.addf %136, %144 : vector<4x64xf32>
    %c0_109 = arith.constant 0 : index
    %c0_110 = arith.constant 0 : index
    %146 = vector.load %arg4[%c0_109, %c0_110] : memref<4x1xf32, #tpu.memory_space<vmem>>, vector<4x1xf32>
    %147 = vector.broadcast %146 : vector<4x1xf32> to vector<4x64xf32>
    %148 = arith.addf %145, %147 : vector<4x64xf32>
    %c0_111 = arith.constant 0 : index
    %149 = memref.load %arg14[%c0_111] : memref<7xf32, #tpu.memory_space<smem>>
    %cst_112 = arith.constant 0.000000e+00 : f32
    %150 = vector.broadcast %cst_112 : f32 to vector<4x64xf32>
    %151 = arith.cmpf oge, %148, %150 : vector<4x64xf32>
    %152 = vector.broadcast %149 : f32 to vector<4x64xf32>
    %153 = arith.mulf %152, %148 : vector<4x64xf32>
    %154 = arith.select %151, %148, %153 : vector<4x64xi1>, vector<4x64xf32>
    %c4_113 = arith.constant 4 : index
    %c0_114 = arith.constant 0 : index
    %155 = vector.load %arg16[%c4_113, %c0_114] : memref<16x64xf32, #tpu.memory_space<vmem>>, vector<4x64xf32>
    tpu.vector_store %arg16[%c4_113, %c0_114], %154 {strides = array<i32>} : memref<16x64xf32, #tpu.memory_space<vmem>>, vector<4x64xf32>,
    %c0_115 = arith.constant 0 : index
    %c0_116 = arith.constant 0 : index
    %c0_117 = arith.constant 0 : index
    %156 = vector.load %arg3[%c0_115, %c0_116, %c0_117] : memref<9x4x4xbf16, #tpu.memory_space<vmem>>, vector<1x4x4xbf16>
    %157 = vector.shape_cast %156 : vector<1x4x4xbf16> to vector<4x4xbf16>
    %c1_i32_118 = arith.constant 1 : i32
    %158 = tpu.dynamic_rotate %3 by %c1_i32_118 dim 1 : vector<4x64xf32>, i32 -> vector<4x64xf32>
    %c2_119 = arith.constant 2 : index
    %c0_120 = arith.constant 0 : index
    %159 = vector.load %arg2[%c2_119, %c0_120] : memref<24x64xf32, #tpu.memory_space<vmem>>, vector<1x64xf32>
    %160 = vector.broadcast %159 : vector<1x64xf32> to vector<4x64xf32>
    %161 = arith.mulf %158, %160 : vector<4x64xf32>
    %162 = arith.truncf %161 : vector<4x64xf32> to vector<4x64xbf16>
    %cst_121 = arith.constant dense<0.000000e+00> : vector<4x64xf32>
    %163 = tpu.matmul %157, %162, %cst_121 {dimension_numbers = #tpu.dot_dimension_numbers<[1], [0], [0], [1], [0, 0, 1, 1], [], []>} : vector<4x4xbf16>, vector<4x64xbf16>, vector<4x64xf32> -> vector<4x64xf32>
    %c1_122 = arith.constant 1 : index
    %c0_123 = arith.constant 0 : index
    %c0_124 = arith.constant 0 : index
    %164 = vector.load %arg3[%c1_122, %c0_123, %c0_124] : memref<9x4x4xbf16, #tpu.memory_space<vmem>>, vector<1x4x4xbf16>
    %165 = vector.shape_cast %164 : vector<1x4x4xbf16> to vector<4x4xbf16>
    %166 = arith.truncf %1 : vector<4x64xf32> to vector<4x64xbf16>
    %cst_125 = arith.constant dense<0.000000e+00> : vector<4x64xf32>
    %167 = tpu.matmul %165, %166, %cst_125 {dimension_numbers = #tpu.dot_dimension_numbers<[1], [0], [0], [1], [0, 0, 1, 1], [], []>} : vector<4x4xbf16>, vector<4x64xbf16>, vector<4x64xf32> -> vector<4x64xf32>
    %168 = arith.addf %163, %167 : vector<4x64xf32>
    %c2_126 = arith.constant 2 : index
    %c0_127 = arith.constant 0 : index
    %c0_128 = arith.constant 0 : index
    %169 = vector.load %arg3[%c2_126, %c0_127, %c0_128] : memref<9x4x4xbf16, #tpu.memory_space<vmem>>, vector<1x4x4xbf16>
    %170 = vector.shape_cast %169 : vector<1x4x4xbf16> to vector<4x4xbf16>
    %171 = arith.truncf %3 : vector<4x64xf32> to vector<4x64xbf16>
    %cst_129 = arith.constant dense<0.000000e+00> : vector<4x64xf32>
    %172 = tpu.matmul %170, %171, %cst_129 {dimension_numbers = #tpu.dot_dimension_numbers<[1], [0], [0], [1], [0, 0, 1, 1], [], []>} : vector<4x4xbf16>, vector<4x64xbf16>, vector<4x64xf32> -> vector<4x64xf32>
    %173 = arith.addf %168, %172 : vector<4x64xf32>
    %c3_130 = arith.constant 3 : index
    %c0_131 = arith.constant 0 : index
    %c0_132 = arith.constant 0 : index
    %174 = vector.load %arg3[%c3_130, %c0_131, %c0_132] : memref<9x4x4xbf16, #tpu.memory_space<vmem>>, vector<1x4x4xbf16>
    %175 = vector.shape_cast %174 : vector<1x4x4xbf16> to vector<4x4xbf16>
    %c1_i32_133 = arith.constant 1 : i32
    %176 = tpu.dynamic_rotate %7 by %c1_i32_133 dim 1 : vector<4x64xf32>, i32 -> vector<4x64xf32>
    %c2_134 = arith.constant 2 : index
    %c0_135 = arith.constant 0 : index
    %177 = vector.load %arg2[%c2_134, %c0_135] : memref<24x64xf32, #tpu.memory_space<vmem>>, vector<1x64xf32>
    %178 = vector.broadcast %177 : vector<1x64xf32> to vector<4x64xf32>
    %179 = arith.mulf %176, %178 : vector<4x64xf32>
    %180 = arith.truncf %179 : vector<4x64xf32> to vector<4x64xbf16>
    %cst_136 = arith.constant dense<0.000000e+00> : vector<4x64xf32>
    %181 = tpu.matmul %175, %180, %cst_136 {dimension_numbers = #tpu.dot_dimension_numbers<[1], [0], [0], [1], [0, 0, 1, 1], [], []>} : vector<4x4xbf16>, vector<4x64xbf16>, vector<4x64xf32> -> vector<4x64xf32>
    %182 = arith.addf %173, %181 : vector<4x64xf32>
    %c4_137 = arith.constant 4 : index
    %c0_138 = arith.constant 0 : index
    %c0_139 = arith.constant 0 : index
    %183 = vector.load %arg3[%c4_137, %c0_138, %c0_139] : memref<9x4x4xbf16, #tpu.memory_space<vmem>>, vector<1x4x4xbf16>
    %184 = vector.shape_cast %183 : vector<1x4x4xbf16> to vector<4x4xbf16>
    %185 = arith.truncf %5 : vector<4x64xf32> to vector<4x64xbf16>
    %cst_140 = arith.constant dense<0.000000e+00> : vector<4x64xf32>
    %186 = tpu.matmul %184, %185, %cst_140 {dimension_numbers = #tpu.dot_dimension_numbers<[1], [0], [0], [1], [0, 0, 1, 1], [], []>} : vector<4x4xbf16>, vector<4x64xbf16>, vector<4x64xf32> -> vector<4x64xf32>
    %187 = arith.addf %182, %186 : vector<4x64xf32>
    %c5_141 = arith.constant 5 : index
    %c0_142 = arith.constant 0 : index
    %c0_143 = arith.constant 0 : index
    %188 = vector.load %arg3[%c5_141, %c0_142, %c0_143] : memref<9x4x4xbf16, #tpu.memory_space<vmem>>, vector<1x4x4xbf16>
    %189 = vector.shape_cast %188 : vector<1x4x4xbf16> to vector<4x4xbf16>
    %190 = arith.truncf %7 : vector<4x64xf32> to vector<4x64xbf16>
    %cst_144 = arith.constant dense<0.000000e+00> : vector<4x64xf32>
    %191 = tpu.matmul %189, %190, %cst_144 {dimension_numbers = #tpu.dot_dimension_numbers<[1], [0], [0], [1], [0, 0, 1, 1], [], []>} : vector<4x4xbf16>, vector<4x64xbf16>, vector<4x64xf32> -> vector<4x64xf32>
    %192 = arith.addf %187, %191 : vector<4x64xf32>
    %c6_145 = arith.constant 6 : index
    %c0_146 = arith.constant 0 : index
    %c0_147 = arith.constant 0 : index
    %193 = vector.load %arg3[%c6_145, %c0_146, %c0_147] : memref<9x4x4xbf16, #tpu.memory_space<vmem>>, vector<1x4x4xbf16>
    %194 = vector.shape_cast %193 : vector<1x4x4xbf16> to vector<4x4xbf16>
    %c57_i32 = arith.constant 57 : i32
    %195 = tpu.dynamic_rotate %3 by %c57_i32 dim 1 : vector<4x64xf32>, i32 -> vector<4x64xf32>
    %c5_148 = arith.constant 5 : index
    %c0_149 = arith.constant 0 : index
    %196 = vector.load %arg2[%c5_148, %c0_149] : memref<24x64xf32, #tpu.memory_space<vmem>>, vector<1x64xf32>
    %197 = vector.broadcast %196 : vector<1x64xf32> to vector<4x64xf32>
    %198 = arith.mulf %195, %197 : vector<4x64xf32>
    %199 = arith.truncf %198 : vector<4x64xf32> to vector<4x64xbf16>
    %cst_150 = arith.constant dense<0.000000e+00> : vector<4x64xf32>
    %200 = tpu.matmul %194, %199, %cst_150 {dimension_numbers = #tpu.dot_dimension_numbers<[1], [0], [0], [1], [0, 0, 1, 1], [], []>} : vector<4x4xbf16>, vector<4x64xbf16>, vector<4x64xf32> -> vector<4x64xf32>
    %201 = arith.addf %192, %200 : vector<4x64xf32>
    %c7_151 = arith.constant 7 : index
    %c0_152 = arith.constant 0 : index
    %c0_153 = arith.constant 0 : index
    %202 = vector.load %arg3[%c7_151, %c0_152, %c0_153] : memref<9x4x4xbf16, #tpu.memory_space<vmem>>, vector<1x4x4xbf16>
    %203 = vector.shape_cast %202 : vector<1x4x4xbf16> to vector<4x4xbf16>
    %c56_i32 = arith.constant 56 : i32
    %204 = tpu.dynamic_rotate %1 by %c56_i32 dim 1 : vector<4x64xf32>, i32 -> vector<4x64xf32>
    %c6_154 = arith.constant 6 : index
    %c0_155 = arith.constant 0 : index
    %205 = vector.load %arg2[%c6_154, %c0_155] : memref<24x64xf32, #tpu.memory_space<vmem>>, vector<1x64xf32>
    %206 = vector.broadcast %205 : vector<1x64xf32> to vector<4x64xf32>
    %207 = arith.mulf %204, %206 : vector<4x64xf32>
    %208 = arith.truncf %207 : vector<4x64xf32> to vector<4x64xbf16>
    %cst_156 = arith.constant dense<0.000000e+00> : vector<4x64xf32>
    %209 = tpu.matmul %203, %208, %cst_156 {dimension_numbers = #tpu.dot_dimension_numbers<[1], [0], [0], [1], [0, 0, 1, 1], [], []>} : vector<4x4xbf16>, vector<4x64xbf16>, vector<4x64xf32> -> vector<4x64xf32>
    %210 = arith.addf %201, %209 : vector<4x64xf32>
    %c8_157 = arith.constant 8 : index
    %c0_158 = arith.constant 0 : index
    %c0_159 = arith.constant 0 : index
    %211 = vector.load %arg3[%c8_157, %c0_158, %c0_159] : memref<9x4x4xbf16, #tpu.memory_space<vmem>>, vector<1x4x4xbf16>
    %212 = vector.shape_cast %211 : vector<1x4x4xbf16> to vector<4x4xbf16>
    %c56_i32_160 = arith.constant 56 : i32
    %213 = tpu.dynamic_rotate %3 by %c56_i32_160 dim 1 : vector<4x64xf32>, i32 -> vector<4x64xf32>
    %c6_161 = arith.constant 6 : index
    %c0_162 = arith.constant 0 : index
    %214 = vector.load %arg2[%c6_161, %c0_162] : memref<24x64xf32, #tpu.memory_space<vmem>>, vector<1x64xf32>
    %215 = vector.broadcast %214 : vector<1x64xf32> to vector<4x64xf32>
    %216 = arith.mulf %213, %215 : vector<4x64xf32>
    %217 = arith.truncf %216 : vector<4x64xf32> to vector<4x64xbf16>
    %cst_163 = arith.constant dense<0.000000e+00> : vector<4x64xf32>
    %218 = tpu.matmul %212, %217, %cst_163 {dimension_numbers = #tpu.dot_dimension_numbers<[1], [0], [0], [1], [0, 0, 1, 1], [], []>} : vector<4x4xbf16>, vector<4x64xbf16>, vector<4x64xf32> -> vector<4x64xf32>
    %219 = arith.addf %210, %218 : vector<4x64xf32>
    %c0_164 = arith.constant 0 : index
    %c0_165 = arith.constant 0 : index
    %220 = vector.load %arg4[%c0_164, %c0_165] : memref<4x1xf32, #tpu.memory_space<vmem>>, vector<4x1xf32>
    %221 = vector.broadcast %220 : vector<4x1xf32> to vector<4x64xf32>
    %222 = arith.addf %219, %221 : vector<4x64xf32>
    %c0_166 = arith.constant 0 : index
    %223 = memref.load %arg14[%c0_166] : memref<7xf32, #tpu.memory_space<smem>>
    %cst_167 = arith.constant 0.000000e+00 : f32
    %224 = vector.broadcast %cst_167 : f32 to vector<4x64xf32>
    %225 = arith.cmpf oge, %222, %224 : vector<4x64xf32>
    %226 = vector.broadcast %223 : f32 to vector<4x64xf32>
    %227 = arith.mulf %226, %222 : vector<4x64xf32>
    %228 = arith.select %225, %222, %227 : vector<4x64xi1>, vector<4x64xf32>
    %c8_168 = arith.constant 8 : index
    %c0_169 = arith.constant 0 : index
    %229 = vector.load %arg16[%c8_168, %c0_169] : memref<16x64xf32, #tpu.memory_space<vmem>>, vector<4x64xf32>
    tpu.vector_store %arg16[%c8_168, %c0_169], %228 {strides = array<i32>} : memref<16x64xf32, #tpu.memory_space<vmem>>, vector<4x64xf32>,
    %c0_170 = arith.constant 0 : index
    %c0_171 = arith.constant 0 : index
    %c0_172 = arith.constant 0 : index
    %230 = vector.load %arg3[%c0_170, %c0_171, %c0_172] : memref<9x4x4xbf16, #tpu.memory_space<vmem>>, vector<1x4x4xbf16>
    %231 = vector.shape_cast %230 : vector<1x4x4xbf16> to vector<4x4xbf16>
    %232 = arith.truncf %1 : vector<4x64xf32> to vector<4x64xbf16>
    %cst_173 = arith.constant dense<0.000000e+00> : vector<4x64xf32>
    %233 = tpu.matmul %231, %232, %cst_173 {dimension_numbers = #tpu.dot_dimension_numbers<[1], [0], [0], [1], [0, 0, 1, 1], [], []>} : vector<4x4xbf16>, vector<4x64xbf16>, vector<4x64xf32> -> vector<4x64xf32>
    %c1_174 = arith.constant 1 : index
    %c0_175 = arith.constant 0 : index
    %c0_176 = arith.constant 0 : index
    %234 = vector.load %arg3[%c1_174, %c0_175, %c0_176] : memref<9x4x4xbf16, #tpu.memory_space<vmem>>, vector<1x4x4xbf16>
    %235 = vector.shape_cast %234 : vector<1x4x4xbf16> to vector<4x4xbf16>
    %236 = arith.truncf %3 : vector<4x64xf32> to vector<4x64xbf16>
    %cst_177 = arith.constant dense<0.000000e+00> : vector<4x64xf32>
    %237 = tpu.matmul %235, %236, %cst_177 {dimension_numbers = #tpu.dot_dimension_numbers<[1], [0], [0], [1], [0, 0, 1, 1], [], []>} : vector<4x4xbf16>, vector<4x64xbf16>, vector<4x64xf32> -> vector<4x64xf32>
    %238 = arith.addf %233, %237 : vector<4x64xf32>
    %c2_178 = arith.constant 2 : index
    %c0_179 = arith.constant 0 : index
    %c0_180 = arith.constant 0 : index
    %239 = vector.load %arg3[%c2_178, %c0_179, %c0_180] : memref<9x4x4xbf16, #tpu.memory_space<vmem>>, vector<1x4x4xbf16>
    %240 = vector.shape_cast %239 : vector<1x4x4xbf16> to vector<4x4xbf16>
    %c63_i32_181 = arith.constant 63 : i32
    %241 = tpu.dynamic_rotate %1 by %c63_i32_181 dim 1 : vector<4x64xf32>, i32 -> vector<4x64xf32>
    %c4_182 = arith.constant 4 : index
    %c0_183 = arith.constant 0 : index
    %242 = vector.load %arg2[%c4_182, %c0_183] : memref<24x64xf32, #tpu.memory_space<vmem>>, vector<1x64xf32>
    %243 = vector.broadcast %242 : vector<1x64xf32> to vector<4x64xf32>
    %244 = arith.mulf %241, %243 : vector<4x64xf32>
    %245 = arith.truncf %244 : vector<4x64xf32> to vector<4x64xbf16>
    %cst_184 = arith.constant dense<0.000000e+00> : vector<4x64xf32>
    %246 = tpu.matmul %240, %245, %cst_184 {dimension_numbers = #tpu.dot_dimension_numbers<[1], [0], [0], [1], [0, 0, 1, 1], [], []>} : vector<4x4xbf16>, vector<4x64xbf16>, vector<4x64xf32> -> vector<4x64xf32>
    %247 = arith.addf %238, %246 : vector<4x64xf32>
    %c3_185 = arith.constant 3 : index
    %c0_186 = arith.constant 0 : index
    %c0_187 = arith.constant 0 : index
    %248 = vector.load %arg3[%c3_185, %c0_186, %c0_187] : memref<9x4x4xbf16, #tpu.memory_space<vmem>>, vector<1x4x4xbf16>
    %249 = vector.shape_cast %248 : vector<1x4x4xbf16> to vector<4x4xbf16>
    %250 = arith.truncf %5 : vector<4x64xf32> to vector<4x64xbf16>
    %cst_188 = arith.constant dense<0.000000e+00> : vector<4x64xf32>
    %251 = tpu.matmul %249, %250, %cst_188 {dimension_numbers = #tpu.dot_dimension_numbers<[1], [0], [0], [1], [0, 0, 1, 1], [], []>} : vector<4x4xbf16>, vector<4x64xbf16>, vector<4x64xf32> -> vector<4x64xf32>
    %252 = arith.addf %247, %251 : vector<4x64xf32>
    %c4_189 = arith.constant 4 : index
    %c0_190 = arith.constant 0 : index
    %c0_191 = arith.constant 0 : index
    %253 = vector.load %arg3[%c4_189, %c0_190, %c0_191] : memref<9x4x4xbf16, #tpu.memory_space<vmem>>, vector<1x4x4xbf16>
    %254 = vector.shape_cast %253 : vector<1x4x4xbf16> to vector<4x4xbf16>
    %255 = arith.truncf %7 : vector<4x64xf32> to vector<4x64xbf16>
    %cst_192 = arith.constant dense<0.000000e+00> : vector<4x64xf32>
    %256 = tpu.matmul %254, %255, %cst_192 {dimension_numbers = #tpu.dot_dimension_numbers<[1], [0], [0], [1], [0, 0, 1, 1], [], []>} : vector<4x4xbf16>, vector<4x64xbf16>, vector<4x64xf32> -> vector<4x64xf32>
    %257 = arith.addf %252, %256 : vector<4x64xf32>
    %c5_193 = arith.constant 5 : index
    %c0_194 = arith.constant 0 : index
    %c0_195 = arith.constant 0 : index
    %258 = vector.load %arg3[%c5_193, %c0_194, %c0_195] : memref<9x4x4xbf16, #tpu.memory_space<vmem>>, vector<1x4x4xbf16>
    %259 = vector.shape_cast %258 : vector<1x4x4xbf16> to vector<4x4xbf16>
    %c63_i32_196 = arith.constant 63 : i32
    %260 = tpu.dynamic_rotate %5 by %c63_i32_196 dim 1 : vector<4x64xf32>, i32 -> vector<4x64xf32>
    %c4_197 = arith.constant 4 : index
    %c0_198 = arith.constant 0 : index
    %261 = vector.load %arg2[%c4_197, %c0_198] : memref<24x64xf32, #tpu.memory_space<vmem>>, vector<1x64xf32>
    %262 = vector.broadcast %261 : vector<1x64xf32> to vector<4x64xf32>
    %263 = arith.mulf %260, %262 : vector<4x64xf32>
    %264 = arith.truncf %263 : vector<4x64xf32> to vector<4x64xbf16>
    %cst_199 = arith.constant dense<0.000000e+00> : vector<4x64xf32>
    %265 = tpu.matmul %259, %264, %cst_199 {dimension_numbers = #tpu.dot_dimension_numbers<[1], [0], [0], [1], [0, 0, 1, 1], [], []>} : vector<4x4xbf16>, vector<4x64xbf16>, vector<4x64xf32> -> vector<4x64xf32>
    %266 = arith.addf %257, %265 : vector<4x64xf32>
    %c6_200 = arith.constant 6 : index
    %c0_201 = arith.constant 0 : index
    %c0_202 = arith.constant 0 : index
    %267 = vector.load %arg3[%c6_200, %c0_201, %c0_202] : memref<9x4x4xbf16, #tpu.memory_space<vmem>>, vector<1x4x4xbf16>
    %268 = vector.shape_cast %267 : vector<1x4x4xbf16> to vector<4x4xbf16>
    %c56_i32_203 = arith.constant 56 : i32
    %269 = tpu.dynamic_rotate %1 by %c56_i32_203 dim 1 : vector<4x64xf32>, i32 -> vector<4x64xf32>
    %c6_204 = arith.constant 6 : index
    %c0_205 = arith.constant 0 : index
    %270 = vector.load %arg2[%c6_204, %c0_205] : memref<24x64xf32, #tpu.memory_space<vmem>>, vector<1x64xf32>
    %271 = vector.broadcast %270 : vector<1x64xf32> to vector<4x64xf32>
    %272 = arith.mulf %269, %271 : vector<4x64xf32>
    %273 = arith.truncf %272 : vector<4x64xf32> to vector<4x64xbf16>
    %cst_206 = arith.constant dense<0.000000e+00> : vector<4x64xf32>
    %274 = tpu.matmul %268, %273, %cst_206 {dimension_numbers = #tpu.dot_dimension_numbers<[1], [0], [0], [1], [0, 0, 1, 1], [], []>} : vector<4x4xbf16>, vector<4x64xbf16>, vector<4x64xf32> -> vector<4x64xf32>
    %275 = arith.addf %266, %274 : vector<4x64xf32>
    %c7_207 = arith.constant 7 : index
    %c0_208 = arith.constant 0 : index
    %c0_209 = arith.constant 0 : index
    %276 = vector.load %arg3[%c7_207, %c0_208, %c0_209] : memref<9x4x4xbf16, #tpu.memory_space<vmem>>, vector<1x4x4xbf16>
    %277 = vector.shape_cast %276 : vector<1x4x4xbf16> to vector<4x4xbf16>
    %c56_i32_210 = arith.constant 56 : i32
    %278 = tpu.dynamic_rotate %3 by %c56_i32_210 dim 1 : vector<4x64xf32>, i32 -> vector<4x64xf32>
    %c6_211 = arith.constant 6 : index
    %c0_212 = arith.constant 0 : index
    %279 = vector.load %arg2[%c6_211, %c0_212] : memref<24x64xf32, #tpu.memory_space<vmem>>, vector<1x64xf32>
    %280 = vector.broadcast %279 : vector<1x64xf32> to vector<4x64xf32>
    %281 = arith.mulf %278, %280 : vector<4x64xf32>
    %282 = arith.truncf %281 : vector<4x64xf32> to vector<4x64xbf16>
    %cst_213 = arith.constant dense<0.000000e+00> : vector<4x64xf32>
    %283 = tpu.matmul %277, %282, %cst_213 {dimension_numbers = #tpu.dot_dimension_numbers<[1], [0], [0], [1], [0, 0, 1, 1], [], []>} : vector<4x4xbf16>, vector<4x64xbf16>, vector<4x64xf32> -> vector<4x64xf32>
    %284 = arith.addf %275, %283 : vector<4x64xf32>
    %c8_214 = arith.constant 8 : index
    %c0_215 = arith.constant 0 : index
    %c0_216 = arith.constant 0 : index
    %285 = vector.load %arg3[%c8_214, %c0_215, %c0_216] : memref<9x4x4xbf16, #tpu.memory_space<vmem>>, vector<1x4x4xbf16>
    %286 = vector.shape_cast %285 : vector<1x4x4xbf16> to vector<4x4xbf16>
    %c55_i32 = arith.constant 55 : i32
    %287 = tpu.dynamic_rotate %1 by %c55_i32 dim 1 : vector<4x64xf32>, i32 -> vector<4x64xf32>
    %c7_217 = arith.constant 7 : index
    %c0_218 = arith.constant 0 : index
    %288 = vector.load %arg2[%c7_217, %c0_218] : memref<24x64xf32, #tpu.memory_space<vmem>>, vector<1x64xf32>
    %289 = vector.broadcast %288 : vector<1x64xf32> to vector<4x64xf32>
    %290 = arith.mulf %287, %289 : vector<4x64xf32>
    %291 = arith.truncf %290 : vector<4x64xf32> to vector<4x64xbf16>
    %cst_219 = arith.constant dense<0.000000e+00> : vector<4x64xf32>
    %292 = tpu.matmul %286, %291, %cst_219 {dimension_numbers = #tpu.dot_dimension_numbers<[1], [0], [0], [1], [0, 0, 1, 1], [], []>} : vector<4x4xbf16>, vector<4x64xbf16>, vector<4x64xf32> -> vector<4x64xf32>
    %293 = arith.addf %284, %292 : vector<4x64xf32>
    %c0_220 = arith.constant 0 : index
    %c0_221 = arith.constant 0 : index
    %294 = vector.load %arg4[%c0_220, %c0_221] : memref<4x1xf32, #tpu.memory_space<vmem>>, vector<4x1xf32>
    %295 = vector.broadcast %294 : vector<4x1xf32> to vector<4x64xf32>
    %296 = arith.addf %293, %295 : vector<4x64xf32>
    %c0_222 = arith.constant 0 : index
    %297 = memref.load %arg14[%c0_222] : memref<7xf32, #tpu.memory_space<smem>>
    %cst_223 = arith.constant 0.000000e+00 : f32
    %298 = vector.broadcast %cst_223 : f32 to vector<4x64xf32>
    %299 = arith.cmpf oge, %296, %298 : vector<4x64xf32>
    %300 = vector.broadcast %297 : f32 to vector<4x64xf32>
    %301 = arith.mulf %300, %296 : vector<4x64xf32>
    %302 = arith.select %299, %296, %301 : vector<4x64xi1>, vector<4x64xf32>
    %c12 = arith.constant 12 : index
    %c0_224 = arith.constant 0 : index
    %303 = vector.load %arg16[%c12, %c0_224] : memref<16x64xf32, #tpu.memory_space<vmem>>, vector<4x64xf32>
    tpu.vector_store %arg16[%c12, %c0_224], %302 {strides = array<i32>} : memref<16x64xf32, #tpu.memory_space<vmem>>, vector<4x64xf32>,
    %c0_225 = arith.constant 0 : index
    %c0_226 = arith.constant 0 : index
    %304 = vector.load %arg16[%c0_225, %c0_226] : memref<16x64xf32, #tpu.memory_space<vmem>>, vector<16x64xf32>
    %305 = arith.truncf %304 : vector<16x64xf32> to vector<16x64xbf16>
    %c0_227 = arith.constant 0 : index
    %c0_228 = arith.constant 0 : index
    %306 = vector.load %arg5[%c0_227, %c0_228] : memref<8x16xbf16, #tpu.memory_space<vmem>>, vector<8x16xbf16>
    %cst_229 = arith.constant dense<0.000000e+00> : vector<8x64xf32>
    %307 = tpu.matmul %306, %305, %cst_229 {dimension_numbers = #tpu.dot_dimension_numbers<[1], [0], [0], [1], [0, 0, 1, 1], [], []>} : vector<8x16xbf16>, vector<16x64xbf16>, vector<8x64xf32> -> vector<8x64xf32>
    %c0_230 = arith.constant 0 : index
    %c0_231 = arith.constant 0 : index
    %c0_232 = arith.constant 0 : index
    %308 = vector.load %arg8[%c0_230, %c0_231, %c0_232] : memref<5x8x1xf32, #tpu.memory_space<vmem>>, vector<1x8x1xf32>
    %309 = vector.shape_cast %308 : vector<1x8x1xf32> to vector<8x1xf32>
    %310 = vector.broadcast %309 : vector<8x1xf32> to vector<8x64xf32>
    %311 = arith.addf %307, %310 : vector<8x64xf32>
    %c1_233 = arith.constant 1 : index
    %312 = memref.load %arg14[%c1_233] : memref<7xf32, #tpu.memory_space<smem>>
    %cst_234 = arith.constant 0.000000e+00 : f32
    %313 = vector.broadcast %cst_234 : f32 to vector<8x64xf32>
    %314 = arith.cmpf oge, %311, %313 : vector<8x64xf32>
    %315 = vector.broadcast %312 : f32 to vector<8x64xf32>
    %316 = arith.mulf %315, %311 : vector<8x64xf32>
    %317 = arith.select %314, %311, %316 : vector<8x64xi1>, vector<8x64xf32>
    %c0_235 = arith.constant 0 : index
    %c0_236 = arith.constant 0 : index
    %318 = vector.load %arg17[%c0_235, %c0_236] : memref<32x64xf32, #tpu.memory_space<vmem>>, vector<8x64xf32>
    tpu.vector_store %arg17[%c0_235, %c0_236], %317 {strides = array<i32>} : memref<32x64xf32, #tpu.memory_space<vmem>>, vector<8x64xf32>,
    %c0_237 = arith.constant 0 : index
    %c0_238 = arith.constant 0 : index
    %c0_239 = arith.constant 0 : index
    %c0_240 = arith.constant 0 : index
    %319 = vector.load %arg6[%c0_237, %c0_238, %c0_239, %c0_240] : memref<3x9x8x16xbf16, #tpu.memory_space<vmem>>, vector<1x1x8x16xbf16>
    %320 = vector.shape_cast %319 : vector<1x1x8x16xbf16> to vector<8x16xbf16>
    %c9_i32_241 = arith.constant 9 : i32
    %321 = tpu.dynamic_rotate %304 by %c9_i32_241 dim 1 : vector<16x64xf32>, i32 -> vector<16x64xf32>
    %c0_242 = arith.constant 0 : index
    %c0_243 = arith.constant 0 : index
    %322 = vector.load %arg2[%c0_242, %c0_243] : memref<24x64xf32, #tpu.memory_space<vmem>>, vector<1x64xf32>
    %323 = vector.broadcast %322 : vector<1x64xf32> to vector<16x64xf32>
    %324 = arith.mulf %321, %323 : vector<16x64xf32>
    %325 = arith.truncf %324 : vector<16x64xf32> to vector<16x64xbf16>
    %cst_244 = arith.constant dense<0.000000e+00> : vector<8x64xf32>
    %326 = tpu.matmul %320, %325, %cst_244 {dimension_numbers = #tpu.dot_dimension_numbers<[1], [0], [0], [1], [0, 0, 1, 1], [], []>} : vector<8x16xbf16>, vector<16x64xbf16>, vector<8x64xf32> -> vector<8x64xf32>
    %c0_245 = arith.constant 0 : index
    %c1_246 = arith.constant 1 : index
    %c0_247 = arith.constant 0 : index
    %c0_248 = arith.constant 0 : index
    %327 = vector.load %arg6[%c0_245, %c1_246, %c0_247, %c0_248] : memref<3x9x8x16xbf16, #tpu.memory_space<vmem>>, vector<1x1x8x16xbf16>
    %328 = vector.shape_cast %327 : vector<1x1x8x16xbf16> to vector<8x16xbf16>
    %c8_i32_249 = arith.constant 8 : i32
    %329 = tpu.dynamic_rotate %304 by %c8_i32_249 dim 1 : vector<16x64xf32>, i32 -> vector<16x64xf32>
    %c1_250 = arith.constant 1 : index
    %c0_251 = arith.constant 0 : index
    %330 = vector.load %arg2[%c1_250, %c0_251] : memref<24x64xf32, #tpu.memory_space<vmem>>, vector<1x64xf32>
    %331 = vector.broadcast %330 : vector<1x64xf32> to vector<16x64xf32>
    %332 = arith.mulf %329, %331 : vector<16x64xf32>
    %333 = arith.truncf %332 : vector<16x64xf32> to vector<16x64xbf16>
    %cst_252 = arith.constant dense<0.000000e+00> : vector<8x64xf32>
    %334 = tpu.matmul %328, %333, %cst_252 {dimension_numbers = #tpu.dot_dimension_numbers<[1], [0], [0], [1], [0, 0, 1, 1], [], []>} : vector<8x16xbf16>, vector<16x64xbf16>, vector<8x64xf32> -> vector<8x64xf32>
    %335 = arith.addf %326, %334 : vector<8x64xf32>
    %c0_253 = arith.constant 0 : index
    %c2_254 = arith.constant 2 : index
    %c0_255 = arith.constant 0 : index
    %c0_256 = arith.constant 0 : index
    %336 = vector.load %arg6[%c0_253, %c2_254, %c0_255, %c0_256] : memref<3x9x8x16xbf16, #tpu.memory_space<vmem>>, vector<1x1x8x16xbf16>
    %337 = vector.shape_cast %336 : vector<1x1x8x16xbf16> to vector<8x16xbf16>
    %c7_i32_257 = arith.constant 7 : i32
    %338 = tpu.dynamic_rotate %304 by %c7_i32_257 dim 1 : vector<16x64xf32>, i32 -> vector<16x64xf32>
    %c3_258 = arith.constant 3 : index
    %c0_259 = arith.constant 0 : index
    %339 = vector.load %arg2[%c3_258, %c0_259] : memref<24x64xf32, #tpu.memory_space<vmem>>, vector<1x64xf32>
    %340 = vector.broadcast %339 : vector<1x64xf32> to vector<16x64xf32>
    %341 = arith.mulf %338, %340 : vector<16x64xf32>
    %342 = arith.truncf %341 : vector<16x64xf32> to vector<16x64xbf16>
    %cst_260 = arith.constant dense<0.000000e+00> : vector<8x64xf32>
    %343 = tpu.matmul %337, %342, %cst_260 {dimension_numbers = #tpu.dot_dimension_numbers<[1], [0], [0], [1], [0, 0, 1, 1], [], []>} : vector<8x16xbf16>, vector<16x64xbf16>, vector<8x64xf32> -> vector<8x64xf32>
    %344 = arith.addf %335, %343 : vector<8x64xf32>
    %c0_261 = arith.constant 0 : index
    %c3_262 = arith.constant 3 : index
    %c0_263 = arith.constant 0 : index
    %c0_264 = arith.constant 0 : index
    %345 = vector.load %arg6[%c0_261, %c3_262, %c0_263, %c0_264] : memref<3x9x8x16xbf16, #tpu.memory_space<vmem>>, vector<1x1x8x16xbf16>
    %346 = vector.shape_cast %345 : vector<1x1x8x16xbf16> to vector<8x16xbf16>
    %c1_i32_265 = arith.constant 1 : i32
    %347 = tpu.dynamic_rotate %304 by %c1_i32_265 dim 1 : vector<16x64xf32>, i32 -> vector<16x64xf32>
    %c2_266 = arith.constant 2 : index
    %c0_267 = arith.constant 0 : index
    %348 = vector.load %arg2[%c2_266, %c0_267] : memref<24x64xf32, #tpu.memory_space<vmem>>, vector<1x64xf32>
    %349 = vector.broadcast %348 : vector<1x64xf32> to vector<16x64xf32>
    %350 = arith.mulf %347, %349 : vector<16x64xf32>
    %351 = arith.truncf %350 : vector<16x64xf32> to vector<16x64xbf16>
    %cst_268 = arith.constant dense<0.000000e+00> : vector<8x64xf32>
    %352 = tpu.matmul %346, %351, %cst_268 {dimension_numbers = #tpu.dot_dimension_numbers<[1], [0], [0], [1], [0, 0, 1, 1], [], []>} : vector<8x16xbf16>, vector<16x64xbf16>, vector<8x64xf32> -> vector<8x64xf32>
    %353 = arith.addf %344, %352 : vector<8x64xf32>
    %c0_269 = arith.constant 0 : index
    %c4_270 = arith.constant 4 : index
    %c0_271 = arith.constant 0 : index
    %c0_272 = arith.constant 0 : index
    %354 = vector.load %arg6[%c0_269, %c4_270, %c0_271, %c0_272] : memref<3x9x8x16xbf16, #tpu.memory_space<vmem>>, vector<1x1x8x16xbf16>
    %355 = vector.shape_cast %354 : vector<1x1x8x16xbf16> to vector<8x16xbf16>
    %356 = arith.truncf %304 : vector<16x64xf32> to vector<16x64xbf16>
    %cst_273 = arith.constant dense<0.000000e+00> : vector<8x64xf32>
    %357 = tpu.matmul %355, %356, %cst_273 {dimension_numbers = #tpu.dot_dimension_numbers<[1], [0], [0], [1], [0, 0, 1, 1], [], []>} : vector<8x16xbf16>, vector<16x64xbf16>, vector<8x64xf32> -> vector<8x64xf32>
    %358 = arith.addf %353, %357 : vector<8x64xf32>
    %c0_274 = arith.constant 0 : index
    %c5_275 = arith.constant 5 : index
    %c0_276 = arith.constant 0 : index
    %c0_277 = arith.constant 0 : index
    %359 = vector.load %arg6[%c0_274, %c5_275, %c0_276, %c0_277] : memref<3x9x8x16xbf16, #tpu.memory_space<vmem>>, vector<1x1x8x16xbf16>
    %360 = vector.shape_cast %359 : vector<1x1x8x16xbf16> to vector<8x16xbf16>
    %c63_i32_278 = arith.constant 63 : i32
    %361 = tpu.dynamic_rotate %304 by %c63_i32_278 dim 1 : vector<16x64xf32>, i32 -> vector<16x64xf32>
    %c4_279 = arith.constant 4 : index
    %c0_280 = arith.constant 0 : index
    %362 = vector.load %arg2[%c4_279, %c0_280] : memref<24x64xf32, #tpu.memory_space<vmem>>, vector<1x64xf32>
    %363 = vector.broadcast %362 : vector<1x64xf32> to vector<16x64xf32>
    %364 = arith.mulf %361, %363 : vector<16x64xf32>
    %365 = arith.truncf %364 : vector<16x64xf32> to vector<16x64xbf16>
    %cst_281 = arith.constant dense<0.000000e+00> : vector<8x64xf32>
    %366 = tpu.matmul %360, %365, %cst_281 {dimension_numbers = #tpu.dot_dimension_numbers<[1], [0], [0], [1], [0, 0, 1, 1], [], []>} : vector<8x16xbf16>, vector<16x64xbf16>, vector<8x64xf32> -> vector<8x64xf32>
    %367 = arith.addf %358, %366 : vector<8x64xf32>
    %c0_282 = arith.constant 0 : index
    %c6_283 = arith.constant 6 : index
    %c0_284 = arith.constant 0 : index
    %c0_285 = arith.constant 0 : index
    %368 = vector.load %arg6[%c0_282, %c6_283, %c0_284, %c0_285] : memref<3x9x8x16xbf16, #tpu.memory_space<vmem>>, vector<1x1x8x16xbf16>
    %369 = vector.shape_cast %368 : vector<1x1x8x16xbf16> to vector<8x16xbf16>
    %c57_i32_286 = arith.constant 57 : i32
    %370 = tpu.dynamic_rotate %304 by %c57_i32_286 dim 1 : vector<16x64xf32>, i32 -> vector<16x64xf32>
    %c5_287 = arith.constant 5 : index
    %c0_288 = arith.constant 0 : index
    %371 = vector.load %arg2[%c5_287, %c0_288] : memref<24x64xf32, #tpu.memory_space<vmem>>, vector<1x64xf32>
    %372 = vector.broadcast %371 : vector<1x64xf32> to vector<16x64xf32>
    %373 = arith.mulf %370, %372 : vector<16x64xf32>
    %374 = arith.truncf %373 : vector<16x64xf32> to vector<16x64xbf16>
    %cst_289 = arith.constant dense<0.000000e+00> : vector<8x64xf32>
    %375 = tpu.matmul %369, %374, %cst_289 {dimension_numbers = #tpu.dot_dimension_numbers<[1], [0], [0], [1], [0, 0, 1, 1], [], []>} : vector<8x16xbf16>, vector<16x64xbf16>, vector<8x64xf32> -> vector<8x64xf32>
    %376 = arith.addf %367, %375 : vector<8x64xf32>
    %c0_290 = arith.constant 0 : index
    %c7_291 = arith.constant 7 : index
    %c0_292 = arith.constant 0 : index
    %c0_293 = arith.constant 0 : index
    %377 = vector.load %arg6[%c0_290, %c7_291, %c0_292, %c0_293] : memref<3x9x8x16xbf16, #tpu.memory_space<vmem>>, vector<1x1x8x16xbf16>
    %378 = vector.shape_cast %377 : vector<1x1x8x16xbf16> to vector<8x16xbf16>
    %c56_i32_294 = arith.constant 56 : i32
    %379 = tpu.dynamic_rotate %304 by %c56_i32_294 dim 1 : vector<16x64xf32>, i32 -> vector<16x64xf32>
    %c6_295 = arith.constant 6 : index
    %c0_296 = arith.constant 0 : index
    %380 = vector.load %arg2[%c6_295, %c0_296] : memref<24x64xf32, #tpu.memory_space<vmem>>, vector<1x64xf32>
    %381 = vector.broadcast %380 : vector<1x64xf32> to vector<16x64xf32>
    %382 = arith.mulf %379, %381 : vector<16x64xf32>
    %383 = arith.truncf %382 : vector<16x64xf32> to vector<16x64xbf16>
    %cst_297 = arith.constant dense<0.000000e+00> : vector<8x64xf32>
    %384 = tpu.matmul %378, %383, %cst_297 {dimension_numbers = #tpu.dot_dimension_numbers<[1], [0], [0], [1], [0, 0, 1, 1], [], []>} : vector<8x16xbf16>, vector<16x64xbf16>, vector<8x64xf32> -> vector<8x64xf32>
    %385 = arith.addf %376, %384 : vector<8x64xf32>
    %c0_298 = arith.constant 0 : index
    %c8_299 = arith.constant 8 : index
    %c0_300 = arith.constant 0 : index
    %c0_301 = arith.constant 0 : index
    %386 = vector.load %arg6[%c0_298, %c8_299, %c0_300, %c0_301] : memref<3x9x8x16xbf16, #tpu.memory_space<vmem>>, vector<1x1x8x16xbf16>
    %387 = vector.shape_cast %386 : vector<1x1x8x16xbf16> to vector<8x16xbf16>
    %c55_i32_302 = arith.constant 55 : i32
    %388 = tpu.dynamic_rotate %304 by %c55_i32_302 dim 1 : vector<16x64xf32>, i32 -> vector<16x64xf32>
    %c7_303 = arith.constant 7 : index
    %c0_304 = arith.constant 0 : index
    %389 = vector.load %arg2[%c7_303, %c0_304] : memref<24x64xf32, #tpu.memory_space<vmem>>, vector<1x64xf32>
    %390 = vector.broadcast %389 : vector<1x64xf32> to vector<16x64xf32>
    %391 = arith.mulf %388, %390 : vector<16x64xf32>
    %392 = arith.truncf %391 : vector<16x64xf32> to vector<16x64xbf16>
    %cst_305 = arith.constant dense<0.000000e+00> : vector<8x64xf32>
    %393 = tpu.matmul %387, %392, %cst_305 {dimension_numbers = #tpu.dot_dimension_numbers<[1], [0], [0], [1], [0, 0, 1, 1], [], []>} : vector<8x16xbf16>, vector<16x64xbf16>, vector<8x64xf32> -> vector<8x64xf32>
    %394 = arith.addf %385, %393 : vector<8x64xf32>
    %c1_306 = arith.constant 1 : index
    %c0_307 = arith.constant 0 : index
    %c0_308 = arith.constant 0 : index
    %395 = vector.load %arg8[%c1_306, %c0_307, %c0_308] : memref<5x8x1xf32, #tpu.memory_space<vmem>>, vector<1x8x1xf32>
    %396 = vector.shape_cast %395 : vector<1x8x1xf32> to vector<8x1xf32>
    %397 = vector.broadcast %396 : vector<8x1xf32> to vector<8x64xf32>
    %398 = arith.addf %394, %397 : vector<8x64xf32>
    %c2_309 = arith.constant 2 : index
    %399 = memref.load %arg14[%c2_309] : memref<7xf32, #tpu.memory_space<smem>>
    %cst_310 = arith.constant 0.000000e+00 : f32
    %400 = vector.broadcast %cst_310 : f32 to vector<8x64xf32>
    %401 = arith.cmpf oge, %398, %400 : vector<8x64xf32>
    %402 = vector.broadcast %399 : f32 to vector<8x64xf32>
    %403 = arith.mulf %402, %398 : vector<8x64xf32>
    %404 = arith.select %401, %398, %403 : vector<8x64xi1>, vector<8x64xf32>
    %c8_311 = arith.constant 8 : index
    %c0_312 = arith.constant 0 : index
    %405 = vector.load %arg17[%c8_311, %c0_312] : memref<32x64xf32, #tpu.memory_space<vmem>>, vector<8x64xf32>
    tpu.vector_store %arg17[%c8_311, %c0_312], %404 {strides = array<i32>} : memref<32x64xf32, #tpu.memory_space<vmem>>, vector<8x64xf32>,
    %c1_313 = arith.constant 1 : index
    %c0_314 = arith.constant 0 : index
    %c0_315 = arith.constant 0 : index
    %c0_316 = arith.constant 0 : index
    %406 = vector.load %arg6[%c1_313, %c0_314, %c0_315, %c0_316] : memref<3x9x8x16xbf16, #tpu.memory_space<vmem>>, vector<1x1x8x16xbf16>
    %407 = vector.shape_cast %406 : vector<1x1x8x16xbf16> to vector<8x16xbf16>
    %c36_i32 = arith.constant 36 : i32
    %408 = tpu.dynamic_rotate %304 by %c36_i32 dim 1 : vector<16x64xf32>, i32 -> vector<16x64xf32>
    %c8_317 = arith.constant 8 : index
    %c0_318 = arith.constant 0 : index
    %409 = vector.load %arg2[%c8_317, %c0_318] : memref<24x64xf32, #tpu.memory_space<vmem>>, vector<1x64xf32>
    %410 = vector.broadcast %409 : vector<1x64xf32> to vector<16x64xf32>
    %411 = arith.mulf %408, %410 : vector<16x64xf32>
    %412 = arith.truncf %411 : vector<16x64xf32> to vector<16x64xbf16>
    %cst_319 = arith.constant dense<0.000000e+00> : vector<8x64xf32>
    %413 = tpu.matmul %407, %412, %cst_319 {dimension_numbers = #tpu.dot_dimension_numbers<[1], [0], [0], [1], [0, 0, 1, 1], [], []>} : vector<8x16xbf16>, vector<16x64xbf16>, vector<8x64xf32> -> vector<8x64xf32>
    %c1_320 = arith.constant 1 : index
    %c1_321 = arith.constant 1 : index
    %c0_322 = arith.constant 0 : index
    %c0_323 = arith.constant 0 : index
    %414 = vector.load %arg6[%c1_320, %c1_321, %c0_322, %c0_323] : memref<3x9x8x16xbf16, #tpu.memory_space<vmem>>, vector<1x1x8x16xbf16>
    %415 = vector.shape_cast %414 : vector<1x1x8x16xbf16> to vector<8x16xbf16>
    %c32_i32 = arith.constant 32 : i32
    %416 = tpu.dynamic_rotate %304 by %c32_i32 dim 1 : vector<16x64xf32>, i32 -> vector<16x64xf32>
    %c9 = arith.constant 9 : index
    %c0_324 = arith.constant 0 : index
    %417 = vector.load %arg2[%c9, %c0_324] : memref<24x64xf32, #tpu.memory_space<vmem>>, vector<1x64xf32>
    %418 = vector.broadcast %417 : vector<1x64xf32> to vector<16x64xf32>
    %419 = arith.mulf %416, %418 : vector<16x64xf32>
    %420 = arith.truncf %419 : vector<16x64xf32> to vector<16x64xbf16>
    %cst_325 = arith.constant dense<0.000000e+00> : vector<8x64xf32>
    %421 = tpu.matmul %415, %420, %cst_325 {dimension_numbers = #tpu.dot_dimension_numbers<[1], [0], [0], [1], [0, 0, 1, 1], [], []>} : vector<8x16xbf16>, vector<16x64xbf16>, vector<8x64xf32> -> vector<8x64xf32>
    %422 = arith.addf %413, %421 : vector<8x64xf32>
    %c1_326 = arith.constant 1 : index
    %c2_327 = arith.constant 2 : index
    %c0_328 = arith.constant 0 : index
    %c0_329 = arith.constant 0 : index
    %423 = vector.load %arg6[%c1_326, %c2_327, %c0_328, %c0_329] : memref<3x9x8x16xbf16, #tpu.memory_space<vmem>>, vector<1x1x8x16xbf16>
    %424 = vector.shape_cast %423 : vector<1x1x8x16xbf16> to vector<8x16xbf16>
    %c28_i32 = arith.constant 28 : i32
    %425 = tpu.dynamic_rotate %304 by %c28_i32 dim 1 : vector<16x64xf32>, i32 -> vector<16x64xf32>
    %c10 = arith.constant 10 : index
    %c0_330 = arith.constant 0 : index
    %426 = vector.load %arg2[%c10, %c0_330] : memref<24x64xf32, #tpu.memory_space<vmem>>, vector<1x64xf32>
    %427 = vector.broadcast %426 : vector<1x64xf32> to vector<16x64xf32>
    %428 = arith.mulf %425, %427 : vector<16x64xf32>
    %429 = arith.truncf %428 : vector<16x64xf32> to vector<16x64xbf16>
    %cst_331 = arith.constant dense<0.000000e+00> : vector<8x64xf32>
    %430 = tpu.matmul %424, %429, %cst_331 {dimension_numbers = #tpu.dot_dimension_numbers<[1], [0], [0], [1], [0, 0, 1, 1], [], []>} : vector<8x16xbf16>, vector<16x64xbf16>, vector<8x64xf32> -> vector<8x64xf32>
    %431 = arith.addf %422, %430 : vector<8x64xf32>
    %c1_332 = arith.constant 1 : index
    %c3_333 = arith.constant 3 : index
    %c0_334 = arith.constant 0 : index
    %c0_335 = arith.constant 0 : index
    %432 = vector.load %arg6[%c1_332, %c3_333, %c0_334, %c0_335] : memref<3x9x8x16xbf16, #tpu.memory_space<vmem>>, vector<1x1x8x16xbf16>
    %433 = vector.shape_cast %432 : vector<1x1x8x16xbf16> to vector<8x16xbf16>
    %c4_i32 = arith.constant 4 : i32
    %434 = tpu.dynamic_rotate %304 by %c4_i32 dim 1 : vector<16x64xf32>, i32 -> vector<16x64xf32>
    %c11 = arith.constant 11 : index
    %c0_336 = arith.constant 0 : index
    %435 = vector.load %arg2[%c11, %c0_336] : memref<24x64xf32, #tpu.memory_space<vmem>>, vector<1x64xf32>
    %436 = vector.broadcast %435 : vector<1x64xf32> to vector<16x64xf32>
    %437 = arith.mulf %434, %436 : vector<16x64xf32>
    %438 = arith.truncf %437 : vector<16x64xf32> to vector<16x64xbf16>
    %cst_337 = arith.constant dense<0.000000e+00> : vector<8x64xf32>
    %439 = tpu.matmul %433, %438, %cst_337 {dimension_numbers = #tpu.dot_dimension_numbers<[1], [0], [0], [1], [0, 0, 1, 1], [], []>} : vector<8x16xbf16>, vector<16x64xbf16>, vector<8x64xf32> -> vector<8x64xf32>
    %440 = arith.addf %431, %439 : vector<8x64xf32>
    %c1_338 = arith.constant 1 : index
    %c4_339 = arith.constant 4 : index
    %c0_340 = arith.constant 0 : index
    %c0_341 = arith.constant 0 : index
    %441 = vector.load %arg6[%c1_338, %c4_339, %c0_340, %c0_341] : memref<3x9x8x16xbf16, #tpu.memory_space<vmem>>, vector<1x1x8x16xbf16>
    %442 = vector.shape_cast %441 : vector<1x1x8x16xbf16> to vector<8x16xbf16>
    %443 = arith.truncf %304 : vector<16x64xf32> to vector<16x64xbf16>
    %cst_342 = arith.constant dense<0.000000e+00> : vector<8x64xf32>
    %444 = tpu.matmul %442, %443, %cst_342 {dimension_numbers = #tpu.dot_dimension_numbers<[1], [0], [0], [1], [0, 0, 1, 1], [], []>} : vector<8x16xbf16>, vector<16x64xbf16>, vector<8x64xf32> -> vector<8x64xf32>
    %445 = arith.addf %440, %444 : vector<8x64xf32>
    %c1_343 = arith.constant 1 : index
    %c5_344 = arith.constant 5 : index
    %c0_345 = arith.constant 0 : index
    %c0_346 = arith.constant 0 : index
    %446 = vector.load %arg6[%c1_343, %c5_344, %c0_345, %c0_346] : memref<3x9x8x16xbf16, #tpu.memory_space<vmem>>, vector<1x1x8x16xbf16>
    %447 = vector.shape_cast %446 : vector<1x1x8x16xbf16> to vector<8x16xbf16>
    %c60_i32 = arith.constant 60 : i32
    %448 = tpu.dynamic_rotate %304 by %c60_i32 dim 1 : vector<16x64xf32>, i32 -> vector<16x64xf32>
    %c12_347 = arith.constant 12 : index
    %c0_348 = arith.constant 0 : index
    %449 = vector.load %arg2[%c12_347, %c0_348] : memref<24x64xf32, #tpu.memory_space<vmem>>, vector<1x64xf32>
    %450 = vector.broadcast %449 : vector<1x64xf32> to vector<16x64xf32>
    %451 = arith.mulf %448, %450 : vector<16x64xf32>
    %452 = arith.truncf %451 : vector<16x64xf32> to vector<16x64xbf16>
    %cst_349 = arith.constant dense<0.000000e+00> : vector<8x64xf32>
    %453 = tpu.matmul %447, %452, %cst_349 {dimension_numbers = #tpu.dot_dimension_numbers<[1], [0], [0], [1], [0, 0, 1, 1], [], []>} : vector<8x16xbf16>, vector<16x64xbf16>, vector<8x64xf32> -> vector<8x64xf32>
    %454 = arith.addf %445, %453 : vector<8x64xf32>
    %c1_350 = arith.constant 1 : index
    %c6_351 = arith.constant 6 : index
    %c0_352 = arith.constant 0 : index
    %c0_353 = arith.constant 0 : index
    %455 = vector.load %arg6[%c1_350, %c6_351, %c0_352, %c0_353] : memref<3x9x8x16xbf16, #tpu.memory_space<vmem>>, vector<1x1x8x16xbf16>
    %456 = vector.shape_cast %455 : vector<1x1x8x16xbf16> to vector<8x16xbf16>
    %c36_i32_354 = arith.constant 36 : i32
    %457 = tpu.dynamic_rotate %304 by %c36_i32_354 dim 1 : vector<16x64xf32>, i32 -> vector<16x64xf32>
    %c13 = arith.constant 13 : index
    %c0_355 = arith.constant 0 : index
    %458 = vector.load %arg2[%c13, %c0_355] : memref<24x64xf32, #tpu.memory_space<vmem>>, vector<1x64xf32>
    %459 = vector.broadcast %458 : vector<1x64xf32> to vector<16x64xf32>
    %460 = arith.mulf %457, %459 : vector<16x64xf32>
    %461 = arith.truncf %460 : vector<16x64xf32> to vector<16x64xbf16>
    %cst_356 = arith.constant dense<0.000000e+00> : vector<8x64xf32>
    %462 = tpu.matmul %456, %461, %cst_356 {dimension_numbers = #tpu.dot_dimension_numbers<[1], [0], [0], [1], [0, 0, 1, 1], [], []>} : vector<8x16xbf16>, vector<16x64xbf16>, vector<8x64xf32> -> vector<8x64xf32>
    %463 = arith.addf %454, %462 : vector<8x64xf32>
    %c1_357 = arith.constant 1 : index
    %c7_358 = arith.constant 7 : index
    %c0_359 = arith.constant 0 : index
    %c0_360 = arith.constant 0 : index
    %464 = vector.load %arg6[%c1_357, %c7_358, %c0_359, %c0_360] : memref<3x9x8x16xbf16, #tpu.memory_space<vmem>>, vector<1x1x8x16xbf16>
    %465 = vector.shape_cast %464 : vector<1x1x8x16xbf16> to vector<8x16xbf16>
    %c32_i32_361 = arith.constant 32 : i32
    %466 = tpu.dynamic_rotate %304 by %c32_i32_361 dim 1 : vector<16x64xf32>, i32 -> vector<16x64xf32>
    %c14 = arith.constant 14 : index
    %c0_362 = arith.constant 0 : index
    %467 = vector.load %arg2[%c14, %c0_362] : memref<24x64xf32, #tpu.memory_space<vmem>>, vector<1x64xf32>
    %468 = vector.broadcast %467 : vector<1x64xf32> to vector<16x64xf32>
    %469 = arith.mulf %466, %468 : vector<16x64xf32>
    %470 = arith.truncf %469 : vector<16x64xf32> to vector<16x64xbf16>
    %cst_363 = arith.constant dense<0.000000e+00> : vector<8x64xf32>
    %471 = tpu.matmul %465, %470, %cst_363 {dimension_numbers = #tpu.dot_dimension_numbers<[1], [0], [0], [1], [0, 0, 1, 1], [], []>} : vector<8x16xbf16>, vector<16x64xbf16>, vector<8x64xf32> -> vector<8x64xf32>
    %472 = arith.addf %463, %471 : vector<8x64xf32>
    %c1_364 = arith.constant 1 : index
    %c8_365 = arith.constant 8 : index
    %c0_366 = arith.constant 0 : index
    %c0_367 = arith.constant 0 : index
    %473 = vector.load %arg6[%c1_364, %c8_365, %c0_366, %c0_367] : memref<3x9x8x16xbf16, #tpu.memory_space<vmem>>, vector<1x1x8x16xbf16>
    %474 = vector.shape_cast %473 : vector<1x1x8x16xbf16> to vector<8x16xbf16>
    %c28_i32_368 = arith.constant 28 : i32
    %475 = tpu.dynamic_rotate %304 by %c28_i32_368 dim 1 : vector<16x64xf32>, i32 -> vector<16x64xf32>
    %c15 = arith.constant 15 : index
    %c0_369 = arith.constant 0 : index
    %476 = vector.load %arg2[%c15, %c0_369] : memref<24x64xf32, #tpu.memory_space<vmem>>, vector<1x64xf32>
    %477 = vector.broadcast %476 : vector<1x64xf32> to vector<16x64xf32>
    %478 = arith.mulf %475, %477 : vector<16x64xf32>
    %479 = arith.truncf %478 : vector<16x64xf32> to vector<16x64xbf16>
    %cst_370 = arith.constant dense<0.000000e+00> : vector<8x64xf32>
    %480 = tpu.matmul %474, %479, %cst_370 {dimension_numbers = #tpu.dot_dimension_numbers<[1], [0], [0], [1], [0, 0, 1, 1], [], []>} : vector<8x16xbf16>, vector<16x64xbf16>, vector<8x64xf32> -> vector<8x64xf32>
    %481 = arith.addf %472, %480 : vector<8x64xf32>
    %c2_371 = arith.constant 2 : index
    %c0_372 = arith.constant 0 : index
    %c0_373 = arith.constant 0 : index
    %482 = vector.load %arg8[%c2_371, %c0_372, %c0_373] : memref<5x8x1xf32, #tpu.memory_space<vmem>>, vector<1x8x1xf32>
    %483 = vector.shape_cast %482 : vector<1x8x1xf32> to vector<8x1xf32>
    %484 = vector.broadcast %483 : vector<8x1xf32> to vector<8x64xf32>
    %485 = arith.addf %481, %484 : vector<8x64xf32>
    %c3_374 = arith.constant 3 : index
    %486 = memref.load %arg14[%c3_374] : memref<7xf32, #tpu.memory_space<smem>>
    %cst_375 = arith.constant 0.000000e+00 : f32
    %487 = vector.broadcast %cst_375 : f32 to vector<8x64xf32>
    %488 = arith.cmpf oge, %485, %487 : vector<8x64xf32>
    %489 = vector.broadcast %486 : f32 to vector<8x64xf32>
    %490 = arith.mulf %489, %485 : vector<8x64xf32>
    %491 = arith.select %488, %485, %490 : vector<8x64xi1>, vector<8x64xf32>
    %c16 = arith.constant 16 : index
    %c0_376 = arith.constant 0 : index
    %492 = vector.load %arg17[%c16, %c0_376] : memref<32x64xf32, #tpu.memory_space<vmem>>, vector<8x64xf32>
    tpu.vector_store %arg17[%c16, %c0_376], %491 {strides = array<i32>} : memref<32x64xf32, #tpu.memory_space<vmem>>, vector<8x64xf32>,
    %c2_377 = arith.constant 2 : index
    %c0_378 = arith.constant 0 : index
    %c0_379 = arith.constant 0 : index
    %c0_380 = arith.constant 0 : index
    %493 = vector.load %arg6[%c2_377, %c0_378, %c0_379, %c0_380] : memref<3x9x8x16xbf16, #tpu.memory_space<vmem>>, vector<1x1x8x16xbf16>
    %494 = vector.shape_cast %493 : vector<1x1x8x16xbf16> to vector<8x16xbf16>
    %c54_i32 = arith.constant 54 : i32
    %495 = tpu.dynamic_rotate %304 by %c54_i32 dim 1 : vector<16x64xf32>, i32 -> vector<16x64xf32>
    %c16_381 = arith.constant 16 : index
    %c0_382 = arith.constant 0 : index
    %496 = vector.load %arg2[%c16_381, %c0_382] : memref<24x64xf32, #tpu.memory_space<vmem>>, vector<1x64xf32>
    %497 = vector.broadcast %496 : vector<1x64xf32> to vector<16x64xf32>
    %498 = arith.mulf %495, %497 : vector<16x64xf32>
    %499 = arith.truncf %498 : vector<16x64xf32> to vector<16x64xbf16>
    %cst_383 = arith.constant dense<0.000000e+00> : vector<8x64xf32>
    %500 = tpu.matmul %494, %499, %cst_383 {dimension_numbers = #tpu.dot_dimension_numbers<[1], [0], [0], [1], [0, 0, 1, 1], [], []>} : vector<8x16xbf16>, vector<16x64xbf16>, vector<8x64xf32> -> vector<8x64xf32>
    %c2_384 = arith.constant 2 : index
    %c1_385 = arith.constant 1 : index
    %c0_386 = arith.constant 0 : index
    %c0_387 = arith.constant 0 : index
    %501 = vector.load %arg6[%c2_384, %c1_385, %c0_386, %c0_387] : memref<3x9x8x16xbf16, #tpu.memory_space<vmem>>, vector<1x1x8x16xbf16>
    %502 = vector.shape_cast %501 : vector<1x1x8x16xbf16> to vector<8x16xbf16>
    %c48_i32 = arith.constant 48 : i32
    %503 = tpu.dynamic_rotate %304 by %c48_i32 dim 1 : vector<16x64xf32>, i32 -> vector<16x64xf32>
    %c17 = arith.constant 17 : index
    %c0_388 = arith.constant 0 : index
    %504 = vector.load %arg2[%c17, %c0_388] : memref<24x64xf32, #tpu.memory_space<vmem>>, vector<1x64xf32>
    %505 = vector.broadcast %504 : vector<1x64xf32> to vector<16x64xf32>
    %506 = arith.mulf %503, %505 : vector<16x64xf32>
    %507 = arith.truncf %506 : vector<16x64xf32> to vector<16x64xbf16>
    %cst_389 = arith.constant dense<0.000000e+00> : vector<8x64xf32>
    %508 = tpu.matmul %502, %507, %cst_389 {dimension_numbers = #tpu.dot_dimension_numbers<[1], [0], [0], [1], [0, 0, 1, 1], [], []>} : vector<8x16xbf16>, vector<16x64xbf16>, vector<8x64xf32> -> vector<8x64xf32>
    %509 = arith.addf %500, %508 : vector<8x64xf32>
    %c2_390 = arith.constant 2 : index
    %c2_391 = arith.constant 2 : index
    %c0_392 = arith.constant 0 : index
    %c0_393 = arith.constant 0 : index
    %510 = vector.load %arg6[%c2_390, %c2_391, %c0_392, %c0_393] : memref<3x9x8x16xbf16, #tpu.memory_space<vmem>>, vector<1x1x8x16xbf16>
    %511 = vector.shape_cast %510 : vector<1x1x8x16xbf16> to vector<8x16xbf16>
    %c42_i32 = arith.constant 42 : i32
    %512 = tpu.dynamic_rotate %304 by %c42_i32 dim 1 : vector<16x64xf32>, i32 -> vector<16x64xf32>
    %c18 = arith.constant 18 : index
    %c0_394 = arith.constant 0 : index
    %513 = vector.load %arg2[%c18, %c0_394] : memref<24x64xf32, #tpu.memory_space<vmem>>, vector<1x64xf32>
    %514 = vector.broadcast %513 : vector<1x64xf32> to vector<16x64xf32>
    %515 = arith.mulf %512, %514 : vector<16x64xf32>
    %516 = arith.truncf %515 : vector<16x64xf32> to vector<16x64xbf16>
    %cst_395 = arith.constant dense<0.000000e+00> : vector<8x64xf32>
    %517 = tpu.matmul %511, %516, %cst_395 {dimension_numbers = #tpu.dot_dimension_numbers<[1], [0], [0], [1], [0, 0, 1, 1], [], []>} : vector<8x16xbf16>, vector<16x64xbf16>, vector<8x64xf32> -> vector<8x64xf32>
    %518 = arith.addf %509, %517 : vector<8x64xf32>
    %c2_396 = arith.constant 2 : index
    %c3_397 = arith.constant 3 : index
    %c0_398 = arith.constant 0 : index
    %c0_399 = arith.constant 0 : index
    %519 = vector.load %arg6[%c2_396, %c3_397, %c0_398, %c0_399] : memref<3x9x8x16xbf16, #tpu.memory_space<vmem>>, vector<1x1x8x16xbf16>
    %520 = vector.shape_cast %519 : vector<1x1x8x16xbf16> to vector<8x16xbf16>
    %c6_i32 = arith.constant 6 : i32
    %521 = tpu.dynamic_rotate %304 by %c6_i32 dim 1 : vector<16x64xf32>, i32 -> vector<16x64xf32>
    %c19 = arith.constant 19 : index
    %c0_400 = arith.constant 0 : index
    %522 = vector.load %arg2[%c19, %c0_400] : memref<24x64xf32, #tpu.memory_space<vmem>>, vector<1x64xf32>
    %523 = vector.broadcast %522 : vector<1x64xf32> to vector<16x64xf32>
    %524 = arith.mulf %521, %523 : vector<16x64xf32>
    %525 = arith.truncf %524 : vector<16x64xf32> to vector<16x64xbf16>
    %cst_401 = arith.constant dense<0.000000e+00> : vector<8x64xf32>
    %526 = tpu.matmul %520, %525, %cst_401 {dimension_numbers = #tpu.dot_dimension_numbers<[1], [0], [0], [1], [0, 0, 1, 1], [], []>} : vector<8x16xbf16>, vector<16x64xbf16>, vector<8x64xf32> -> vector<8x64xf32>
    %527 = arith.addf %518, %526 : vector<8x64xf32>
    %c2_402 = arith.constant 2 : index
    %c4_403 = arith.constant 4 : index
    %c0_404 = arith.constant 0 : index
    %c0_405 = arith.constant 0 : index
    %528 = vector.load %arg6[%c2_402, %c4_403, %c0_404, %c0_405] : memref<3x9x8x16xbf16, #tpu.memory_space<vmem>>, vector<1x1x8x16xbf16>
    %529 = vector.shape_cast %528 : vector<1x1x8x16xbf16> to vector<8x16xbf16>
    %530 = arith.truncf %304 : vector<16x64xf32> to vector<16x64xbf16>
    %cst_406 = arith.constant dense<0.000000e+00> : vector<8x64xf32>
    %531 = tpu.matmul %529, %530, %cst_406 {dimension_numbers = #tpu.dot_dimension_numbers<[1], [0], [0], [1], [0, 0, 1, 1], [], []>} : vector<8x16xbf16>, vector<16x64xbf16>, vector<8x64xf32> -> vector<8x64xf32>
    %532 = arith.addf %527, %531 : vector<8x64xf32>
    %c2_407 = arith.constant 2 : index
    %c5_408 = arith.constant 5 : index
    %c0_409 = arith.constant 0 : index
    %c0_410 = arith.constant 0 : index
    %533 = vector.load %arg6[%c2_407, %c5_408, %c0_409, %c0_410] : memref<3x9x8x16xbf16, #tpu.memory_space<vmem>>, vector<1x1x8x16xbf16>
    %534 = vector.shape_cast %533 : vector<1x1x8x16xbf16> to vector<8x16xbf16>
    %c58_i32 = arith.constant 58 : i32
    %535 = tpu.dynamic_rotate %304 by %c58_i32 dim 1 : vector<16x64xf32>, i32 -> vector<16x64xf32>
    %c20 = arith.constant 20 : index
    %c0_411 = arith.constant 0 : index
    %536 = vector.load %arg2[%c20, %c0_411] : memref<24x64xf32, #tpu.memory_space<vmem>>, vector<1x64xf32>
    %537 = vector.broadcast %536 : vector<1x64xf32> to vector<16x64xf32>
    %538 = arith.mulf %535, %537 : vector<16x64xf32>
    %539 = arith.truncf %538 : vector<16x64xf32> to vector<16x64xbf16>
    %cst_412 = arith.constant dense<0.000000e+00> : vector<8x64xf32>
    %540 = tpu.matmul %534, %539, %cst_412 {dimension_numbers = #tpu.dot_dimension_numbers<[1], [0], [0], [1], [0, 0, 1, 1], [], []>} : vector<8x16xbf16>, vector<16x64xbf16>, vector<8x64xf32> -> vector<8x64xf32>
    %541 = arith.addf %532, %540 : vector<8x64xf32>
    %c2_413 = arith.constant 2 : index
    %c6_414 = arith.constant 6 : index
    %c0_415 = arith.constant 0 : index
    %c0_416 = arith.constant 0 : index
    %542 = vector.load %arg6[%c2_413, %c6_414, %c0_415, %c0_416] : memref<3x9x8x16xbf16, #tpu.memory_space<vmem>>, vector<1x1x8x16xbf16>
    %543 = vector.shape_cast %542 : vector<1x1x8x16xbf16> to vector<8x16xbf16>
    %c22_i32 = arith.constant 22 : i32
    %544 = tpu.dynamic_rotate %304 by %c22_i32 dim 1 : vector<16x64xf32>, i32 -> vector<16x64xf32>
    %c21 = arith.constant 21 : index
    %c0_417 = arith.constant 0 : index
    %545 = vector.load %arg2[%c21, %c0_417] : memref<24x64xf32, #tpu.memory_space<vmem>>, vector<1x64xf32>
    %546 = vector.broadcast %545 : vector<1x64xf32> to vector<16x64xf32>
    %547 = arith.mulf %544, %546 : vector<16x64xf32>
    %548 = arith.truncf %547 : vector<16x64xf32> to vector<16x64xbf16>
    %cst_418 = arith.constant dense<0.000000e+00> : vector<8x64xf32>
    %549 = tpu.matmul %543, %548, %cst_418 {dimension_numbers = #tpu.dot_dimension_numbers<[1], [0], [0], [1], [0, 0, 1, 1], [], []>} : vector<8x16xbf16>, vector<16x64xbf16>, vector<8x64xf32> -> vector<8x64xf32>
    %550 = arith.addf %541, %549 : vector<8x64xf32>
    %c2_419 = arith.constant 2 : index
    %c7_420 = arith.constant 7 : index
    %c0_421 = arith.constant 0 : index
    %c0_422 = arith.constant 0 : index
    %551 = vector.load %arg6[%c2_419, %c7_420, %c0_421, %c0_422] : memref<3x9x8x16xbf16, #tpu.memory_space<vmem>>, vector<1x1x8x16xbf16>
    %552 = vector.shape_cast %551 : vector<1x1x8x16xbf16> to vector<8x16xbf16>
    %c16_i32 = arith.constant 16 : i32
    %553 = tpu.dynamic_rotate %304 by %c16_i32 dim 1 : vector<16x64xf32>, i32 -> vector<16x64xf32>
    %c22 = arith.constant 22 : index
    %c0_423 = arith.constant 0 : index
    %554 = vector.load %arg2[%c22, %c0_423] : memref<24x64xf32, #tpu.memory_space<vmem>>, vector<1x64xf32>
    %555 = vector.broadcast %554 : vector<1x64xf32> to vector<16x64xf32>
    %556 = arith.mulf %553, %555 : vector<16x64xf32>
    %557 = arith.truncf %556 : vector<16x64xf32> to vector<16x64xbf16>
    %cst_424 = arith.constant dense<0.000000e+00> : vector<8x64xf32>
    %558 = tpu.matmul %552, %557, %cst_424 {dimension_numbers = #tpu.dot_dimension_numbers<[1], [0], [0], [1], [0, 0, 1, 1], [], []>} : vector<8x16xbf16>, vector<16x64xbf16>, vector<8x64xf32> -> vector<8x64xf32>
    %559 = arith.addf %550, %558 : vector<8x64xf32>
    %c2_425 = arith.constant 2 : index
    %c8_426 = arith.constant 8 : index
    %c0_427 = arith.constant 0 : index
    %c0_428 = arith.constant 0 : index
    %560 = vector.load %arg6[%c2_425, %c8_426, %c0_427, %c0_428] : memref<3x9x8x16xbf16, #tpu.memory_space<vmem>>, vector<1x1x8x16xbf16>
    %561 = vector.shape_cast %560 : vector<1x1x8x16xbf16> to vector<8x16xbf16>
    %c10_i32 = arith.constant 10 : i32
    %562 = tpu.dynamic_rotate %304 by %c10_i32 dim 1 : vector<16x64xf32>, i32 -> vector<16x64xf32>
    %c23 = arith.constant 23 : index
    %c0_429 = arith.constant 0 : index
    %563 = vector.load %arg2[%c23, %c0_429] : memref<24x64xf32, #tpu.memory_space<vmem>>, vector<1x64xf32>
    %564 = vector.broadcast %563 : vector<1x64xf32> to vector<16x64xf32>
    %565 = arith.mulf %562, %564 : vector<16x64xf32>
    %566 = arith.truncf %565 : vector<16x64xf32> to vector<16x64xbf16>
    %cst_430 = arith.constant dense<0.000000e+00> : vector<8x64xf32>
    %567 = tpu.matmul %561, %566, %cst_430 {dimension_numbers = #tpu.dot_dimension_numbers<[1], [0], [0], [1], [0, 0, 1, 1], [], []>} : vector<8x16xbf16>, vector<16x64xbf16>, vector<8x64xf32> -> vector<8x64xf32>
    %568 = arith.addf %559, %567 : vector<8x64xf32>
    %c3_431 = arith.constant 3 : index
    %c0_432 = arith.constant 0 : index
    %c0_433 = arith.constant 0 : index
    %569 = vector.load %arg8[%c3_431, %c0_432, %c0_433] : memref<5x8x1xf32, #tpu.memory_space<vmem>>, vector<1x8x1xf32>
    %570 = vector.shape_cast %569 : vector<1x8x1xf32> to vector<8x1xf32>
    %571 = vector.broadcast %570 : vector<8x1xf32> to vector<8x64xf32>
    %572 = arith.addf %568, %571 : vector<8x64xf32>
    %c4_434 = arith.constant 4 : index
    %573 = memref.load %arg14[%c4_434] : memref<7xf32, #tpu.memory_space<smem>>
    %cst_435 = arith.constant 0.000000e+00 : f32
    %574 = vector.broadcast %cst_435 : f32 to vector<8x64xf32>
    %575 = arith.cmpf oge, %572, %574 : vector<8x64xf32>
    %576 = vector.broadcast %573 : f32 to vector<8x64xf32>
    %577 = arith.mulf %576, %572 : vector<8x64xf32>
    %578 = arith.select %575, %572, %577 : vector<8x64xi1>, vector<8x64xf32>
    %c24 = arith.constant 24 : index
    %c0_436 = arith.constant 0 : index
    %579 = vector.load %arg17[%c24, %c0_436] : memref<32x64xf32, #tpu.memory_space<vmem>>, vector<8x64xf32>
    tpu.vector_store %arg17[%c24, %c0_436], %578 {strides = array<i32>} : memref<32x64xf32, #tpu.memory_space<vmem>>, vector<8x64xf32>,
    %cst_437 = arith.constant dense<0.000000e+00> : vector<16xf32>
    %580 = vector.multi_reduction <add>, %304, %cst_437 [1] : vector<16x64xf32> to vector<16xf32>
    %581 = vector.shape_cast %580 : vector<16xf32> to vector<16x1xf32>
    %cst_438 = arith.constant 6.400000e+01 : f32
    %582 = vector.broadcast %cst_438 : f32 to vector<16x1xf32>
    %583 = arith.divf %581, %582 : vector<16x1xf32>
    %c0_439 = arith.constant 0 : index
    %c0_440 = arith.constant 0 : index
    %584 = vector.load %arg7[%c0_439, %c0_440] : memref<8x16xbf16, #tpu.memory_space<vmem>>, vector<8x16xbf16>
    %585 = arith.truncf %583 : vector<16x1xf32> to vector<16x1xbf16>
    %cst_441 = arith.constant dense<0.000000e+00> : vector<8x1xf32>
    %586 = tpu.matmul %584, %585, %cst_441 {dimension_numbers = #tpu.dot_dimension_numbers<[1], [0], [0], [1], [0, 0, 1, 1], [], []>} : vector<8x16xbf16>, vector<16x1xbf16>, vector<8x1xf32> -> vector<8x1xf32>
    %c4_442 = arith.constant 4 : index
    %c0_443 = arith.constant 0 : index
    %c0_444 = arith.constant 0 : index
    %587 = vector.load %arg8[%c4_442, %c0_443, %c0_444] : memref<5x8x1xf32, #tpu.memory_space<vmem>>, vector<1x8x1xf32>
    %588 = vector.shape_cast %587 : vector<1x8x1xf32> to vector<8x1xf32>
    %589 = arith.addf %586, %588 : vector<8x1xf32>
    %c5_445 = arith.constant 5 : index
    %590 = memref.load %arg14[%c5_445] : memref<7xf32, #tpu.memory_space<smem>>
    %cst_446 = arith.constant 0.000000e+00 : f32
    %591 = vector.broadcast %cst_446 : f32 to vector<8x1xf32>
    %592 = arith.cmpf oge, %589, %591 : vector<8x1xf32>
    %593 = vector.broadcast %590 : f32 to vector<8x1xf32>
    %594 = arith.mulf %593, %589 : vector<8x1xf32>
    %595 = arith.select %592, %589, %594 : vector<8x1xi1>, vector<8x1xf32>
    %c0_447 = arith.constant 0 : index
    %c0_448 = arith.constant 0 : index
    %596 = vector.load %arg17[%c0_447, %c0_448] : memref<32x64xf32, #tpu.memory_space<vmem>>, vector<32x64xf32>
    %597 = arith.truncf %596 : vector<32x64xf32> to vector<32x64xbf16>
    %c0_449 = arith.constant 0 : index
    %c0_450 = arith.constant 0 : index
    %598 = vector.load %arg9[%c0_449, %c0_450] : memref<16x32xbf16, #tpu.memory_space<vmem>>, vector<16x32xbf16>
    %cst_451 = arith.constant dense<0.000000e+00> : vector<16x64xf32>
    %599 = tpu.matmul %598, %597, %cst_451 {dimension_numbers = #tpu.dot_dimension_numbers<[1], [0], [0], [1], [0, 0, 1, 1], [], []>} : vector<16x32xbf16>, vector<32x64xbf16>, vector<16x64xf32> -> vector<16x64xf32>
    %c0_452 = arith.constant 0 : index
    %c0_453 = arith.constant 0 : index
    %600 = vector.load %arg10[%c0_452, %c0_453] : memref<16x8xbf16, #tpu.memory_space<vmem>>, vector<16x8xbf16>
    %601 = arith.truncf %595 : vector<8x1xf32> to vector<8x1xbf16>
    %cst_454 = arith.constant dense<0.000000e+00> : vector<16x1xf32>
    %602 = tpu.matmul %600, %601, %cst_454 {dimension_numbers = #tpu.dot_dimension_numbers<[1], [0], [0], [1], [0, 0, 1, 1], [], []>} : vector<16x8xbf16>, vector<8x1xbf16>, vector<16x1xf32> -> vector<16x1xf32>
    %603 = vector.broadcast %602 : vector<16x1xf32> to vector<16x64xf32>
    %604 = arith.addf %599, %603 : vector<16x64xf32>
    %c0_455 = arith.constant 0 : index
    %c0_456 = arith.constant 0 : index
    %605 = vector.load %arg11[%c0_455, %c0_456] : memref<16x1xf32, #tpu.memory_space<vmem>>, vector<16x1xf32>
    %606 = vector.broadcast %605 : vector<16x1xf32> to vector<16x64xf32>
    %607 = arith.addf %604, %606 : vector<16x64xf32>
    %c6_457 = arith.constant 6 : index
    %608 = memref.load %arg14[%c6_457] : memref<7xf32, #tpu.memory_space<smem>>
    %cst_458 = arith.constant 0.000000e+00 : f32
    %609 = vector.broadcast %cst_458 : f32 to vector<16x64xf32>
    %610 = arith.cmpf oge, %607, %609 : vector<16x64xf32>
    %611 = vector.broadcast %608 : f32 to vector<16x64xf32>
    %612 = arith.mulf %611, %607 : vector<16x64xf32>
    %613 = arith.select %610, %607, %612 : vector<16x64xi1>, vector<16x64xf32>
    %c0_459 = arith.constant 0 : index
    %c0_460 = arith.constant 0 : index
    %614 = vector.load %arg12[%c0_459, %c0_460] : memref<16x16xbf16, #tpu.memory_space<vmem>>, vector<16x16xbf16>
    %615 = arith.truncf %613 : vector<16x64xf32> to vector<16x64xbf16>
    %cst_461 = arith.constant dense<0.000000e+00> : vector<16x64xf32>
    %616 = tpu.matmul %614, %615, %cst_461 {dimension_numbers = #tpu.dot_dimension_numbers<[1], [0], [0], [1], [0, 0, 1, 1], [], []>} : vector<16x16xbf16>, vector<16x64xbf16>, vector<16x64xf32> -> vector<16x64xf32>
    %c0_462 = arith.constant 0 : index
    %c0_463 = arith.constant 0 : index
    %617 = vector.load %arg13[%c0_462, %c0_463] : memref<16x1xf32, #tpu.memory_space<vmem>>, vector<16x1xf32>
    %618 = vector.broadcast %617 : vector<16x1xf32> to vector<16x64xf32>
    %619 = arith.addf %616, %618 : vector<16x64xf32>
    %c0_464 = arith.constant 0 : index
    %c0_465 = arith.constant 0 : index
    %c0_466 = arith.constant 0 : index
    %620 = vector.load %arg15[%c0_464, %c0_465, %c0_466] : memref<1x16x64xf32, #tpu.memory_space<vmem>>, vector<1x16x64xf32>
    %621 = vector.shape_cast %620 : vector<1x16x64xf32> to vector<16x64xf32>
    %622 = vector.shape_cast %619 : vector<16x64xf32> to vector<1x16x64xf32>
    tpu.vector_store %arg15[%c0_464, %c0_465, %c0_466], %622 {strides = array<i32>} : memref<1x16x64xf32, #tpu.memory_space<vmem>>, vector<1x16x64xf32>,
    return
  }
  func.func @transform_0(%arg0: i32) -> (i32, i32, i32, i32) {
    %c0_i32 = arith.constant 0 : i32
    %c0_i32_0 = arith.constant 0 : i32
    %c0_i32_1 = arith.constant 0 : i32
    %c0_i32_2 = arith.constant 0 : i32
    return %arg0, %c0_i32, %c0_i32_0, %c0_i32_1 : i32, i32, i32, i32
  }
  func.func @transform_1(%arg0: i32) -> (i32, i32) {
    %c0_i32 = arith.constant 0 : i32
    %c0_i32_0 = arith.constant 0 : i32
    %c0_i32_1 = arith.constant 0 : i32
    return %c0_i32, %c0_i32_0 : i32, i32
  }
  func.func @transform_2(%arg0: i32) -> (i32, i32, i32) {
    %c0_i32 = arith.constant 0 : i32
    %c0_i32_0 = arith.constant 0 : i32
    %c0_i32_1 = arith.constant 0 : i32
    %c0_i32_2 = arith.constant 0 : i32
    return %c0_i32, %c0_i32_0, %c0_i32_1 : i32, i32, i32
  }
  func.func @transform_3(%arg0: i32) -> (i32, i32) {
    %c0_i32 = arith.constant 0 : i32
    %c0_i32_0 = arith.constant 0 : i32
    %c0_i32_1 = arith.constant 0 : i32
    return %c0_i32, %c0_i32_0 : i32, i32
  }
  func.func @transform_4(%arg0: i32) -> (i32, i32) {
    %c0_i32 = arith.constant 0 : i32
    %c0_i32_0 = arith.constant 0 : i32
    %c0_i32_1 = arith.constant 0 : i32
    return %c0_i32, %c0_i32_0 : i32, i32
  }
  func.func @transform_5(%arg0: i32) -> (i32, i32, i32, i32) {
    %c0_i32 = arith.constant 0 : i32
    %c0_i32_0 = arith.constant 0 : i32
    %c0_i32_1 = arith.constant 0 : i32
    %c0_i32_2 = arith.constant 0 : i32
    %c0_i32_3 = arith.constant 0 : i32
    return %c0_i32, %c0_i32_0, %c0_i32_1, %c0_i32_2 : i32, i32, i32, i32
  }
  func.func @transform_6(%arg0: i32) -> (i32, i32) {
    %c0_i32 = arith.constant 0 : i32
    %c0_i32_0 = arith.constant 0 : i32
    %c0_i32_1 = arith.constant 0 : i32
    return %c0_i32, %c0_i32_0 : i32, i32
  }
  func.func @transform_7(%arg0: i32) -> (i32, i32, i32) {
    %c0_i32 = arith.constant 0 : i32
    %c0_i32_0 = arith.constant 0 : i32
    %c0_i32_1 = arith.constant 0 : i32
    %c0_i32_2 = arith.constant 0 : i32
    return %c0_i32, %c0_i32_0, %c0_i32_1 : i32, i32, i32
  }
  func.func @transform_8(%arg0: i32) -> (i32, i32) {
    %c0_i32 = arith.constant 0 : i32
    %c0_i32_0 = arith.constant 0 : i32
    %c0_i32_1 = arith.constant 0 : i32
    return %c0_i32, %c0_i32_0 : i32, i32
  }
  func.func @transform_9(%arg0: i32) -> (i32, i32) {
    %c0_i32 = arith.constant 0 : i32
    %c0_i32_0 = arith.constant 0 : i32
    %c0_i32_1 = arith.constant 0 : i32
    return %c0_i32, %c0_i32_0 : i32, i32
  }
  func.func @transform_10(%arg0: i32) -> (i32, i32) {
    %c0_i32 = arith.constant 0 : i32
    %c0_i32_0 = arith.constant 0 : i32
    %c0_i32_1 = arith.constant 0 : i32
    return %c0_i32, %c0_i32_0 : i32, i32
  }
  func.func @transform_11(%arg0: i32) -> (i32, i32) {
    %c0_i32 = arith.constant 0 : i32
    %c0_i32_0 = arith.constant 0 : i32
    %c0_i32_1 = arith.constant 0 : i32
    return %c0_i32, %c0_i32_0 : i32, i32
  }
  func.func @transform_12(%arg0: i32) -> (i32, i32) {
    %c0_i32 = arith.constant 0 : i32
    %c0_i32_0 = arith.constant 0 : i32
    %c0_i32_1 = arith.constant 0 : i32
    return %c0_i32, %c0_i32_0 : i32, i32
  }
  func.func @transform_13(%arg0: i32) -> i32 {
    %c0_i32 = arith.constant 0 : i32
    %c0_i32_0 = arith.constant 0 : i32
    return %c0_i32 : i32
  }
  func.func @transform_14(%arg0: i32) -> (i32, i32, i32) {
    %c0_i32 = arith.constant 0 : i32
    %c0_i32_0 = arith.constant 0 : i32
    %c0_i32_1 = arith.constant 0 : i32
    return %arg0, %c0_i32, %c0_i32_0 : i32, i32, i32
  }
}

</mosaic_0001>

<llo_original>
// kernel: tile.8
$region0: #{tile.8}
  #allocation0 [shape = 's32[1]{0}', space=sflag, size = 0x4, scoped, tag = 'scoped memory for tile.8']
  %s0 = inlined_call_operand.vmem [shape: f32[4], index: 0, kind: input, shape index: {}]
  %s1 = inlined_call_operand.vmem [shape: f32[4,4], index: 1, kind: output, shape index: {}]
  // Predicated region
  $region2: #{tile.8} parent=0 // pred_check
    _
  $region3: #{tile.8} parent=0 // pred_check_branch
    %3 = sbr.rel (0) target = $region5
  $region4: #{tile.8} parent=0 // pred_region
    _
  $region5: #{tile.8} parent=0 // pred_fallthru
    _
  %v4 = vld [vmem:[%s0] ss:$0 sm:$0xff]
  %5 = vst [vmem:[%s1] sm:$0xf] %v4

// kernel: tile.0
$region0: #{tile.0}
  %s0 = inlined_call_operand.vmem [shape: f32[4,4], index: 0, kind: input, shape index: {}]
  %s1 = inlined_call_operand.vmem [shape: f32[16,1], index: 1, kind: output, shape index: {}]
  $region1: #{tile.0} parent=0
    #allocation0 [shape = 'u8[4096]{0}', space=vmem, size = 0x1000, scoped, tag = 'scoped mem for input reshape']
    %s3 = sshllo.u32 0, 4
    %v4 = vld [vmem:[%s0] sm:%s3]
    %5 = vst [vmem:[#allocation0] sm:%s3] %v4
    %v6 = vld [vmem:[#allocation0] sm:$0xf]
    %vm7 = vcmask 7168
    %8 = vst.msk [vmem:[%s1] ss:$4 sm:$0xf] %vm7, %v6
    %v9 = vld [vmem:[#allocation0] sm:$0xf]
    %10 = vrot.lane.b32.xlu0 %v9, 127
    %v11 = vpop.permute.xlu0 %10
    %vm12 = vcmask 7168
    %s13 = scalar_lea.vmem %s1, 1
    %14 = vst.msk [vmem:[%s13] ss:$4 sm:$0xf] %vm12, %v11
    %v15 = vld [vmem:[#allocation0] sm:$0xf]
    %16 = vrot.lane.b32.xlu0 %v15, 126
    %v17 = vpop.permute.xlu0 %16
    %vm18 = vcmask 7168
    %s19 = scalar_lea.vmem %s1, 2
    %20 = vst.msk [vmem:[%s19] ss:$4 sm:$0xf] %vm18, %v17
    %v21 = vld [vmem:[#allocation0] sm:$0xf]
    %22 = vrot.lane.b32.xlu0 %v21, 125
    %v23 = vpop.permute.xlu0 %22
    %vm24 = vcmask 7168
    %s25 = scalar_lea.vmem %s1, 3
    %26 = vst.msk [vmem:[%s25] ss:$4 sm:$0xf] %vm24, %v23

// kernel: foldconv_aspp_forward.1
$region0: #{foldconv_aspp_forward.1}
  #allocation0 [shape = 'u32[]', space=smem, size = 0x4, offset = 0x4, fixed_abs, tag = 'smem constant byte address 0x4 - core index']
  #allocation1 [shape = 'u32[144,128]{1,0:T(1,128)}', space=vmem, size = 0x12000, scoped, tag = 'internal scratch']
  #allocation2 [shape = 'f32[16,64]{1,0:T(8,128)}', space=vmem, size = 0x2000, scoped, tag = 'scratch operand']
  #allocation3 [shape = 'f32[32,64]{1,0:T(8,128)}', space=vmem, size = 0x4000, scoped, tag = 'scratch operand']
  %s0 = inlined_call_operand.vmem [shape: f32[2,4,4,64], index: 0, kind: input, shape index: {}]
  %s1 = inlined_call_operand.vmem [shape: f32[24,64], index: 1, kind: input, shape index: {}]
  %s2 = inlined_call_operand.vmem [shape: bf16[9,4,4], index: 2, kind: input, shape index: {}]
  %s3 = inlined_call_operand.vmem [shape: f32[4,1], index: 3, kind: input, shape index: {}]
  %s4 = inlined_call_operand.vmem [shape: bf16[8,16], index: 4, kind: input, shape index: {}]
  %s5 = inlined_call_operand.vmem [shape: bf16[3,9,8,16], index: 5, kind: input, shape index: {}]
  %s6 = inlined_call_operand.vmem [shape: bf16[8,16], index: 6, kind: input, shape index: {}]
  %s7 = inlined_call_operand.vmem [shape: f32[5,8,1], index: 7, kind: input, shape index: {}]
  %s8 = inlined_call_operand.vmem [shape: bf16[16,32], index: 8, kind: input, shape index: {}]
  %s9 = inlined_call_operand.vmem [shape: bf16[16,8], index: 9, kind: input, shape index: {}]
  %s10 = inlined_call_operand.vmem [shape: f32[16,1], index: 10, kind: input, shape index: {}]
  %s11 = inlined_call_operand.vmem [shape: bf16[16,16], index: 11, kind: input, shape index: {}]
  %s12 = inlined_call_operand.vmem [shape: f32[16,1], index: 12, kind: input, shape index: {}]
  %s13 = inlined_call_operand.vmem [shape: f32[7], index: 13, kind: input, shape index: {}]
  %s14 = inlined_call_operand.vmem [shape: f32[2,16,64], index: 14, kind: output, shape index: {}]
  %s15 = sld [smem:[#allocation0]]
  $region93: #{foldconv_aspp_forward.1} parent=0
    _
  %s17 = ssub.s32 1, %s15
  %s18 = scalar_select 0, %s17, %s15
  $region1: #{foldconv_aspp_forward.1} parent=0
    #allocation4 [shape = 'u8[512]{0}', space=smem, size = 0x200, scoped, tag = 'input window, operand 13, single buffered']
    #allocation5 [shape = 's32[2]{0}', space=sflag, size = 0x8, scoped, tag = 'scoped memory for foldconv_aspp_forward.1']
    %19 = vsyncpa [#allocation5], 0
    loop: start=0, step=1, limit=4
    $region2: #{foldconv_aspp_forward.1} parent=1 // loop_pre_header
      _
    $region3: #{foldconv_aspp_forward.1} parent=1 // loop_header
      %s21 = sphi 0, %s25
      %p22 = scmp.ge.s32.totalorder %s21, 4
      %s31 = sphi 0, %s33
      %s34 = sphi 0, %s31
      %s35 = sphi 0, %s34
      %s51 = sphi 0, %s35
      %s55 = sphi 0, %s55
      %s57 = sphi 0, %s55
      %s58 = sphi 0, %s57
      %s72 = sphi 0, %s58
      %s76 = sphi 0, %s76
      %s78 = sphi 0, %s76
      %s79 = sphi 0, %s78
      %s93 = sphi 0, %s79
      %s97 = sphi 0, %s97
      %s99 = sphi 0, %s97
      %s100 = sphi 0, %s99
      %s114 = sphi 0, %s100
      %s118 = sphi 0, %s118
      %s120 = sphi 0, %s118
      %s121 = sphi 0, %s120
      %s135 = sphi 0, %s121
      %s139 = sphi 0, %s139
      %s141 = sphi 0, %s139
      %s142 = sphi 0, %s141
      %s156 = sphi 0, %s142
      %s160 = sphi 0, %s160
      %s162 = sphi 0, %s160
      %s163 = sphi 0, %s162
      %s177 = sphi 0, %s163
      %s181 = sphi 0, %s181
      %s183 = sphi 0, %s181
      %s184 = sphi 0, %s183
      %s198 = sphi 0, %s184
      %s202 = sphi 0, %s202
      %s204 = sphi 0, %s202
      %s205 = sphi 0, %s204
      %s219 = sphi 0, %s205
      %s223 = sphi 0, %s223
      %s225 = sphi 0, %s223
      %s226 = sphi 0, %s225
      %s240 = sphi 0, %s226
      %s244 = sphi 0, %s244
      %s246 = sphi 0, %s244
      %s247 = sphi 0, %s246
      %s261 = sphi 0, %s247
      %s265 = sphi 0, %s265
      %s267 = sphi 0, %s265
      %s268 = sphi 0, %s267
      %s282 = sphi 0, %s268
      %s286 = sphi 0, %s286
      %s288 = sphi 0, %s286
      %s289 = sphi 0, %s288
      %s303 = sphi 0, %s289
      %s307 = sphi 0, %s307
      %s309 = sphi 0, %s307
      %s310 = sphi 0, %s309
      %s324 = sphi 0, %s310
      %s330 = sphi 0, %s332
      %s333 = sphi 0, %s330
      %s334 = sphi 0, %s333
      %s350 = sphi 0, %s334
    $region4: #{foldconv_aspp_forward.1} parent=1 // loop_header_branch
      %24 = sbr.rel (%p22) target = $region8
    $region5: #{foldconv_aspp_forward.1} parent=1 // loop_body
      %s26 = ssub.s32 %s21, 1
      %s27 = ssub.s32 %s21, 2
      %s28 = sadd.s32 %s21, 1
      %s29 = ssub.s32 %s21, %s28
      %p30 = scmp.eq.s32.totalorder %s29, 0
      %s32 = sadd.s32 %s31, 1
      %s33 = scalar_select %p30, %s31, %s32
      %p36 = pneg %p30
      %p37 = scmp.eq.s32.totalorder %s21, 1
      %p38 = por %p36, %p37
      %p39 = scmp.ne.s32.totalorder %s31, %s34
      %p40 = scmp.eq.s32.totalorder %s21, 0
      %p41 = por %p39, %p40
      %p42 = scmp.ne.s32.totalorder %s31, %s34
      %p43 = scmp.eq.s32.totalorder %s26, 1
      %p44 = por %p42, %p43
      %p45 = scmp.ne.s32.totalorder %s34, %s35
      %p46 = scmp.eq.s32.totalorder %s26, 0
      %p47 = por %p45, %p46
      %p48 = scmp.ne.s32.totalorder %s34, %s35
      %p49 = scmp.eq.s32.totalorder %s27, 1
      %p50 = por %p48, %p49
      %p52 = scmp.ne.s32.totalorder %s35, %s51
      %p53 = scmp.eq.s32.totalorder %s27, 0
      %p54 = por %p52, %p53
      %s56 = sadd.s32 %s55, 1
      %p59 = scmp.eq.s32.totalorder %s21, 1
      %p60 = scmp.ne.s32.totalorder %s55, %s57
      %p61 = scmp.eq.s32.totalorder %s21, 0
      %p62 = por %p60, %p61
      %p63 = scmp.ne.s32.totalorder %s55, %s57
      %p64 = scmp.eq.s32.totalorder %s26, 1
      %p65 = por %p63, %p64
      %p66 = scmp.ne.s32.totalorder %s57, %s58
      %p67 = scmp.eq.s32.totalorder %s26, 0
      %p68 = por %p66, %p67
      %p69 = scmp.ne.s32.totalorder %s57, %s58
      %p70 = scmp.eq.s32.totalorder %s27, 1
      %p71 = por %p69, %p70
      %p73 = scmp.ne.s32.totalorder %s58, %s72
      %p74 = scmp.eq.s32.totalorder %s27, 0
      %p75 = por %p73, %p74
      %s77 = sadd.s32 %s76, 1
      %p80 = scmp.eq.s32.totalorder %s21, 1
      %p81 = scmp.ne.s32.totalorder %s76, %s78
      %p82 = scmp.eq.s32.totalorder %s21, 0
      %p83 = por %p81, %p82
      %p84 = scmp.ne.s32.totalorder %s76, %s78
      %p85 = scmp.eq.s32.totalorder %s26, 1
      %p86 = por %p84, %p85
      %p87 = scmp.ne.s32.totalorder %s78, %s79
      %p88 = scmp.eq.s32.totalorder %s26, 0
      %p89 = por %p87, %p88
      %p90 = scmp.ne.s32.totalorder %s78, %s79
      %p91 = scmp.eq.s32.totalorder %s27, 1
      %p92 = por %p90, %p91
      %p94 = scmp.ne.s32.totalorder %s79, %s93
      %p95 = scmp.eq.s32.totalorder %s27, 0
      %p96 = por %p94, %p95
      %s98 = sadd.s32 %s97, 1
      %p101 = scmp.eq.s32.totalorder %s21, 1
      %p102 = scmp.ne.s32.totalorder %s97, %s99
      %p103 = scmp.eq.s32.totalorder %s21, 0
      %p104 = por %p102, %p103
      %p105 = scmp.ne.s32.totalorder %s97, %s99
      %p106 = scmp.eq.s32.totalorder %s26, 1
      %p107 = por %p105, %p106
      %p108 = scmp.ne.s32.totalorder %s99, %s100
      %p109 = scmp.eq.s32.totalorder %s26, 0
      %p110 = por %p108, %p109
      %p111 = scmp.ne.s32.totalorder %s99, %s100
      %p112 = scmp.eq.s32.totalorder %s27, 1
      %p113 = por %p111, %p112
      %p115 = scmp.ne.s32.totalorder %s100, %s114
      %p116 = scmp.eq.s32.totalorder %s27, 0
      %p117 = por %p115, %p116
      %s119 = sadd.s32 %s118, 1
      %p122 = scmp.eq.s32.totalorder %s21, 1
      %p123 = scmp.ne.s32.totalorder %s118, %s120
      %p124 = scmp.eq.s32.totalorder %s21, 0
      %p125 = por %p123, %p124
      %p126 = scmp.ne.s32.totalorder %s118, %s120
      %p127 = scmp.eq.s32.totalorder %s26, 1
      %p128 = por %p126, %p127
      %p129 = scmp.ne.s32.totalorder %s120, %s121
      %p130 = scmp.eq.s32.totalorder %s26, 0
      %p131 = por %p129, %p130
      %p132 = scmp.ne.s32.totalorder %s120, %s121
      %p133 = scmp.eq.s32.totalorder %s27, 1
      %p134 = por %p132, %p133
      %p136 = scmp.ne.s32.totalorder %s121, %s135
      %p137 = scmp.eq.s32.totalorder %s27, 0
      %p138 = por %p136, %p137
      %s140 = sadd.s32 %s139, 1
      %p143 = scmp.eq.s32.totalorder %s21, 1
      %p144 = scmp.ne.s32.totalorder %s139, %s141
      %p145 = scmp.eq.s32.totalorder %s21, 0
      %p146 = por %p144, %p145
      %p147 = scmp.ne.s32.totalorder %s139, %s141
      %p148 = scmp.eq.s32.totalorder %s26, 1
      %p149 = por %p147, %p148
      %p150 = scmp.ne.s32.totalorder %s141, %s142
      %p151 = scmp.eq.s32.totalorder %s26, 0
      %p152 = por %p150, %p151
      %p153 = scmp.ne.s32.totalorder %s141, %s142
      %p154 = scmp.eq.s32.totalorder %s27, 1
      %p155 = por %p153, %p154
      %p157 = scmp.ne.s32.totalorder %s142, %s156
      %p158 = scmp.eq.s32.totalorder %s27, 0
      %p159 = por %p157, %p158
      %s161 = sadd.s32 %s160, 1
      %p164 = scmp.eq.s32.totalorder %s21, 1
      %p165 = scmp.ne.s32.totalorder %s160, %s162
      %p166 = scmp.eq.s32.totalorder %s21, 0
      %p167 = por %p165, %p166
      %p168 = scmp.ne.s32.totalorder %s160, %s162
      %p169 = scmp.eq.s32.totalorder %s26, 1
      %p170 = por %p168, %p169
      %p171 = scmp.ne.s32.totalorder %s162, %s163
      %p172 = scmp.eq.s32.totalorder %s26, 0
      %p173 = por %p171, %p172
      %p174 = scmp.ne.s32.totalorder %s162, %s163
      %p175 = scmp.eq.s32.totalorder %s27, 1
      %p176 = por %p174, %p175
      %p178 = scmp.ne.s32.totalorder %s163, %s177
      %p179 = scmp.eq.s32.totalorder %s27, 0
      %p180 = por %p178, %p179
      %s182 = sadd.s32 %s181, 1
      %p185 = scmp.eq.s32.totalorder %s21, 1
      %p186 = scmp.ne.s32.totalorder %s181, %s183
      %p187 = scmp.eq.s32.totalorder %s21, 0
      %p188 = por %p186, %p187
      %p189 = scmp.ne.s32.totalorder %s181, %s183
      %p190 = scmp.eq.s32.totalorder %s26, 1
      %p191 = por %p189, %p190
      %p192 = scmp.ne.s32.totalorder %s183, %s184
      %p193 = scmp.eq.s32.totalorder %s26, 0
      %p194 = por %p192, %p193
      %p195 = scmp.ne.s32.totalorder %s183, %s184
      %p196 = scmp.eq.s32.totalorder %s27, 1
      %p197 = por %p195, %p196
      %p199 = scmp.ne.s32.totalorder %s184, %s198
      %p200 = scmp.eq.s32.totalorder %s27, 0
      %p201 = por %p199, %p200
      %s203 = sadd.s32 %s202, 1
      %p206 = scmp.eq.s32.totalorder %s21, 1
      %p207 = scmp.ne.s32.totalorder %s202, %s204
      %p208 = scmp.eq.s32.totalorder %s21, 0
      %p209 = por %p207, %p208
      %p210 = scmp.ne.s32.totalorder %s202, %s204
      %p211 = scmp.eq.s32.totalorder %s26, 1
      %p212 = por %p210, %p211
      %p213 = scmp.ne.s32.totalorder %s204, %s205
      %p214 = scmp.eq.s32.totalorder %s26, 0
      %p215 = por %p213, %p214
      %p216 = scmp.ne.s32.totalorder %s204, %s205
      %p217 = scmp.eq.s32.totalorder %s27, 1
      %p218 = por %p216, %p217
      %p220 = scmp.ne.s32.totalorder %s205, %s219
      %p221 = scmp.eq.s32.totalorder %s27, 0
      %p222 = por %p220, %p221
      %s224 = sadd.s32 %s223, 1
      %p227 = scmp.eq.s32.totalorder %s21, 1
      %p228 = scmp.ne.s32.totalorder %s223, %s225
      %p229 = scmp.eq.s32.totalorder %s21, 0
      %p230 = por %p228, %p229
      %p231 = scmp.ne.s32.totalorder %s223, %s225
      %p232 = scmp.eq.s32.totalorder %s26, 1
      %p233 = por %p231, %p232
      %p234 = scmp.ne.s32.totalorder %s225, %s226
      %p235 = scmp.eq.s32.totalorder %s26, 0
      %p236 = por %p234, %p235
      %p237 = scmp.ne.s32.totalorder %s225, %s226
      %p238 = scmp.eq.s32.totalorder %s27, 1
      %p239 = por %p237, %p238
      %p241 = scmp.ne.s32.totalorder %s226, %s240
      %p242 = scmp.eq.s32.totalorder %s27, 0
      %p243 = por %p241, %p242
      %s245 = sadd.s32 %s244, 1
      %p248 = scmp.eq.s32.totalorder %s21, 1
      %p249 = scmp.ne.s32.totalorder %s244, %s246
      %p250 = scmp.eq.s32.totalorder %s21, 0
      %p251 = por %p249, %p250
      %p252 = scmp.ne.s32.totalorder %s244, %s246
      %p253 = scmp.eq.s32.totalorder %s26, 1
      %p254 = por %p252, %p253
      %p255 = scmp.ne.s32.totalorder %s246, %s247
      %p256 = scmp.eq.s32.totalorder %s26, 0
      %p257 = por %p255, %p256
      %p258 = scmp.ne.s32.totalorder %s246, %s247
      %p259 = scmp.eq.s32.totalorder %s27, 1
      %p260 = por %p258, %p259
      %p262 = scmp.ne.s32.totalorder %s247, %s261
      %p263 = scmp.eq.s32.totalorder %s27, 0
      %p264 = por %p262, %p263
      %s266 = sadd.s32 %s265, 1
      %p269 = scmp.eq.s32.totalorder %s21, 1
      %p270 = scmp.ne.s32.totalorder %s265, %s267
      %p271 = scmp.eq.s32.totalorder %s21, 0
      %p272 = por %p270, %p271
      %p273 = scmp.ne.s32.totalorder %s265, %s267
      %p274 = scmp.eq.s32.totalorder %s26, 1
      %p275 = por %p273, %p274
      %p276 = scmp.ne.s32.totalorder %s267, %s268
      %p277 = scmp.eq.s32.totalorder %s26, 0
      %p278 = por %p276, %p277
      %p279 = scmp.ne.s32.totalorder %s267, %s268
      %p280 = scmp.eq.s32.totalorder %s27, 1
      %p281 = por %p279, %p280
      %p283 = scmp.ne.s32.totalorder %s268, %s282
      %p284 = scmp.eq.s32.totalorder %s27, 0
      %p285 = por %p283, %p284
      %s287 = sadd.s32 %s286, 1
      %p290 = scmp.eq.s32.totalorder %s21, 1
      %p291 = scmp.ne.s32.totalorder %s286, %s288
      %p292 = scmp.eq.s32.totalorder %s21, 0
      %p293 = por %p291, %p292
      %p294 = scmp.ne.s32.totalorder %s286, %s288
      %p295 = scmp.eq.s32.totalorder %s26, 1
      %p296 = por %p294, %p295
      %p297 = scmp.ne.s32.totalorder %s288, %s289
      %p298 = scmp.eq.s32.totalorder %s26, 0
      %p299 = por %p297, %p298
      %p300 = scmp.ne.s32.totalorder %s288, %s289
      %p301 = scmp.eq.s32.totalorder %s27, 1
      %p302 = por %p300, %p301
      %p304 = scmp.ne.s32.totalorder %s289, %s303
      %p305 = scmp.eq.s32.totalorder %s27, 0
      %p306 = por %p304, %p305
      %s308 = sadd.s32 %s307, 1
      %p311 = scmp.eq.s32.totalorder %s21, 1
      %p312 = scmp.ne.s32.totalorder %s307, %s309
      %p313 = scmp.eq.s32.totalorder %s21, 0
      %p314 = por %p312, %p313
      %p315 = scmp.ne.s32.totalorder %s307, %s309
      %p316 = scmp.eq.s32.totalorder %s26, 1
      %p317 = por %p315, %p316
      %p318 = scmp.ne.s32.totalorder %s309, %s310
      %p319 = scmp.eq.s32.totalorder %s26, 0
      %p320 = por %p318, %p319
      %p321 = scmp.ne.s32.totalorder %s309, %s310
      %p322 = scmp.eq.s32.totalorder %s27, 1
      %p323 = por %p321, %p322
      %p325 = scmp.ne.s32.totalorder %s310, %s324
      %p326 = scmp.eq.s32.totalorder %s27, 0
      %p327 = por %p325, %p326
      %s328 = ssub.s32 %s21, %s28
      %p329 = scmp.eq.s32.totalorder %s328, 0
      %s331 = sadd.s32 %s330, 1
      %s332 = scalar_select %p329, %s330, %s331
      %p335 = pneg %p329
      %p336 = scmp.eq.s32.totalorder %s21, 1
      %p337 = por %p335, %p336
      %p338 = scmp.ne.s32.totalorder %s330, %s333
      %p339 = scmp.eq.s32.totalorder %s21, 0
      %p340 = por %p338, %p339
      %p341 = scmp.ne.s32.totalorder %s330, %s333
      %p342 = scmp.eq.s32.totalorder %s26, 1
      %p343 = por %p341, %p342
      %p344 = scmp.ne.s32.totalorder %s333, %s334
      %p345 = scmp.eq.s32.totalorder %s26, 0
      %p346 = por %p344, %p345
      %p347 = scmp.ne.s32.totalorder %s333, %s334
      %p348 = scmp.eq.s32.totalorder %s27, 1
      %p349 = por %p347, %p348
      %p351 = scmp.ne.s32.totalorder %s334, %s350
      %p352 = scmp.eq.s32.totalorder %s27, 0
      %p353 = por %p351, %p352
      %p354 = scmp.le.s32.totalorder 1, %s21
      %p355 = scmp.lt.s32.totalorder %s21, 3
      %p356 = pnand %p354, %p355
      %p357 = pneg %p356
      // Predicated region
      $region9: #{foldconv_aspp_forward.1} parent=5 // pred_check
        _
      $region10: #{foldconv_aspp_forward.1} parent=5 // pred_check_branch
        %359 = sbr.rel (%p356) target = $region12
      $region11: #{foldconv_aspp_forward.1} parent=5 // pred_region
        %s360 = ssub.s32 %s21, 1
        // Predicated region
        $region13: #{foldconv_aspp_forward.1} parent=11 // pred_check
          %p361 = pneg %p68
        $region14: #{foldconv_aspp_forward.1} parent=11 // pred_check_branch
          %363 = sbr.rel (%p361) target = $region16
        $region15: #{foldconv_aspp_forward.1} parent=11 // pred_region
          _
        $region16: #{foldconv_aspp_forward.1} parent=11 // pred_fallthru
          _
        // Predicated region
        $region17: #{foldconv_aspp_forward.1} parent=11 // pred_check
          %p364 = pneg %p89
        $region18: #{foldconv_aspp_forward.1} parent=11 // pred_check_branch
          %366 = sbr.rel (%p364) target = $region20
        $region19: #{foldconv_aspp_forward.1} parent=11 // pred_region
          _
        $region20: #{foldconv_aspp_forward.1} parent=11 // pred_fallthru
          _
        // Predicated region
        $region21: #{foldconv_aspp_forward.1} parent=11 // pred_check
          %p367 = pneg %p110
        $region22: #{foldconv_aspp_forward.1} parent=11 // pred_check_branch
          %369 = sbr.rel (%p367) target = $region24
        $region23: #{foldconv_aspp_forward.1} parent=11 // pred_region
          _
        $region24: #{foldconv_aspp_forward.1} parent=11 // pred_fallthru
          _
        // Predicated region
        $region25: #{foldconv_aspp_forward.1} parent=11 // pred_check
          %p370 = pneg %p131
        $region26: #{foldconv_aspp_forward.1} parent=11 // pred_check_branch
          %372 = sbr.rel (%p370) target = $region28
        $region27: #{foldconv_aspp_forward.1} parent=11 // pred_region
          _
        $region28: #{foldconv_aspp_forward.1} parent=11 // pred_fallthru
          _
        // Predicated region
        $region29: #{foldconv_aspp_forward.1} parent=11 // pred_check
          %p373 = pneg %p152
        $region30: #{foldconv_aspp_forward.1} parent=11 // pred_check_branch
          %375 = sbr.rel (%p373) target = $region32
        $region31: #{foldconv_aspp_forward.1} parent=11 // pred_region
          _
        $region32: #{foldconv_aspp_forward.1} parent=11 // pred_fallthru
          _
        // Predicated region
        $region33: #{foldconv_aspp_forward.1} parent=11 // pred_check
          %p376 = pneg %p173
        $region34: #{foldconv_aspp_forward.1} parent=11 // pred_check_branch
          %378 = sbr.rel (%p376) target = $region36
        $region35: #{foldconv_aspp_forward.1} parent=11 // pred_region
          _
        $region36: #{foldconv_aspp_forward.1} parent=11 // pred_fallthru
          _
        // Predicated region
        $region37: #{foldconv_aspp_forward.1} parent=11 // pred_check
          %p379 = pneg %p194
        $region38: #{foldconv_aspp_forward.1} parent=11 // pred_check_branch
          %381 = sbr.rel (%p379) target = $region40
        $region39: #{foldconv_aspp_forward.1} parent=11 // pred_region
          _
        $region40: #{foldconv_aspp_forward.1} parent=11 // pred_fallthru
          _
        // Predicated region
        $region41: #{foldconv_aspp_forward.1} parent=11 // pred_check
          %p382 = pneg %p215
        $region42: #{foldconv_aspp_forward.1} parent=11 // pred_check_branch
          %384 = sbr.rel (%p382) target = $region44
        $region43: #{foldconv_aspp_forward.1} parent=11 // pred_region
          _
        $region44: #{foldconv_aspp_forward.1} parent=11 // pred_fallthru
          _
        // Predicated region
        $region45: #{foldconv_aspp_forward.1} parent=11 // pred_check
          %p385 = pneg %p236
        $region46: #{foldconv_aspp_forward.1} parent=11 // pred_check_branch
          %387 = sbr.rel (%p385) target = $region48
        $region47: #{foldconv_aspp_forward.1} parent=11 // pred_region
          _
        $region48: #{foldconv_aspp_forward.1} parent=11 // pred_fallthru
          _
        // Predicated region
        $region49: #{foldconv_aspp_forward.1} parent=11 // pred_check
          %p388 = pneg %p257
        $region50: #{foldconv_aspp_forward.1} parent=11 // pred_check_branch
          %390 = sbr.rel (%p388) target = $region52
        $region51: #{foldconv_aspp_forward.1} parent=11 // pred_region
          _
        $region52: #{foldconv_aspp_forward.1} parent=11 // pred_fallthru
          _
        // Predicated region
        $region53: #{foldconv_aspp_forward.1} parent=11 // pred_check
          %p391 = pneg %p278
        $region54: #{foldconv_aspp_forward.1} parent=11 // pred_check_branch
          %393 = sbr.rel (%p391) target = $region56
        $region55: #{foldconv_aspp_forward.1} parent=11 // pred_region
          _
        $region56: #{foldconv_aspp_forward.1} parent=11 // pred_fallthru
          _
        // Predicated region
        $region57: #{foldconv_aspp_forward.1} parent=11 // pred_check
          %p394 = pneg %p299
        $region58: #{foldconv_aspp_forward.1} parent=11 // pred_check_branch
          %396 = sbr.rel (%p394) target = $region60
        $region59: #{foldconv_aspp_forward.1} parent=11 // pred_region
          _
        $region60: #{foldconv_aspp_forward.1} parent=11 // pred_fallthru
          _
        // Predicated region
        $region61: #{foldconv_aspp_forward.1} parent=11 // pred_check
          %p397 = pneg %p320
        $region62: #{foldconv_aspp_forward.1} parent=11 // pred_check_branch
          %399 = sbr.rel (%p397) target = $region64
        $region63: #{foldconv_aspp_forward.1} parent=11 // pred_region
          %s401 = ssub.s32 16, 16
          %402 = vsyncadd [#allocation5], %s401
          %s404 = sshll.u32 %s13, 4
          %s405 = int_to_ptr.vmem [resolvable:$true] %s404
          %407 = dma.vmem_to_smem %s405, 16, [#allocation4], [#allocation5]
        $region64: #{foldconv_aspp_forward.1} parent=11 // pred_fallthru
          _
      $region12: #{foldconv_aspp_forward.1} parent=5 // pred_fallthru
        _
      %p408 = scmp.lt.s32.totalorder %s21, 2
      // Predicated region
      $region65: #{foldconv_aspp_forward.1} parent=5 // pred_check
        %p409 = pneg %p408
      $region66: #{foldconv_aspp_forward.1} parent=5 // pred_check_branch
        %411 = sbr.rel (%p409) target = $region68
      $region67: #{foldconv_aspp_forward.1} parent=5 // pred_region
        // Predicated region
        $region69: #{foldconv_aspp_forward.1} parent=67 // pred_check
          %p412 = pneg %p41
        $region70: #{foldconv_aspp_forward.1} parent=67 // pred_check_branch
          %414 = sbr.rel (%p412) target = $region72
        $region71: #{foldconv_aspp_forward.1} parent=67 // pred_region
          %p415 = scmp.lt.s32.totalorder %s21, 1
          %s416 = scalar_select %p415, %s21, 1
          %s417 = smul.addr %s416, 4
          %s418 = smul.addr %s417, 4
          %s419 = scalar_lea.vmem %s0, %s418
        $region72: #{foldconv_aspp_forward.1} parent=67 // pred_fallthru
          _
      $region68: #{foldconv_aspp_forward.1} parent=5 // pred_fallthru
        _
      %p420 = scmp.le.s32.totalorder 1, %s21
      %p421 = scmp.lt.s32.totalorder %s21, 3
      %p422 = pnand %p420, %p421
      %p423 = pneg %p422
      // Predicated region
      $region73: #{foldconv_aspp_forward.1} parent=5 // pred_check
        _
      $region74: #{foldconv_aspp_forward.1} parent=5 // pred_check_branch
        %425 = sbr.rel (%p422) target = $region76
      $region75: #{foldconv_aspp_forward.1} parent=5 // pred_region
        %s426 = ssub.s32 %s21, 1
        // Predicated region
        $region77: #{foldconv_aspp_forward.1} parent=75 // pred_check
          %p427 = pneg %p320
        $region78: #{foldconv_aspp_forward.1} parent=75 // pred_check_branch
          %429 = sbr.rel (%p427) target = $region80
        $region79: #{foldconv_aspp_forward.1} parent=75 // pred_region
          %430 = dma.done [#allocation5], 16
        $region80: #{foldconv_aspp_forward.1} parent=75 // pred_fallthru
          _
        %431 = sfence
        %p432 = scmp.lt.s32.totalorder %s26, 1
        %s433 = scalar_select %p432, %s26, 1
        %s434 = smul.addr %s433, 4
        %s435 = smul.addr %s434, 4
        %s436 = scalar_lea.vmem %s0, %s435
        %p437 = pneg %p47
        %p438 = pneg %p44
        %p439 = pneg %p68
        %p440 = pneg %p65
        %p441 = pneg %p89
        %p442 = pneg %p86
        %p443 = pneg %p110
        %p444 = pneg %p107
        %p445 = pneg %p131
        %p446 = pneg %p128
        %p447 = pneg %p152
        %p448 = pneg %p149
        %p449 = pneg %p173
        %p450 = pneg %p170
        %p451 = pneg %p194
        %p452 = pneg %p191
        %p453 = pneg %p215
        %p454 = pneg %p212
        %p455 = pneg %p236
        %p456 = pneg %p233
        %p457 = pneg %p257
        %p458 = pneg %p254
        %p459 = pneg %p278
        %p460 = pneg %p275
        %p461 = pneg %p299
        %p462 = pneg %p296
        %p463 = pneg %p320
        %p464 = pneg %p317
        %p465 = pneg %p346
        %p466 = pneg %p343
        %p467 = scmp.lt.s32.totalorder %s26, 1
        %s468 = scalar_select %p467, %s26, 1
        %s469 = smul.addr %s468, 2
        %s470 = smul.addr %s469, 8
        %s471 = scalar_lea.vmem %s14, %s470
        %p472 = scmp.lt.s32.totalorder %s26, 1
        %s473 = scalar_select %p472, %s26, 1
        %s474 = smul.addr %s473, 4
        %s475 = smul.addr %s474, 4
        %s476 = scalar_lea.vmem %s0, %s475
        %p477 = scmp.lt.s32.totalorder %s26, 1
        %s478 = scalar_select %p477, %s26, 1
        %s479 = smul.addr %s478, 2
        %s480 = smul.addr %s479, 8
        %s481 = scalar_lea.vmem %s14, %s480
        %v483 = vld [vmem:[%s476] sm:$0xf]
        %s484 = scalar_lea.vmem %s476, 4
        %v485 = vld [vmem:[%s484] sm:$0xf]
        %s486 = scalar_lea.vmem %s476, 8
        %v487 = vld [vmem:[%s486] sm:$0xf]
        %s488 = scalar_lea.vmem %s476, 12
        %v489 = vld [vmem:[%s488] sm:$0xf]
        %v490 = vld [vmem:[%s2] sm:$0x3]
        %vm491 = vcmask 1048064
        %492 = vrot.lane.b32.xlu0 %v489, 64
        %v493 = vpop.permute.xlu0 %492
        %v494 = vsel %vm491, %v493, %v489
        %495 = vrot.lane.b32.xlu0 %v494, 64
        %v496 = vpop.permute.xlu0 %495
        %v497 = vsel %vm491, %v496, %v489
        %v498 = vld [vmem:[%s1] sm:$0x1]
        %v499 = vlaneseq
        %v500 = vshrl.u32 %v499, 7
        %v501 = vsub.s32 0, %v500
        %v502 = vrot.slane %v498, %v501
        %504 = vrot.lane.b32.xlu0 %v502, 55
        %v505 = vpop.permute.xlu0 %504
        %v507 = vmul.f32 %v497, %v505
        %v508 = vpack.c.bf16 %v507, %v507
        %s509 = scalar_lea.vmem %s2, 2
        %v510 = vld [vmem:[%s509] sm:$0x3]
        %511 = vrot.lane.b32.xlu0 %v487, 64
        %v512 = vpop.permute.xlu0 %511
        %v513 = vsel %vm491, %v512, %v487
        %514 = vrot.lane.b32.xlu0 %v513, 64
        %v515 = vpop.permute.xlu0 %514
        %v516 = vsel %vm491, %v515, %v487
        %v517 = vld [vmem:[%s1 + $0x1] sm:$0x1]
        %v518 = vlaneseq
        %v519 = vshrl.u32 %v518, 7
        %v520 = vsub.s32 0, %v519
        %v521 = vrot.slane %v517, %v520
        %523 = vrot.lane.b32.xlu0 %v521, 56
        %v524 = vpop.permute.xlu0 %523
        %v526 = vmul.f32 %v516, %v524
        %v527 = vpack.c.bf16 %v526, %v526
        %529 = vrot.lane.b32.xlu0 %v527, 72
        %v530 = vpop.permute.xlu0 %529
        %vm531 = vcmask 31744
        %v533 = vsel %vm531, %v510, 0
        %vm535 = vcmask 1041408
        %v537 = vsel %vm535, %v530, 0
        %539 = vmatprep.subr.bf16.mxu0 0
        %540 = vmatpush1.bf16.msra.mxu0 %v537
        %541 = vmatprep.subr.bf16.mxu0 0
        %542 = vmatpush1.bf16.msra.mxu0 0
        %543 = vmatprep.subr.bf16.mxu0 0
        %544 = vmatpush1.bf16.msra.mxu0 0
        %545 = vmatprep.subr.bf16.mxu0 0
        %546 = vmatpush1.bf16.msra.mxu0 0
        %547 = vmatprep.subr.bf16.mxu0 0
        %548 = vmatpush1.bf16.msra.mxu0 0
        %549 = vmatprep.subr.bf16.mxu0 0
        %550 = vmatpush1.bf16.msra.mxu0 0
        %551 = vmatprep.subr.bf16.mxu0 0
        %552 = vmatpush1.bf16.msra.mxu0 0
        %553 = vmatprep.subr.bf16.mxu0 0
        %554 = vmatpush1.bf16.msra.mxu0 0
        %555 = vmatprep.subr.bf16.mxu0 0
        %556 = vmatpush1.bf16.msra.mxu0 0
        %557 = vmatprep.subr.bf16.mxu0 0
        %558 = vmatpush1.bf16.msra.mxu0 0
        %559 = vmatprep.subr.bf16.mxu0 0
        %560 = vmatpush1.bf16.msra.mxu0 0
        %561 = vmatprep.subr.bf16.mxu0 0
        %562 = vmatpush1.bf16.msra.mxu0 0
        %563 = vmatprep.subr.bf16.mxu0 0
        %564 = vmatpush1.bf16.msra.mxu0 0
        %565 = vmatprep.subr.bf16.mxu0 0
        %566 = vmatpush1.bf16.msra.mxu0 0
        %567 = vmatprep.subr.bf16.mxu0 0
        %568 = vmatpush1.bf16.msra.mxu0 0
        %569 = vmatprep.subr.bf16.mxu0 0
        %570 = vmatpush1.bf16.msra.mxu0 0
        %571 = vmatprep.mubr.bf16.mxu0 0
        %572 = vmatmul.mubr.bf16.gmra.mrb[0].mxu0 %v533
        %v573 = vpop.f32.mrb[0].mxu0
        %v574 = vadd.f32 0.0, %v573
        %v575 = vpop.f32.mrb[0].mxu0
        %v576 = vpop.f32.mrb[0].mxu0
        %v577 = vpop.f32.mrb[0].mxu0
        %578 = vdwg.mxu0
        %580 = vrot.lane.b32.xlu0 %v508, 73
        %v581 = vpop.permute.xlu0 %580
        %v583 = vsel %vm531, %v490, 0
        %v586 = vsel %vm535, %v581, 0
        %588 = vmatprep.subr.bf16.mxu0 0
        %589 = vmatpush1.bf16.msra.mxu0 %v586
        %590 = vmatprep.subr.bf16.mxu0 0
        %591 = vmatpush1.bf16.msra.mxu0 0
        %592 = vmatprep.subr.bf16.mxu0 0
        %593 = vmatpush1.bf16.msra.mxu0 0
        %594 = vmatprep.subr.bf16.mxu0 0
        %595 = vmatpush1.bf16.msra.mxu0 0
        %596 = vmatprep.subr.bf16.mxu0 0
        %597 = vmatpush1.bf16.msra.mxu0 0
        %598 = vmatprep.subr.bf16.mxu0 0
        %599 = vmatpush1.bf16.msra.mxu0 0
        %600 = vmatprep.subr.bf16.mxu0 0
        %601 = vmatpush1.bf16.msra.mxu0 0
        %602 = vmatprep.subr.bf16.mxu0 0
        %603 = vmatpush1.bf16.msra.mxu0 0
        %604 = vmatprep.subr.bf16.mxu0 0
        %605 = vmatpush1.bf16.msra.mxu0 0
        %606 = vmatprep.subr.bf16.mxu0 0
        %607 = vmatpush1.bf16.msra.mxu0 0
        %608 = vmatprep.subr.bf16.mxu0 0
        %609 = vmatpush1.bf16.msra.mxu0 0
        %610 = vmatprep.subr.bf16.mxu0 0
        %611 = vmatpush1.bf16.msra.mxu0 0
        %612 = vmatprep.subr.bf16.mxu0 0
        %613 = vmatpush1.bf16.msra.mxu0 0
        %614 = vmatprep.subr.bf16.mxu0 0
        %615 = vmatpush1.bf16.msra.mxu0 0
        %616 = vmatprep.subr.bf16.mxu0 0
        %617 = vmatpush1.bf16.msra.mxu0 0
        %618 = vmatprep.subr.bf16.mxu0 0
        %619 = vmatpush1.bf16.msra.mxu0 0
        %620 = vmatprep.mubr.bf16.mxu0 0
        %621 = vmatmul.mubr.bf16.gmra.mrb[0].mxu0 %v583
        %v622 = vpop.f32.mrb[0].mxu0
        %v623 = vadd.f32 %v574, %v622
        %v624 = vpop.f32.mrb[0].mxu0
        %v625 = vpop.f32.mrb[0].mxu0
        %v626 = vpop.f32.mrb[0].mxu0
        %627 = vdwg.mxu0
        %s628 = scalar_lea.vmem %s2, 4
        %v629 = vld [vmem:[%s628] sm:$0x3]
        %v630 = vmul.f32 %v497, %v524
        %v631 = vpack.c.bf16 %v630, %v630
        %633 = vrot.lane.b32.xlu0 %v631, 72
        %v634 = vpop.permute.xlu0 %633
        %v636 = vsel %vm531, %v629, 0
        %v639 = vsel %vm535, %v634, 0
        %641 = vmatprep.subr.bf16.mxu0 0
        %642 = vmatpush1.bf16.msra.mxu0 %v639
        %643 = vmatprep.subr.bf16.mxu0 0
        %644 = vmatpush1.bf16.msra.mxu0 0
        %645 = vmatprep.subr.bf16.mxu0 0
        %646 = vmatpush1.bf16.msra.mxu0 0
        %647 = vmatprep.subr.bf16.mxu0 0
        %648 = vmatpush1.bf16.msra.mxu0 0
        %649 = vmatprep.subr.bf16.mxu0 0
        %650 = vmatpush1.bf16.msra.mxu0 0
        %651 = vmatprep.subr.bf16.mxu0 0
        %652 = vmatpush1.bf16.msra.mxu0 0
        %653 = vmatprep.subr.bf16.mxu0 0
        %654 = vmatpush1.bf16.msra.mxu0 0
        %655 = vmatprep.subr.bf16.mxu0 0
        %656 = vmatpush1.bf16.msra.mxu0 0
        %657 = vmatprep.subr.bf16.mxu0 0
        %658 = vmatpush1.bf16.msra.mxu0 0
        %659 = vmatprep.subr.bf16.mxu0 0
        %660 = vmatpush1.bf16.msra.mxu0 0
        %661 = vmatprep.subr.bf16.mxu0 0
        %662 = vmatpush1.bf16.msra.mxu0 0
        %663 = vmatprep.subr.bf16.mxu0 0
        %664 = vmatpush1.bf16.msra.mxu0 0
        %665 = vmatprep.subr.bf16.mxu0 0
        %666 = vmatpush1.bf16.msra.mxu0 0
        %667 = vmatprep.subr.bf16.mxu0 0
        %668 = vmatpush1.bf16.msra.mxu0 0
        %669 = vmatprep.subr.bf16.mxu0 0
        %670 = vmatpush1.bf16.msra.mxu0 0
        %671 = vmatprep.subr.bf16.mxu0 0
        %672 = vmatpush1.bf16.msra.mxu0 0
        %673 = vmatprep.mubr.bf16.mxu0 0
        %674 = vmatmul.mubr.bf16.gmra.mrb[0].mxu0 %v636
        %v675 = vpop.f32.mrb[0].mxu0
        %v676 = vadd.f32 0.0, %v675
        %v677 = vpop.f32.mrb[0].mxu0
        %v678 = vpop.f32.mrb[0].mxu0
        %v679 = vpop.f32.mrb[0].mxu0
        %680 = vdwg.mxu0
        %v681 = vadd.f32 %v623, %v676
        %s682 = scalar_lea.vmem %s2, 6
        %v683 = vld [vmem:[%s682] sm:$0x3]
        %684 = vrot.lane.b32.xlu0 %v485, 64
        %v685 = vpop.permute.xlu0 %684
        %v686 = vsel %vm491, %v685, %v485
        %687 = vrot.lane.b32.xlu0 %v686, 64
        %v688 = vpop.permute.xlu0 %687
        %v689 = vsel %vm491, %v688, %v485
        %v690 = vld [vmem:[%s1 + $0x2] sm:$0x1]
        %v691 = vlaneseq
        %v692 = vshrl.u32 %v691, 7
        %v693 = vsub.s32 0, %v692
        %v694 = vrot.slane %v690, %v693
        %696 = vrot.lane.b32.xlu0 %v694, 63
        %v697 = vpop.permute.xlu0 %696
        %v699 = vmul.f32 %v689, %v697
        %v700 = vpack.c.bf16 %v699, %v699
        %702 = vrot.lane.b32.xlu0 %v700, 65
        %v703 = vpop.permute.xlu0 %702
        %v705 = vsel %vm531, %v683, 0
        %v708 = vsel %vm535, %v703, 0
        %710 = vmatprep.subr.bf16.mxu0 0
        %711 = vmatpush1.bf16.msra.mxu0 %v708
        %712 = vmatprep.subr.bf16.mxu0 0
        %713 = vmatpush1.bf16.msra.mxu0 0
        %714 = vmatprep.subr.bf16.mxu0 0
        %715 = vmatpush1.bf16.msra.mxu0 0
        %716 = vmatprep.subr.bf16.mxu0 0
        %717 = vmatpush1.bf16.msra.mxu0 0
        %718 = vmatprep.subr.bf16.mxu0 0
        %719 = vmatpush1.bf16.msra.mxu0 0
        %720 = vmatprep.subr.bf16.mxu0 0
        %721 = vmatpush1.bf16.msra.mxu0 0
        %722 = vmatprep.subr.bf16.mxu0 0
        %723 = vmatpush1.bf16.msra.mxu0 0
        %724 = vmatprep.subr.bf16.mxu0 0
        %725 = vmatpush1.bf16.msra.mxu0 0
        %726 = vmatprep.subr.bf16.mxu0 0
        %727 = vmatpush1.bf16.msra.mxu0 0
        %728 = vmatprep.subr.bf16.mxu0 0
        %729 = vmatpush1.bf16.msra.mxu0 0
        %730 = vmatprep.subr.bf16.mxu0 0
        %731 = vmatpush1.bf16.msra.mxu0 0
        %732 = vmatprep.subr.bf16.mxu0 0
        %733 = vmatpush1.bf16.msra.mxu0 0
        %734 = vmatprep.subr.bf16.mxu0 0
        %735 = vmatpush1.bf16.msra.mxu0 0
        %736 = vmatprep.subr.bf16.mxu0 0
        %737 = vmatpush1.bf16.msra.mxu0 0
        %738 = vmatprep.subr.bf16.mxu0 0
        %739 = vmatpush1.bf16.msra.mxu0 0
        %740 = vmatprep.subr.bf16.mxu0 0
        %741 = vmatpush1.bf16.msra.mxu0 0
        %742 = vmatprep.mubr.bf16.mxu0 0
        %743 = vmatmul.mubr.bf16.gmra.mrb[0].mxu0 %v705
        %v744 = vpop.f32.mrb[0].mxu0
        %v745 = vadd.f32 0.0, %v744
        %v746 = vpop.f32.mrb[0].mxu0
        %v747 = vpop.f32.mrb[0].mxu0
        %v748 = vpop.f32.mrb[0].mxu0
        %749 = vdwg.mxu0
        %v750 = vadd.f32 %v681, %v745
        %s751 = scalar_lea.vmem %s2, 8
        %v752 = vld [vmem:[%s751] sm:$0x3]
        %v753 = vpack.c.bf16 %v483, %v483
        %v755 = vsel %vm531, %v752, 0
        %v758 = vsel %vm535, %v753, 0
        %760 = vmatprep.subr.bf16.mxu0 0
        %761 = vmatpush1.bf16.msra.mxu0 %v758
        %762 = vmatprep.subr.bf16.mxu0 0
        %763 = vmatpush1.bf16.msra.mxu0 0
        %764 = vmatprep.subr.bf16.mxu0 0
        %765 = vmatpush1.bf16.msra.mxu0 0
        %766 = vmatprep.subr.bf16.mxu0 0
        %767 = vmatpush1.bf16.msra.mxu0 0
        %768 = vmatprep.subr.bf16.mxu0 0
        %769 = vmatpush1.bf16.msra.mxu0 0
        %770 = vmatprep.subr.bf16.mxu0 0
        %771 = vmatpush1.bf16.msra.mxu0 0
        %772 = vmatprep.subr.bf16.mxu0 0
        %773 = vmatpush1.bf16.msra.mxu0 0
        %774 = vmatprep.subr.bf16.mxu0 0
        %775 = vmatpush1.bf16.msra.mxu0 0
        %776 = vmatprep.subr.bf16.mxu0 0
        %777 = vmatpush1.bf16.msra.mxu0 0
        %778 = vmatprep.subr.bf16.mxu0 0
        %779 = vmatpush1.bf16.msra.mxu0 0
        %780 = vmatprep.subr.bf16.mxu0 0
        %781 = vmatpush1.bf16.msra.mxu0 0
        %782 = vmatprep.subr.bf16.mxu0 0
        %783 = vmatpush1.bf16.msra.mxu0 0
        %784 = vmatprep.subr.bf16.mxu0 0
        %785 = vmatpush1.bf16.msra.mxu0 0
        %786 = vmatprep.subr.bf16.mxu0 0
        %787 = vmatpush1.bf16.msra.mxu0 0
        %788 = vmatprep.subr.bf16.mxu0 0
        %789 = vmatpush1.bf16.msra.mxu0 0
        %790 = vmatprep.subr.bf16.mxu0 0
        %791 = vmatpush1.bf16.msra.mxu0 0
        %792 = vmatprep.mubr.bf16.mxu0 0
        %793 = vmatmul.mubr.bf16.gmra.mrb[0].mxu0 %v755
        %v794 = vpop.f32.mrb[0].mxu0
        %v795 = vadd.f32 0.0, %v794
        %v796 = vpop.f32.mrb[0].mxu0
        %v797 = vpop.f32.mrb[0].mxu0
        %v798 = vpop.f32.mrb[0].mxu0
        %799 = vdwg.mxu0
        %v800 = vadd.f32 %v750, %v795
        %s801 = scalar_lea.vmem %s2, 10
        %v802 = vld [vmem:[%s801] sm:$0x3]
        %v803 = vpack.c.bf16 %v485, %v485
        %v805 = vsel %vm531, %v802, 0
        %v808 = vsel %vm535, %v803, 0
        %810 = vmatprep.subr.bf16.mxu0 0
        %811 = vmatpush1.bf16.msra.mxu0 %v808
        %812 = vmatprep.subr.bf16.mxu0 0
        %813 = vmatpush1.bf16.msra.mxu0 0
        %814 = vmatprep.subr.bf16.mxu0 0
        %815 = vmatpush1.bf16.msra.mxu0 0
        %816 = vmatprep.subr.bf16.mxu0 0
        %817 = vmatpush1.bf16.msra.mxu0 0
        %818 = vmatprep.subr.bf16.mxu0 0
        %819 = vmatpush1.bf16.msra.mxu0 0
        %820 = vmatprep.subr.bf16.mxu0 0
        %821 = vmatpush1.bf16.msra.mxu0 0
        %822 = vmatprep.subr.bf16.mxu0 0
        %823 = vmatpush1.bf16.msra.mxu0 0
        %824 = vmatprep.subr.bf16.mxu0 0
        %825 = vmatpush1.bf16.msra.mxu0 0
        %826 = vmatprep.subr.bf16.mxu0 0
        %827 = vmatpush1.bf16.msra.mxu0 0
        %828 = vmatprep.subr.bf16.mxu0 0
        %829 = vmatpush1.bf16.msra.mxu0 0
        %830 = vmatprep.subr.bf16.mxu0 0
        %831 = vmatpush1.bf16.msra.mxu0 0
        %832 = vmatprep.subr.bf16.mxu0 0
        %833 = vmatpush1.bf16.msra.mxu0 0
        %834 = vmatprep.subr.bf16.mxu0 0
        %835 = vmatpush1.bf16.msra.mxu0 0
        %836 = vmatprep.subr.bf16.mxu0 0
        %837 = vmatpush1.bf16.msra.mxu0 0
        %838 = vmatprep.subr.bf16.mxu0 0
        %839 = vmatpush1.bf16.msra.mxu0 0
        %840 = vmatprep.subr.bf16.mxu0 0
        %841 = vmatpush1.bf16.msra.mxu0 0
        %842 = vmatprep.mubr.bf16.mxu0 0
        %843 = vmatmul.mubr.bf16.gmra.mrb[0].mxu0 %v805
        %v844 = vpop.f32.mrb[0].mxu0
        %v845 = vadd.f32 0.0, %v844
        %v846 = vpop.f32.mrb[0].mxu0
        %v847 = vpop.f32.mrb[0].mxu0
        %v848 = vpop.f32.mrb[0].mxu0
        %849 = vdwg.mxu0
        %v850 = vadd.f32 %v800, %v845
        %s851 = scalar_lea.vmem %s2, 12
        %v852 = vld [vmem:[%s851] sm:$0x3]
        %v853 = vmul.f32 %v497, %v697
        %v854 = vpack.c.bf16 %v853, %v853
        %856 = vrot.lane.b32.xlu0 %v854, 65
        %v857 = vpop.permute.xlu0 %856
        %v859 = vsel %vm531, %v852, 0
        %v862 = vsel %vm535, %v857, 0
        %864 = vmatprep.subr.bf16.mxu0 0
        %865 = vmatpush1.bf16.msra.mxu0 %v862
        %866 = vmatprep.subr.bf16.mxu0 0
        %867 = vmatpush1.bf16.msra.mxu0 0
        %868 = vmatprep.subr.bf16.mxu0 0
        %869 = vmatpush1.bf16.msra.mxu0 0
        %870 = vmatprep.subr.bf16.mxu0 0
        %871 = vmatpush1.bf16.msra.mxu0 0
        %872 = vmatprep.subr.bf16.mxu0 0
        %873 = vmatpush1.bf16.msra.mxu0 0
        %874 = vmatprep.subr.bf16.mxu0 0
        %875 = vmatpush1.bf16.msra.mxu0 0
        %876 = vmatprep.subr.bf16.mxu0 0
        %877 = vmatpush1.bf16.msra.mxu0 0
        %878 = vmatprep.subr.bf16.mxu0 0
        %879 = vmatpush1.bf16.msra.mxu0 0
        %880 = vmatprep.subr.bf16.mxu0 0
        %881 = vmatpush1.bf16.msra.mxu0 0
        %882 = vmatprep.subr.bf16.mxu0 0
        %883 = vmatpush1.bf16.msra.mxu0 0
        %884 = vmatprep.subr.bf16.mxu0 0
        %885 = vmatpush1.bf16.msra.mxu0 0
        %886 = vmatprep.subr.bf16.mxu0 0
        %887 = vmatpush1.bf16.msra.mxu0 0
        %888 = vmatprep.subr.bf16.mxu0 0
        %889 = vmatpush1.bf16.msra.mxu0 0
        %890 = vmatprep.subr.bf16.mxu0 0
        %891 = vmatpush1.bf16.msra.mxu0 0
        %892 = vmatprep.subr.bf16.mxu0 0
        %893 = vmatpush1.bf16.msra.mxu0 0
        %894 = vmatprep.subr.bf16.mxu0 0
        %895 = vmatpush1.bf16.msra.mxu0 0
        %896 = vmatprep.mubr.bf16.mxu0 0
        %897 = vmatmul.mubr.bf16.gmra.mrb[0].mxu0 %v859
        %v898 = vpop.f32.mrb[0].mxu0
        %v899 = vadd.f32 0.0, %v898
        %v900 = vpop.f32.mrb[0].mxu0
        %v901 = vpop.f32.mrb[0].mxu0
        %v902 = vpop.f32.mrb[0].mxu0
        %903 = vdwg.mxu0
        %v904 = vadd.f32 %v850, %v899
        %s905 = scalar_lea.vmem %s2, 14
        %v906 = vld [vmem:[%s905] sm:$0x3]
        %v907 = vpack.c.bf16 %v487, %v487
        %v909 = vsel %vm531, %v906, 0
        %v912 = vsel %vm535, %v907, 0
        %914 = vmatprep.subr.bf16.mxu0 0
        %915 = vmatpush1.bf16.msra.mxu0 %v912
        %916 = vmatprep.subr.bf16.mxu0 0
        %917 = vmatpush1.bf16.msra.mxu0 0
        %918 = vmatprep.subr.bf16.mxu0 0
        %919 = vmatpush1.bf16.msra.mxu0 0
        %920 = vmatprep.subr.bf16.mxu0 0
        %921 = vmatpush1.bf16.msra.mxu0 0
        %922 = vmatprep.subr.bf16.mxu0 0
        %923 = vmatpush1.bf16.msra.mxu0 0
        %924 = vmatprep.subr.bf16.mxu0 0
        %925 = vmatpush1.bf16.msra.mxu0 0
        %926 = vmatprep.subr.bf16.mxu0 0
        %927 = vmatpush1.bf16.msra.mxu0 0
        %928 = vmatprep.subr.bf16.mxu0 0
        %929 = vmatpush1.bf16.msra.mxu0 0
        %930 = vmatprep.subr.bf16.mxu0 0
        %931 = vmatpush1.bf16.msra.mxu0 0
        %932 = vmatprep.subr.bf16.mxu0 0
        %933 = vmatpush1.bf16.msra.mxu0 0
        %934 = vmatprep.subr.bf16.mxu0 0
        %935 = vmatpush1.bf16.msra.mxu0 0
        %936 = vmatprep.subr.bf16.mxu0 0
        %937 = vmatpush1.bf16.msra.mxu0 0
        %938 = vmatprep.subr.bf16.mxu0 0
        %939 = vmatpush1.bf16.msra.mxu0 0
        %940 = vmatprep.subr.bf16.mxu0 0
        %941 = vmatpush1.bf16.msra.mxu0 0
        %942 = vmatprep.subr.bf16.mxu0 0
        %943 = vmatpush1.bf16.msra.mxu0 0
        %944 = vmatprep.subr.bf16.mxu0 0
        %945 = vmatpush1.bf16.msra.mxu0 0
        %946 = vmatprep.mubr.bf16.mxu0 0
        %947 = vmatmul.mubr.bf16.gmra.mrb[0].mxu0 %v909
        %v948 = vpop.f32.mrb[0].mxu0
        %v949 = vadd.f32 0.0, %v948
        %v950 = vpop.f32.mrb[0].mxu0
        %v951 = vpop.f32.mrb[0].mxu0
        %v952 = vpop.f32.mrb[0].mxu0
        %953 = vdwg.mxu0
        %v954 = vadd.f32 %v904, %v949
        %s955 = scalar_lea.vmem %s2, 16
        %v956 = vld [vmem:[%s955] sm:$0x3]
        %v957 = vpack.c.bf16 %v489, %v489
        %v959 = vsel %vm531, %v956, 0
        %v962 = vsel %vm535, %v957, 0
        %964 = vmatprep.subr.bf16.mxu0 0
        %965 = vmatpush1.bf16.msra.mxu0 %v962
        %966 = vmatprep.subr.bf16.mxu0 0
        %967 = vmatpush1.bf16.msra.mxu0 0
        %968 = vmatprep.subr.bf16.mxu0 0
        %969 = vmatpush1.bf16.msra.mxu0 0
        %970 = vmatprep.subr.bf16.mxu0 0
        %971 = vmatpush1.bf16.msra.mxu0 0
        %972 = vmatprep.subr.bf16.mxu0 0
        %973 = vmatpush1.bf16.msra.mxu0 0
        %974 = vmatprep.subr.bf16.mxu0 0
        %975 = vmatpush1.bf16.msra.mxu0 0
        %976 = vmatprep.subr.bf16.mxu0 0
        %977 = vmatpush1.bf16.msra.mxu0 0
        %978 = vmatprep.subr.bf16.mxu0 0
        %979 = vmatpush1.bf16.msra.mxu0 0
        %980 = vmatprep.subr.bf16.mxu0 0
        %981 = vmatpush1.bf16.msra.mxu0 0
        %982 = vmatprep.subr.bf16.mxu0 0
        %983 = vmatpush1.bf16.msra.mxu0 0
        %984 = vmatprep.subr.bf16.mxu0 0
        %985 = vmatpush1.bf16.msra.mxu0 0
        %986 = vmatprep.subr.bf16.mxu0 0
        %987 = vmatpush1.bf16.msra.mxu0 0
        %988 = vmatprep.subr.bf16.mxu0 0
        %989 = vmatpush1.bf16.msra.mxu0 0
        %990 = vmatprep.subr.bf16.mxu0 0
        %991 = vmatpush1.bf16.msra.mxu0 0
        %992 = vmatprep.subr.bf16.mxu0 0
        %993 = vmatpush1.bf16.msra.mxu0 0
        %994 = vmatprep.subr.bf16.mxu0 0
        %995 = vmatpush1.bf16.msra.mxu0 0
        %996 = vmatprep.mubr.bf16.mxu0 0
        %997 = vmatmul.mubr.bf16.gmra.mrb[0].mxu0 %v959
        %v998 = vpop.f32.mrb[0].mxu0
        %v999 = vadd.f32 0.0, %v998
        %v1000 = vpop.f32.mrb[0].mxu0
        %v1001 = vpop.f32.mrb[0].mxu0
        %v1002 = vpop.f32.mrb[0].mxu0
        %1003 = vdwg.mxu0
        %v1004 = vadd.f32 %v954, %v999
        %v1005 = vld [vmem:[%s3] sm:$0xf]
        %1007 = vset.pattern.permute.xlu0 0
        %1008 = vperm.xlu0 %1007, %v1005
        %v1009 = vpop.permute.xlu0 %1008
        %v1011 = vadd.f32 %v1004, %v1009
        %s1012 = sld [smem:[#allocation4]]
        %vm1013 = vcmp.ge.f32.partialorder %v1011, 0.0
        %v1014 = vstv %s1012
        %v1015 = vmul.f32 %v1014, %v1011
        %v1016 = vsel %vm1013, %v1011, %v1015
        %vm1017 = vcmask 519168
        %1018 = vst.msk [vmem:[#allocation2] sm:$0xf] %vm1017, %v1016
        %v1019 = vld [vmem:[%s2] sm:$0x3]
        %v1020 = vld [vmem:[%s1 + $0x1] sm:$0x1]
        %v1021 = vlaneseq
        %v1022 = vshrl.u32 %v1021, 7
        %v1023 = vsub.s32 0, %v1022
        %v1024 = vrot.slane %v1020, %v1023
        %1026 = vrot.lane.b32.xlu0 %v1024, 56
        %v1027 = vpop.permute.xlu0 %1026
        %v1029 = vmul.f32 %v516, %v1027
        %v1030 = vpack.c.bf16 %v1029, %v1029
        %v1031 = vld [vmem:[%s509] sm:$0x3]
        %v1032 = vmul.f32 %v497, %v1027
        %v1033 = vpack.c.bf16 %v1032, %v1032
        %1035 = vrot.lane.b32.xlu0 %v1033, 72
        %v1036 = vpop.permute.xlu0 %1035
        %v1038 = vsel %vm531, %v1031, 0
        %v1041 = vsel %vm535, %v1036, 0
        %1043 = vmatprep.subr.bf16.mxu0 0
        %1044 = vmatpush1.bf16.msra.mxu0 %v1041
        %1045 = vmatprep.subr.bf16.mxu0 0
        %1046 = vmatpush1.bf16.msra.mxu0 0
        %1047 = vmatprep.subr.bf16.mxu0 0
        %1048 = vmatpush1.bf16.msra.mxu0 0
        %1049 = vmatprep.subr.bf16.mxu0 0
        %1050 = vmatpush1.bf16.msra.mxu0 0
        %1051 = vmatprep.subr.bf16.mxu0 0
        %1052 = vmatpush1.bf16.msra.mxu0 0
        %1053 = vmatprep.subr.bf16.mxu0 0
        %1054 = vmatpush1.bf16.msra.mxu0 0
        %1055 = vmatprep.subr.bf16.mxu0 0
        %1056 = vmatpush1.bf16.msra.mxu0 0
        %1057 = vmatprep.subr.bf16.mxu0 0
        %1058 = vmatpush1.bf16.msra.mxu0 0
        %1059 = vmatprep.subr.bf16.mxu0 0
        %1060 = vmatpush1.bf16.msra.mxu0 0
        %1061 = vmatprep.subr.bf16.mxu0 0
        %1062 = vmatpush1.bf16.msra.mxu0 0
        %1063 = vmatprep.subr.bf16.mxu0 0
        %1064 = vmatpush1.bf16.msra.mxu0 0
        %1065 = vmatprep.subr.bf16.mxu0 0
        %1066 = vmatpush1.bf16.msra.mxu0 0
        %1067 = vmatprep.subr.bf16.mxu0 0
        %1068 = vmatpush1.bf16.msra.mxu0 0
        %1069 = vmatprep.subr.bf16.mxu0 0
        %1070 = vmatpush1.bf16.msra.mxu0 0
        %1071 = vmatprep.subr.bf16.mxu0 0
        %1072 = vmatpush1.bf16.msra.mxu0 0
        %1073 = vmatprep.subr.bf16.mxu0 0
        %1074 = vmatpush1.bf16.msra.mxu0 0
        %1075 = vmatprep.mubr.bf16.mxu0 0
        %1076 = vmatmul.mubr.bf16.gmra.mrb[0].mxu0 %v1038
        %v1077 = vpop.f32.mrb[0].mxu0
        %v1078 = vadd.f32 0.0, %v1077
        %v1079 = vpop.f32.mrb[0].mxu0
        %v1080 = vpop.f32.mrb[0].mxu0
        %v1081 = vpop.f32.mrb[0].mxu0
        %1082 = vdwg.mxu0
        %1084 = vrot.lane.b32.xlu0 %v1030, 72
        %v1085 = vpop.permute.xlu0 %1084
        %v1087 = vsel %vm531, %v1019, 0
        %v1090 = vsel %vm535, %v1085, 0
        %1092 = vmatprep.subr.bf16.mxu0 0
        %1093 = vmatpush1.bf16.msra.mxu0 %v1090
        %1094 = vmatprep.subr.bf16.mxu0 0
        %1095 = vmatpush1.bf16.msra.mxu0 0
        %1096 = vmatprep.subr.bf16.mxu0 0
        %1097 = vmatpush1.bf16.msra.mxu0 0
        %1098 = vmatprep.subr.bf16.mxu0 0
        %1099 = vmatpush1.bf16.msra.mxu0 0
        %1100 = vmatprep.subr.bf16.mxu0 0
        %1101 = vmatpush1.bf16.msra.mxu0 0
        %1102 = vmatprep.subr.bf16.mxu0 0
        %1103 = vmatpush1.bf16.msra.mxu0 0
        %1104 = vmatprep.subr.bf16.mxu0 0
        %1105 = vmatpush1.bf16.msra.mxu0 0
        %1106 = vmatprep.subr.bf16.mxu0 0
        %1107 = vmatpush1.bf16.msra.mxu0 0
        %1108 = vmatprep.subr.bf16.mxu0 0
        %1109 = vmatpush1.bf16.msra.mxu0 0
        %1110 = vmatprep.subr.bf16.mxu0 0
        %1111 = vmatpush1.bf16.msra.mxu0 0
        %1112 = vmatprep.subr.bf16.mxu0 0
        %1113 = vmatpush1.bf16.msra.mxu0 0
        %1114 = vmatprep.subr.bf16.mxu0 0
        %1115 = vmatpush1.bf16.msra.mxu0 0
        %1116 = vmatprep.subr.bf16.mxu0 0
        %1117 = vmatpush1.bf16.msra.mxu0 0
        %1118 = vmatprep.subr.bf16.mxu0 0
        %1119 = vmatpush1.bf16.msra.mxu0 0
        %1120 = vmatprep.subr.bf16.mxu0 0
        %1121 = vmatpush1.bf16.msra.mxu0 0
        %1122 = vmatprep.subr.bf16.mxu0 0
        %1123 = vmatpush1.bf16.msra.mxu0 0
        %1124 = vmatprep.mubr.bf16.mxu0 0
        %1125 = vmatmul.mubr.bf16.gmra.mrb[0].mxu0 %v1087
        %v1126 = vpop.f32.mrb[0].mxu0
        %v1127 = vadd.f32 %v1078, %v1126
        %v1128 = vpop.f32.mrb[0].mxu0
        %v1129 = vpop.f32.mrb[0].mxu0
        %v1130 = vpop.f32.mrb[0].mxu0
        %1131 = vdwg.mxu0
        %v1132 = vld [vmem:[%s628] sm:$0x3]
        %v1133 = vld [vmem:[%s1 + $0x3] sm:$0x1]
        %v1134 = vlaneseq
        %v1135 = vshrl.u32 %v1134, 7
        %v1136 = vsub.s32 0, %v1135
        %v1137 = vrot.slane %v1133, %v1136
        %1139 = vrot.lane.b32.xlu0 %v1137, 57
        %v1140 = vpop.permute.xlu0 %1139
        %v1142 = vmul.f32 %v516, %v1140
        %v1143 = vpack.c.bf16 %v1142, %v1142
        %1145 = vrot.lane.b32.xlu0 %v1143, 71
        %v1146 = vpop.permute.xlu0 %1145
        %v1148 = vsel %vm531, %v1132, 0
        %v1151 = vsel %vm535, %v1146, 0
        %1153 = vmatprep.subr.bf16.mxu0 0
        %1154 = vmatpush1.bf16.msra.mxu0 %v1151
        %1155 = vmatprep.subr.bf16.mxu0 0
        %1156 = vmatpush1.bf16.msra.mxu0 0
        %1157 = vmatprep.subr.bf16.mxu0 0
        %1158 = vmatpush1.bf16.msra.mxu0 0
        %1159 = vmatprep.subr.bf16.mxu0 0
        %1160 = vmatpush1.bf16.msra.mxu0 0
        %1161 = vmatprep.subr.bf16.mxu0 0
        %1162 = vmatpush1.bf16.msra.mxu0 0
        %1163 = vmatprep.subr.bf16.mxu0 0
        %1164 = vmatpush1.bf16.msra.mxu0 0
        %1165 = vmatprep.subr.bf16.mxu0 0
        %1166 = vmatpush1.bf16.msra.mxu0 0
        %1167 = vmatprep.subr.bf16.mxu0 0
        %1168 = vmatpush1.bf16.msra.mxu0 0
        %1169 = vmatprep.subr.bf16.mxu0 0
        %1170 = vmatpush1.bf16.msra.mxu0 0
        %1171 = vmatprep.subr.bf16.mxu0 0
        %1172 = vmatpush1.bf16.msra.mxu0 0
        %1173 = vmatprep.subr.bf16.mxu0 0
        %1174 = vmatpush1.bf16.msra.mxu0 0
        %1175 = vmatprep.subr.bf16.mxu0 0
        %1176 = vmatpush1.bf16.msra.mxu0 0
        %1177 = vmatprep.subr.bf16.mxu0 0
        %1178 = vmatpush1.bf16.msra.mxu0 0
        %1179 = vmatprep.subr.bf16.mxu0 0
        %1180 = vmatpush1.bf16.msra.mxu0 0
        %1181 = vmatprep.subr.bf16.mxu0 0
        %1182 = vmatpush1.bf16.msra.mxu0 0
        %1183 = vmatprep.subr.bf16.mxu0 0
        %1184 = vmatpush1.bf16.msra.mxu0 0
        %1185 = vmatprep.mubr.bf16.mxu0 0
        %1186 = vmatmul.mubr.bf16.gmra.mrb[0].mxu0 %v1148
        %v1187 = vpop.f32.mrb[0].mxu0
        %v1188 = vadd.f32 0.0, %v1187
        %v1189 = vpop.f32.mrb[0].mxu0
        %v1190 = vpop.f32.mrb[0].mxu0
        %v1191 = vpop.f32.mrb[0].mxu0
        %1192 = vdwg.mxu0
        %v1193 = vadd.f32 %v1127, %v1188
        %v1194 = vld [vmem:[%s682] sm:$0x3]
        %v1196 = vsel %vm531, %v1194, 0
        %1198 = vmatprep.subr.bf16.mxu0 0
        %1199 = vmatpush1.bf16.msra.mxu0 %v758
        %1200 = vmatprep.subr.bf16.mxu0 0
        %1201 = vmatpush1.bf16.msra.mxu0 0
        %1202 = vmatprep.subr.bf16.mxu0 0
        %1203 = vmatpush1.bf16.msra.mxu0 0
        %1204 = vmatprep.subr.bf16.mxu0 0
        %1205 = vmatpush1.bf16.msra.mxu0 0
        %1206 = vmatprep.subr.bf16.mxu0 0
        %1207 = vmatpush1.bf16.msra.mxu0 0
        %1208 = vmatprep.subr.bf16.mxu0 0
        %1209 = vmatpush1.bf16.msra.mxu0 0
        %1210 = vmatprep.subr.bf16.mxu0 0
        %1211 = vmatpush1.bf16.msra.mxu0 0
        %1212 = vmatprep.subr.bf16.mxu0 0
        %1213 = vmatpush1.bf16.msra.mxu0 0
        %1214 = vmatprep.subr.bf16.mxu0 0
        %1215 = vmatpush1.bf16.msra.mxu0 0
        %1216 = vmatprep.subr.bf16.mxu0 0
        %1217 = vmatpush1.bf16.msra.mxu0 0
        %1218 = vmatprep.subr.bf16.mxu0 0
        %1219 = vmatpush1.bf16.msra.mxu0 0
        %1220 = vmatprep.subr.bf16.mxu0 0
        %1221 = vmatpush1.bf16.msra.mxu0 0
        %1222 = vmatprep.subr.bf16.mxu0 0
        %1223 = vmatpush1.bf16.msra.mxu0 0
        %1224 = vmatprep.subr.bf16.mxu0 0
        %1225 = vmatpush1.bf16.msra.mxu0 0
        %1226 = vmatprep.subr.bf16.mxu0 0
        %1227 = vmatpush1.bf16.msra.mxu0 0
        %1228 = vmatprep.subr.bf16.mxu0 0
        %1229 = vmatpush1.bf16.msra.mxu0 0
        %1230 = vmatprep.mubr.bf16.mxu0 0
        %1231 = vmatmul.mubr.bf16.gmra.mrb[0].mxu0 %v1196
        %v1232 = vpop.f32.mrb[0].mxu0
        %v1233 = vadd.f32 0.0, %v1232
        %v1234 = vpop.f32.mrb[0].mxu0
        %v1235 = vpop.f32.mrb[0].mxu0
        %v1236 = vpop.f32.mrb[0].mxu0
        %1237 = vdwg.mxu0
        %v1238 = vadd.f32 %v1193, %v1233
        %v1239 = vld [vmem:[%s751] sm:$0x3]
        %v1241 = vsel %vm531, %v1239, 0
        %1243 = vmatprep.subr.bf16.mxu0 0
        %1244 = vmatpush1.bf16.msra.mxu0 %v808
        %1245 = vmatprep.subr.bf16.mxu0 0
        %1246 = vmatpush1.bf16.msra.mxu0 0
        %1247 = vmatprep.subr.bf16.mxu0 0
        %1248 = vmatpush1.bf16.msra.mxu0 0
        %1249 = vmatprep.subr.bf16.mxu0 0
        %1250 = vmatpush1.bf16.msra.mxu0 0
        %1251 = vmatprep.subr.bf16.mxu0 0
        %1252 = vmatpush1.bf16.msra.mxu0 0
        %1253 = vmatprep.subr.bf16.mxu0 0
        %1254 = vmatpush1.bf16.msra.mxu0 0
        %1255 = vmatprep.subr.bf16.mxu0 0
        %1256 = vmatpush1.bf16.msra.mxu0 0
        %1257 = vmatprep.subr.bf16.mxu0 0
        %1258 = vmatpush1.bf16.msra.mxu0 0
        %1259 = vmatprep.subr.bf16.mxu0 0
        %1260 = vmatpush1.bf16.msra.mxu0 0
        %1261 = vmatprep.subr.bf16.mxu0 0
        %1262 = vmatpush1.bf16.msra.mxu0 0
        %1263 = vmatprep.subr.bf16.mxu0 0
        %1264 = vmatpush1.bf16.msra.mxu0 0
        %1265 = vmatprep.subr.bf16.mxu0 0
        %1266 = vmatpush1.bf16.msra.mxu0 0
        %1267 = vmatprep.subr.bf16.mxu0 0
        %1268 = vmatpush1.bf16.msra.mxu0 0
        %1269 = vmatprep.subr.bf16.mxu0 0
        %1270 = vmatpush1.bf16.msra.mxu0 0
        %1271 = vmatprep.subr.bf16.mxu0 0
        %1272 = vmatpush1.bf16.msra.mxu0 0
        %1273 = vmatprep.subr.bf16.mxu0 0
        %1274 = vmatpush1.bf16.msra.mxu0 0
        %1275 = vmatprep.mubr.bf16.mxu0 0
        %1276 = vmatmul.mubr.bf16.gmra.mrb[0].mxu0 %v1241
        %v1277 = vpop.f32.mrb[0].mxu0
        %v1278 = vadd.f32 0.0, %v1277
        %v1279 = vpop.f32.mrb[0].mxu0
        %v1280 = vpop.f32.mrb[0].mxu0
        %v1281 = vpop.f32.mrb[0].mxu0
        %1282 = vdwg.mxu0
        %v1283 = vadd.f32 %v1238, %v1278
        %v1284 = vld [vmem:[%s801] sm:$0x3]
        %1285 = vrot.lane.b32.xlu0 %v483, 64
        %v1286 = vpop.permute.xlu0 %1285
        %v1287 = vsel %vm491, %v1286, %v483
        %1288 = vrot.lane.b32.xlu0 %v1287, 64
        %v1289 = vpop.permute.xlu0 %1288
        %v1290 = vsel %vm491, %v1289, %v483
        %v1291 = vld [vmem:[%s1 + $0x4] sm:$0x1]
        %v1292 = vlaneseq
        %v1293 = vshrl.u32 %v1292, 7
        %v1294 = vsub.s32 0, %v1293
        %v1295 = vrot.slane %v1291, %v1294
        %1297 = vrot.lane.b32.xlu0 %v1295, 1
        %v1298 = vpop.permute.xlu0 %1297
        %v1300 = vmul.f32 %v1290, %v1298
        %v1301 = vpack.c.bf16 %v1300, %v1300
        %1303 = vrot.lane.b32.xlu0 %v1301, 127
        %v1304 = vpop.permute.xlu0 %1303
        %v1306 = vsel %vm531, %v1284, 0
        %v1309 = vsel %vm535, %v1304, 0
        %1311 = vmatprep.subr.bf16.mxu0 0
        %1312 = vmatpush1.bf16.msra.mxu0 %v1309
        %1313 = vmatprep.subr.bf16.mxu0 0
        %1314 = vmatpush1.bf16.msra.mxu0 0
        %1315 = vmatprep.subr.bf16.mxu0 0
        %1316 = vmatpush1.bf16.msra.mxu0 0
        %1317 = vmatprep.subr.bf16.mxu0 0
        %1318 = vmatpush1.bf16.msra.mxu0 0
        %1319 = vmatprep.subr.bf16.mxu0 0
        %1320 = vmatpush1.bf16.msra.mxu0 0
        %1321 = vmatprep.subr.bf16.mxu0 0
        %1322 = vmatpush1.bf16.msra.mxu0 0
        %1323 = vmatprep.subr.bf16.mxu0 0
        %1324 = vmatpush1.bf16.msra.mxu0 0
        %1325 = vmatprep.subr.bf16.mxu0 0
        %1326 = vmatpush1.bf16.msra.mxu0 0
        %1327 = vmatprep.subr.bf16.mxu0 0
        %1328 = vmatpush1.bf16.msra.mxu0 0
        %1329 = vmatprep.subr.bf16.mxu0 0
        %1330 = vmatpush1.bf16.msra.mxu0 0
        %1331 = vmatprep.subr.bf16.mxu0 0
        %1332 = vmatpush1.bf16.msra.mxu0 0
        %1333 = vmatprep.subr.bf16.mxu0 0
        %1334 = vmatpush1.bf16.msra.mxu0 0
        %1335 = vmatprep.subr.bf16.mxu0 0
        %1336 = vmatpush1.bf16.msra.mxu0 0
        %1337 = vmatprep.subr.bf16.mxu0 0
        %1338 = vmatpush1.bf16.msra.mxu0 0
        %1339 = vmatprep.subr.bf16.mxu0 0
        %1340 = vmatpush1.bf16.msra.mxu0 0
        %1341 = vmatprep.subr.bf16.mxu0 0
        %1342 = vmatpush1.bf16.msra.mxu0 0
        %1343 = vmatprep.mubr.bf16.mxu0 0
        %1344 = vmatmul.mubr.bf16.gmra.mrb[0].mxu0 %v1306
        %v1345 = vpop.f32.mrb[0].mxu0
        %v1346 = vadd.f32 0.0, %v1345
        %v1347 = vpop.f32.mrb[0].mxu0
        %v1348 = vpop.f32.mrb[0].mxu0
        %v1349 = vpop.f32.mrb[0].mxu0
        %1350 = vdwg.mxu0
        %v1351 = vadd.f32 %v1283, %v1346
        %v1352 = vld [vmem:[%s851] sm:$0x3]
        %v1354 = vsel %vm531, %v1352, 0
        %1356 = vmatprep.subr.bf16.mxu0 0
        %1357 = vmatpush1.bf16.msra.mxu0 %v912
        %1358 = vmatprep.subr.bf16.mxu0 0
        %1359 = vmatpush1.bf16.msra.mxu0 0
        %1360 = vmatprep.subr.bf16.mxu0 0
        %1361 = vmatpush1.bf16.msra.mxu0 0
        %1362 = vmatprep.subr.bf16.mxu0 0
        %1363 = vmatpush1.bf16.msra.mxu0 0
        %1364 = vmatprep.subr.bf16.mxu0 0
        %1365 = vmatpush1.bf16.msra.mxu0 0
        %1366 = vmatprep.subr.bf16.mxu0 0
        %1367 = vmatpush1.bf16.msra.mxu0 0
        %1368 = vmatprep.subr.bf16.mxu0 0
        %1369 = vmatpush1.bf16.msra.mxu0 0
        %1370 = vmatprep.subr.bf16.mxu0 0
        %1371 = vmatpush1.bf16.msra.mxu0 0
        %1372 = vmatprep.subr.bf16.mxu0 0
        %1373 = vmatpush1.bf16.msra.mxu0 0
        %1374 = vmatprep.subr.bf16.mxu0 0
        %1375 = vmatpush1.bf16.msra.mxu0 0
        %1376 = vmatprep.subr.bf16.mxu0 0
        %1377 = vmatpush1.bf16.msra.mxu0 0
        %1378 = vmatprep.subr.bf16.mxu0 0
        %1379 = vmatpush1.bf16.msra.mxu0 0
        %1380 = vmatprep.subr.bf16.mxu0 0
        %1381 = vmatpush1.bf16.msra.mxu0 0
        %1382 = vmatprep.subr.bf16.mxu0 0
        %1383 = vmatpush1.bf16.msra.mxu0 0
        %1384 = vmatprep.subr.bf16.mxu0 0
        %1385 = vmatpush1.bf16.msra.mxu0 0
        %1386 = vmatprep.subr.bf16.mxu0 0
        %1387 = vmatpush1.bf16.msra.mxu0 0
        %1388 = vmatprep.mubr.bf16.mxu0 0
        %1389 = vmatmul.mubr.bf16.gmra.mrb[0].mxu0 %v1354
        %v1390 = vpop.f32.mrb[0].mxu0
        %v1391 = vadd.f32 0.0, %v1390
        %v1392 = vpop.f32.mrb[0].mxu0
        %v1393 = vpop.f32.mrb[0].mxu0
        %v1394 = vpop.f32.mrb[0].mxu0
        %1395 = vdwg.mxu0
        %v1396 = vadd.f32 %v1351, %v1391
        %v1397 = vld [vmem:[%s905] sm:$0x3]
        %v1399 = vsel %vm531, %v1397, 0
        %1401 = vmatprep.subr.bf16.mxu0 0
        %1402 = vmatpush1.bf16.msra.mxu0 %v962
        %1403 = vmatprep.subr.bf16.mxu0 0
        %1404 = vmatpush1.bf16.msra.mxu0 0
        %1405 = vmatprep.subr.bf16.mxu0 0
        %1406 = vmatpush1.bf16.msra.mxu0 0
        %1407 = vmatprep.subr.bf16.mxu0 0
        %1408 = vmatpush1.bf16.msra.mxu0 0
        %1409 = vmatprep.subr.bf16.mxu0 0
        %1410 = vmatpush1.bf16.msra.mxu0 0
        %1411 = vmatprep.subr.bf16.mxu0 0
        %1412 = vmatpush1.bf16.msra.mxu0 0
        %1413 = vmatprep.subr.bf16.mxu0 0
        %1414 = vmatpush1.bf16.msra.mxu0 0
        %1415 = vmatprep.subr.bf16.mxu0 0
        %1416 = vmatpush1.bf16.msra.mxu0 0
        %1417 = vmatprep.subr.bf16.mxu0 0
        %1418 = vmatpush1.bf16.msra.mxu0 0
        %1419 = vmatprep.subr.bf16.mxu0 0
        %1420 = vmatpush1.bf16.msra.mxu0 0
        %1421 = vmatprep.subr.bf16.mxu0 0
        %1422 = vmatpush1.bf16.msra.mxu0 0
        %1423 = vmatprep.subr.bf16.mxu0 0
        %1424 = vmatpush1.bf16.msra.mxu0 0
        %1425 = vmatprep.subr.bf16.mxu0 0
        %1426 = vmatpush1.bf16.msra.mxu0 0
        %1427 = vmatprep.subr.bf16.mxu0 0
        %1428 = vmatpush1.bf16.msra.mxu0 0
        %1429 = vmatprep.subr.bf16.mxu0 0
        %1430 = vmatpush1.bf16.msra.mxu0 0
        %1431 = vmatprep.subr.bf16.mxu0 0
        %1432 = vmatpush1.bf16.msra.mxu0 0
        %1433 = vmatprep.mubr.bf16.mxu0 0
        %1434 = vmatmul.mubr.bf16.gmra.mrb[0].mxu0 %v1399
        %v1435 = vpop.f32.mrb[0].mxu0
        %v1436 = vadd.f32 0.0, %v1435
        %v1437 = vpop.f32.mrb[0].mxu0
        %v1438 = vpop.f32.mrb[0].mxu0
        %v1439 = vpop.f32.mrb[0].mxu0
        %1440 = vdwg.mxu0
        %v1441 = vadd.f32 %v1396, %v1436
        %v1442 = vld [vmem:[%s955] sm:$0x3]
        %v1443 = vmul.f32 %v516, %v1298
        %v1444 = vpack.c.bf16 %v1443, %v1443
        %1446 = vrot.lane.b32.xlu0 %v1444, 127
        %v1447 = vpop.permute.xlu0 %1446
        %v1449 = vsel %vm531, %v1442, 0
        %v1452 = vsel %vm535, %v1447, 0
        %1454 = vmatprep.subr.bf16.mxu0 0
        %1455 = vmatpush1.bf16.msra.mxu0 %v1452
        %1456 = vmatprep.subr.bf16.mxu0 0
        %1457 = vmatpush1.bf16.msra.mxu0 0
        %1458 = vmatprep.subr.bf16.mxu0 0
        %1459 = vmatpush1.bf16.msra.mxu0 0
        %1460 = vmatprep.subr.bf16.mxu0 0
        %1461 = vmatpush1.bf16.msra.mxu0 0
        %1462 = vmatprep.subr.bf16.mxu0 0
        %1463 = vmatpush1.bf16.msra.mxu0 0
        %1464 = vmatprep.subr.bf16.mxu0 0
        %1465 = vmatpush1.bf16.msra.mxu0 0
        %1466 = vmatprep.subr.bf16.mxu0 0
        %1467 = vmatpush1.bf16.msra.mxu0 0
        %1468 = vmatprep.subr.bf16.mxu0 0
        %1469 = vmatpush1.bf16.msra.mxu0 0
        %1470 = vmatprep.subr.bf16.mxu0 0
        %1471 = vmatpush1.bf16.msra.mxu0 0
        %1472 = vmatprep.subr.bf16.mxu0 0
        %1473 = vmatpush1.bf16.msra.mxu0 0
        %1474 = vmatprep.subr.bf16.mxu0 0
        %1475 = vmatpush1.bf16.msra.mxu0 0
        %1476 = vmatprep.subr.bf16.mxu0 0
        %1477 = vmatpush1.bf16.msra.mxu0 0
        %1478 = vmatprep.subr.bf16.mxu0 0
        %1479 = vmatpush1.bf16.msra.mxu0 0
        %1480 = vmatprep.subr.bf16.mxu0 0
        %1481 = vmatpush1.bf16.msra.mxu0 0
        %1482 = vmatprep.subr.bf16.mxu0 0
        %1483 = vmatpush1.bf16.msra.mxu0 0
        %1484 = vmatprep.subr.bf16.mxu0 0
        %1485 = vmatpush1.bf16.msra.mxu0 0
        %1486 = vmatprep.mubr.bf16.mxu0 0
        %1487 = vmatmul.mubr.bf16.gmra.mrb[0].mxu0 %v1449
        %v1488 = vpop.f32.mrb[0].mxu0
        %v1489 = vadd.f32 0.0, %v1488
        %v1490 = vpop.f32.mrb[0].mxu0
        %v1491 = vpop.f32.mrb[0].mxu0
        %v1492 = vpop.f32.mrb[0].mxu0
        %1493 = vdwg.mxu0
        %v1494 = vadd.f32 %v1441, %v1489
        %v1495 = vld [vmem:[%s3] sm:$0xf]
        %1497 = vset.pattern.permute.xlu0 0
        %1498 = vperm.xlu0 %1497, %v1495
        %v1499 = vpop.permute.xlu0 %1498
        %v1501 = vadd.f32 %v1494, %v1499
        %s1502 = sld [smem:[#allocation4]]
        %vm1503 = vcmp.ge.f32.partialorder %v1501, 0.0
        %v1504 = vstv %s1502
        %v1505 = vmul.f32 %v1504, %v1501
        %v1506 = vsel %vm1503, %v1501, %v1505
        %1507 = vst.msk [vmem:[#allocation2 + $0x4] sm:$0xf] %vm1017, %v1506
        %v1508 = vld [vmem:[%s2] sm:$0x3]
        %v1509 = vld [vmem:[%s1 + $0x2] sm:$0x1]
        %v1510 = vlaneseq
        %v1511 = vshrl.u32 %v1510, 7
        %v1512 = vsub.s32 0, %v1511
        %v1513 = vrot.slane %v1509, %v1512
        %1515 = vrot.lane.b32.xlu0 %v1513, 63
        %v1516 = vpop.permute.xlu0 %1515
        %v1518 = vmul.f32 %v689, %v1516
        %v1519 = vpack.c.bf16 %v1518, %v1518
        %v1520 = vld [vmem:[%s509] sm:$0x3]
        %v1522 = vsel %vm531, %v1520, 0
        %1524 = vmatprep.subr.bf16.mxu0 0
        %1525 = vmatpush1.bf16.msra.mxu0 %v758
        %1526 = vmatprep.subr.bf16.mxu0 0
        %1527 = vmatpush1.bf16.msra.mxu0 0
        %1528 = vmatprep.subr.bf16.mxu0 0
        %1529 = vmatpush1.bf16.msra.mxu0 0
        %1530 = vmatprep.subr.bf16.mxu0 0
        %1531 = vmatpush1.bf16.msra.mxu0 0
        %1532 = vmatprep.subr.bf16.mxu0 0
        %1533 = vmatpush1.bf16.msra.mxu0 0
        %1534 = vmatprep.subr.bf16.mxu0 0
        %1535 = vmatpush1.bf16.msra.mxu0 0
        %1536 = vmatprep.subr.bf16.mxu0 0
        %1537 = vmatpush1.bf16.msra.mxu0 0
        %1538 = vmatprep.subr.bf16.mxu0 0
        %1539 = vmatpush1.bf16.msra.mxu0 0
        %1540 = vmatprep.subr.bf16.mxu0 0
        %1541 = vmatpush1.bf16.msra.mxu0 0
        %1542 = vmatprep.subr.bf16.mxu0 0
        %1543 = vmatpush1.bf16.msra.mxu0 0
        %1544 = vmatprep.subr.bf16.mxu0 0
        %1545 = vmatpush1.bf16.msra.mxu0 0
        %1546 = vmatprep.subr.bf16.mxu0 0
        %1547 = vmatpush1.bf16.msra.mxu0 0
        %1548 = vmatprep.subr.bf16.mxu0 0
        %1549 = vmatpush1.bf16.msra.mxu0 0
        %1550 = vmatprep.subr.bf16.mxu0 0
        %1551 = vmatpush1.bf16.msra.mxu0 0
        %1552 = vmatprep.subr.bf16.mxu0 0
        %1553 = vmatpush1.bf16.msra.mxu0 0
        %1554 = vmatprep.subr.bf16.mxu0 0
        %1555 = vmatpush1.bf16.msra.mxu0 0
        %1556 = vmatprep.mubr.bf16.mxu0 0
        %1557 = vmatmul.mubr.bf16.gmra.mrb[0].mxu0 %v1522
        %v1558 = vpop.f32.mrb[0].mxu0
        %v1559 = vadd.f32 0.0, %v1558
        %v1560 = vpop.f32.mrb[0].mxu0
        %v1561 = vpop.f32.mrb[0].mxu0
        %v1562 = vpop.f32.mrb[0].mxu0
        %1563 = vdwg.mxu0
        %1565 = vrot.lane.b32.xlu0 %v1519, 65
        %v1566 = vpop.permute.xlu0 %1565
        %v1568 = vsel %vm531, %v1508, 0
        %v1571 = vsel %vm535, %v1566, 0
        %1573 = vmatprep.subr.bf16.mxu0 0
        %1574 = vmatpush1.bf16.msra.mxu0 %v1571
        %1575 = vmatprep.subr.bf16.mxu0 0
        %1576 = vmatpush1.bf16.msra.mxu0 0
        %1577 = vmatprep.subr.bf16.mxu0 0
        %1578 = vmatpush1.bf16.msra.mxu0 0
        %1579 = vmatprep.subr.bf16.mxu0 0
        %1580 = vmatpush1.bf16.msra.mxu0 0
        %1581 = vmatprep.subr.bf16.mxu0 0
        %1582 = vmatpush1.bf16.msra.mxu0 0
        %1583 = vmatprep.subr.bf16.mxu0 0
        %1584 = vmatpush1.bf16.msra.mxu0 0
        %1585 = vmatprep.subr.bf16.mxu0 0
        %1586 = vmatpush1.bf16.msra.mxu0 0
        %1587 = vmatprep.subr.bf16.mxu0 0
        %1588 = vmatpush1.bf16.msra.mxu0 0
        %1589 = vmatprep.subr.bf16.mxu0 0
        %1590 = vmatpush1.bf16.msra.mxu0 0
        %1591 = vmatprep.subr.bf16.mxu0 0
        %1592 = vmatpush1.bf16.msra.mxu0 0
        %1593 = vmatprep.subr.bf16.mxu0 0
        %1594 = vmatpush1.bf16.msra.mxu0 0
        %1595 = vmatprep.subr.bf16.mxu0 0
        %1596 = vmatpush1.bf16.msra.mxu0 0
        %1597 = vmatprep.subr.bf16.mxu0 0
        %1598 = vmatpush1.bf16.msra.mxu0 0
        %1599 = vmatprep.subr.bf16.mxu0 0
        %1600 = vmatpush1.bf16.msra.mxu0 0
        %1601 = vmatprep.subr.bf16.mxu0 0
        %1602 = vmatpush1.bf16.msra.mxu0 0
        %1603 = vmatprep.subr.bf16.mxu0 0
        %1604 = vmatpush1.bf16.msra.mxu0 0
        %1605 = vmatprep.mubr.bf16.mxu0 0
        %1606 = vmatmul.mubr.bf16.gmra.mrb[0].mxu0 %v1568
        %v1607 = vpop.f32.mrb[0].mxu0
        %v1608 = vadd.f32 %v1559, %v1607
        %v1609 = vpop.f32.mrb[0].mxu0
        %v1610 = vpop.f32.mrb[0].mxu0
        %v1611 = vpop.f32.mrb[0].mxu0
        %1612 = vdwg.mxu0
        %v1613 = vld [vmem:[%s628] sm:$0x3]
        %v1615 = vsel %vm531, %v1613, 0
        %1617 = vmatprep.subr.bf16.mxu0 0
        %1618 = vmatpush1.bf16.msra.mxu0 %v808
        %1619 = vmatprep.subr.bf16.mxu0 0
        %1620 = vmatpush1.bf16.msra.mxu0 0
        %1621 = vmatprep.subr.bf16.mxu0 0
        %1622 = vmatpush1.bf16.msra.mxu0 0
        %1623 = vmatprep.subr.bf16.mxu0 0
        %1624 = vmatpush1.bf16.msra.mxu0 0
        %1625 = vmatprep.subr.bf16.mxu0 0
        %1626 = vmatpush1.bf16.msra.mxu0 0
        %1627 = vmatprep.subr.bf16.mxu0 0
        %1628 = vmatpush1.bf16.msra.mxu0 0
        %1629 = vmatprep.subr.bf16.mxu0 0
        %1630 = vmatpush1.bf16.msra.mxu0 0
        %1631 = vmatprep.subr.bf16.mxu0 0
        %1632 = vmatpush1.bf16.msra.mxu0 0
        %1633 = vmatprep.subr.bf16.mxu0 0
        %1634 = vmatpush1.bf16.msra.mxu0 0
        %1635 = vmatprep.subr.bf16.mxu0 0
        %1636 = vmatpush1.bf16.msra.mxu0 0
        %1637 = vmatprep.subr.bf16.mxu0 0
        %1638 = vmatpush1.bf16.msra.mxu0 0
        %1639 = vmatprep.subr.bf16.mxu0 0
        %1640 = vmatpush1.bf16.msra.mxu0 0
        %1641 = vmatprep.subr.bf16.mxu0 0
        %1642 = vmatpush1.bf16.msra.mxu0 0
        %1643 = vmatprep.subr.bf16.mxu0 0
        %1644 = vmatpush1.bf16.msra.mxu0 0
        %1645 = vmatprep.subr.bf16.mxu0 0
        %1646 = vmatpush1.bf16.msra.mxu0 0
        %1647 = vmatprep.subr.bf16.mxu0 0
        %1648 = vmatpush1.bf16.msra.mxu0 0
        %1649 = vmatprep.mubr.bf16.mxu0 0
        %1650 = vmatmul.mubr.bf16.gmra.mrb[0].mxu0 %v1615
        %v1651 = vpop.f32.mrb[0].mxu0
        %v1652 = vadd.f32 0.0, %v1651
        %v1653 = vpop.f32.mrb[0].mxu0
        %v1654 = vpop.f32.mrb[0].mxu0
        %v1655 = vpop.f32.mrb[0].mxu0
        %1656 = vdwg.mxu0
        %v1657 = vadd.f32 %v1608, %v1652
        %v1658 = vld [vmem:[%s682] sm:$0x3]
        %v1659 = vmul.f32 %v497, %v1516
        %v1660 = vpack.c.bf16 %v1659, %v1659
        %1662 = vrot.lane.b32.xlu0 %v1660, 65
        %v1663 = vpop.permute.xlu0 %1662
        %v1665 = vsel %vm531, %v1658, 0
        %v1668 = vsel %vm535, %v1663, 0
        %1670 = vmatprep.subr.bf16.mxu0 0
        %1671 = vmatpush1.bf16.msra.mxu0 %v1668
        %1672 = vmatprep.subr.bf16.mxu0 0
        %1673 = vmatpush1.bf16.msra.mxu0 0
        %1674 = vmatprep.subr.bf16.mxu0 0
        %1675 = vmatpush1.bf16.msra.mxu0 0
        %1676 = vmatprep.subr.bf16.mxu0 0
        %1677 = vmatpush1.bf16.msra.mxu0 0
        %1678 = vmatprep.subr.bf16.mxu0 0
        %1679 = vmatpush1.bf16.msra.mxu0 0
        %1680 = vmatprep.subr.bf16.mxu0 0
        %1681 = vmatpush1.bf16.msra.mxu0 0
        %1682 = vmatprep.subr.bf16.mxu0 0
        %1683 = vmatpush1.bf16.msra.mxu0 0
        %1684 = vmatprep.subr.bf16.mxu0 0
        %1685 = vmatpush1.bf16.msra.mxu0 0
        %1686 = vmatprep.subr.bf16.mxu0 0
        %1687 = vmatpush1.bf16.msra.mxu0 0
        %1688 = vmatprep.subr.bf16.mxu0 0
        %1689 = vmatpush1.bf16.msra.mxu0 0
        %1690 = vmatprep.subr.bf16.mxu0 0
        %1691 = vmatpush1.bf16.msra.mxu0 0
        %1692 = vmatprep.subr.bf16.mxu0 0
        %1693 = vmatpush1.bf16.msra.mxu0 0
        %1694 = vmatprep.subr.bf16.mxu0 0
        %1695 = vmatpush1.bf16.msra.mxu0 0
        %1696 = vmatprep.subr.bf16.mxu0 0
        %1697 = vmatpush1.bf16.msra.mxu0 0
        %1698 = vmatprep.subr.bf16.mxu0 0
        %1699 = vmatpush1.bf16.msra.mxu0 0
        %1700 = vmatprep.subr.bf16.mxu0 0
        %1701 = vmatpush1.bf16.msra.mxu0 0
        %1702 = vmatprep.mubr.bf16.mxu0 0
        %1703 = vmatmul.mubr.bf16.gmra.mrb[0].mxu0 %v1665
        %v1704 = vpop.f32.mrb[0].mxu0
        %v1705 = vadd.f32 0.0, %v1704
        %v1706 = vpop.f32.mrb[0].mxu0
        %v1707 = vpop.f32.mrb[0].mxu0
        %v1708 = vpop.f32.mrb[0].mxu0
        %1709 = vdwg.mxu0
        %v1710 = vadd.f32 %v1657, %v1705
        %v1711 = vld [vmem:[%s751] sm:$0x3]
        %v1713 = vsel %vm531, %v1711, 0
        %1715 = vmatprep.subr.bf16.mxu0 0
        %1716 = vmatpush1.bf16.msra.mxu0 %v912
        %1717 = vmatprep.subr.bf16.mxu0 0
        %1718 = vmatpush1.bf16.msra.mxu0 0
        %1719 = vmatprep.subr.bf16.mxu0 0
        %1720 = vmatpush1.bf16.msra.mxu0 0
        %1721 = vmatprep.subr.bf16.mxu0 0
        %1722 = vmatpush1.bf16.msra.mxu0 0
        %1723 = vmatprep.subr.bf16.mxu0 0
        %1724 = vmatpush1.bf16.msra.mxu0 0
        %1725 = vmatprep.subr.bf16.mxu0 0
        %1726 = vmatpush1.bf16.msra.mxu0 0
        %1727 = vmatprep.subr.bf16.mxu0 0
        %1728 = vmatpush1.bf16.msra.mxu0 0
        %1729 = vmatprep.subr.bf16.mxu0 0
        %1730 = vmatpush1.bf16.msra.mxu0 0
        %1731 = vmatprep.subr.bf16.mxu0 0
        %1732 = vmatpush1.bf16.msra.mxu0 0
        %1733 = vmatprep.subr.bf16.mxu0 0
        %1734 = vmatpush1.bf16.msra.mxu0 0
        %1735 = vmatprep.subr.bf16.mxu0 0
        %1736 = vmatpush1.bf16.msra.mxu0 0
        %1737 = vmatprep.subr.bf16.mxu0 0
        %1738 = vmatpush1.bf16.msra.mxu0 0
        %1739 = vmatprep.subr.bf16.mxu0 0
        %1740 = vmatpush1.bf16.msra.mxu0 0
        %1741 = vmatprep.subr.bf16.mxu0 0
        %1742 = vmatpush1.bf16.msra.mxu0 0
        %1743 = vmatprep.subr.bf16.mxu0 0
        %1744 = vmatpush1.bf16.msra.mxu0 0
        %1745 = vmatprep.subr.bf16.mxu0 0
        %1746 = vmatpush1.bf16.msra.mxu0 0
        %1747 = vmatprep.mubr.bf16.mxu0 0
        %1748 = vmatmul.mubr.bf16.gmra.mrb[0].mxu0 %v1713
        %v1749 = vpop.f32.mrb[0].mxu0
        %v1750 = vadd.f32 0.0, %v1749
        %v1751 = vpop.f32.mrb[0].mxu0
        %v1752 = vpop.f32.mrb[0].mxu0
        %v1753 = vpop.f32.mrb[0].mxu0
        %1754 = vdwg.mxu0
        %v1755 = vadd.f32 %v1710, %v1750
        %v1756 = vld [vmem:[%s801] sm:$0x3]
        %v1758 = vsel %vm531, %v1756, 0
        %1760 = vmatprep.subr.bf16.mxu0 0
        %1761 = vmatpush1.bf16.msra.mxu0 %v962
        %1762 = vmatprep.subr.bf16.mxu0 0
        %1763 = vmatpush1.bf16.msra.mxu0 0
        %1764 = vmatprep.subr.bf16.mxu0 0
        %1765 = vmatpush1.bf16.msra.mxu0 0
        %1766 = vmatprep.subr.bf16.mxu0 0
        %1767 = vmatpush1.bf16.msra.mxu0 0
        %1768 = vmatprep.subr.bf16.mxu0 0
        %1769 = vmatpush1.bf16.msra.mxu0 0
        %1770 = vmatprep.subr.bf16.mxu0 0
        %1771 = vmatpush1.bf16.msra.mxu0 0
        %1772 = vmatprep.subr.bf16.mxu0 0
        %1773 = vmatpush1.bf16.msra.mxu0 0
        %1774 = vmatprep.subr.bf16.mxu0 0
        %1775 = vmatpush1.bf16.msra.mxu0 0
        %1776 = vmatprep.subr.bf16.mxu0 0
        %1777 = vmatpush1.bf16.msra.mxu0 0
        %1778 = vmatprep.subr.bf16.mxu0 0
        %1779 = vmatpush1.bf16.msra.mxu0 0
        %1780 = vmatprep.subr.bf16.mxu0 0
        %1781 = vmatpush1.bf16.msra.mxu0 0
        %1782 = vmatprep.subr.bf16.mxu0 0
        %1783 = vmatpush1.bf16.msra.mxu0 0
        %1784 = vmatprep.subr.bf16.mxu0 0
        %1785 = vmatpush1.bf16.msra.mxu0 0
        %1786 = vmatprep.subr.bf16.mxu0 0
        %1787 = vmatpush1.bf16.msra.mxu0 0
        %1788 = vmatprep.subr.bf16.mxu0 0
        %1789 = vmatpush1.bf16.msra.mxu0 0
        %1790 = vmatprep.subr.bf16.mxu0 0
        %1791 = vmatpush1.bf16.msra.mxu0 0
        %1792 = vmatprep.mubr.bf16.mxu0 0
        %1793 = vmatmul.mubr.bf16.gmra.mrb[0].mxu0 %v1758
        %v1794 = vpop.f32.mrb[0].mxu0
        %v1795 = vadd.f32 0.0, %v1794
        %v1796 = vpop.f32.mrb[0].mxu0
        %v1797 = vpop.f32.mrb[0].mxu0
        %v1798 = vpop.f32.mrb[0].mxu0
        %1799 = vdwg.mxu0
        %v1800 = vadd.f32 %v1755, %v1795
        %v1801 = vld [vmem:[%s851] sm:$0x3]
        %v1802 = vld [vmem:[%s1 + $0x5] sm:$0x1]
        %v1803 = vlaneseq
        %v1804 = vshrl.u32 %v1803, 7
        %v1805 = vsub.s32 0, %v1804
        %v1806 = vrot.slane %v1802, %v1805
        %1808 = vrot.lane.b32.xlu0 %v1806, 7
        %v1809 = vpop.permute.xlu0 %1808
        %v1811 = vmul.f32 %v689, %v1809
        %v1812 = vpack.c.bf16 %v1811, %v1811
        %1814 = vrot.lane.b32.xlu0 %v1812, 121
        %v1815 = vpop.permute.xlu0 %1814
        %v1817 = vsel %vm531, %v1801, 0
        %v1820 = vsel %vm535, %v1815, 0
        %1822 = vmatprep.subr.bf16.mxu0 0
        %1823 = vmatpush1.bf16.msra.mxu0 %v1820
        %1824 = vmatprep.subr.bf16.mxu0 0
        %1825 = vmatpush1.bf16.msra.mxu0 0
        %1826 = vmatprep.subr.bf16.mxu0 0
        %1827 = vmatpush1.bf16.msra.mxu0 0
        %1828 = vmatprep.subr.bf16.mxu0 0
        %1829 = vmatpush1.bf16.msra.mxu0 0
        %1830 = vmatprep.subr.bf16.mxu0 0
        %1831 = vmatpush1.bf16.msra.mxu0 0
        %1832 = vmatprep.subr.bf16.mxu0 0
        %1833 = vmatpush1.bf16.msra.mxu0 0
        %1834 = vmatprep.subr.bf16.mxu0 0
        %1835 = vmatpush1.bf16.msra.mxu0 0
        %1836 = vmatprep.subr.bf16.mxu0 0
        %1837 = vmatpush1.bf16.msra.mxu0 0
        %1838 = vmatprep.subr.bf16.mxu0 0
        %1839 = vmatpush1.bf16.msra.mxu0 0
        %1840 = vmatprep.subr.bf16.mxu0 0
        %1841 = vmatpush1.bf16.msra.mxu0 0
        %1842 = vmatprep.subr.bf16.mxu0 0
        %1843 = vmatpush1.bf16.msra.mxu0 0
        %1844 = vmatprep.subr.bf16.mxu0 0
        %1845 = vmatpush1.bf16.msra.mxu0 0
        %1846 = vmatprep.subr.bf16.mxu0 0
        %1847 = vmatpush1.bf16.msra.mxu0 0
        %1848 = vmatprep.subr.bf16.mxu0 0
        %1849 = vmatpush1.bf16.msra.mxu0 0
        %1850 = vmatprep.subr.bf16.mxu0 0
        %1851 = vmatpush1.bf16.msra.mxu0 0
        %1852 = vmatprep.subr.bf16.mxu0 0
        %1853 = vmatpush1.bf16.msra.mxu0 0
        %1854 = vmatprep.mubr.bf16.mxu0 0
        %1855 = vmatmul.mubr.bf16.gmra.mrb[0].mxu0 %v1817
        %v1856 = vpop.f32.mrb[0].mxu0
        %v1857 = vadd.f32 0.0, %v1856
        %v1858 = vpop.f32.mrb[0].mxu0
        %v1859 = vpop.f32.mrb[0].mxu0
        %v1860 = vpop.f32.mrb[0].mxu0
        %1861 = vdwg.mxu0
        %v1862 = vadd.f32 %v1800, %v1857
        %v1863 = vld [vmem:[%s905] sm:$0x3]
        %v1864 = vld [vmem:[%s1 + $0x6] sm:$0x1]
        %v1865 = vlaneseq
        %v1866 = vshrl.u32 %v1865, 7
        %v1867 = vsub.s32 0, %v1866
        %v1868 = vrot.slane %v1864, %v1867
        %1870 = vrot.lane.b32.xlu0 %v1868, 8
        %v1871 = vpop.permute.xlu0 %1870
        %v1873 = vmul.f32 %v1290, %v1871
        %v1874 = vpack.c.bf16 %v1873, %v1873
        %1876 = vrot.lane.b32.xlu0 %v1874, 120
        %v1877 = vpop.permute.xlu0 %1876
        %v1879 = vsel %vm531, %v1863, 0
        %v1882 = vsel %vm535, %v1877, 0
        %1884 = vmatprep.subr.bf16.mxu0 0
        %1885 = vmatpush1.bf16.msra.mxu0 %v1882
        %1886 = vmatprep.subr.bf16.mxu0 0
        %1887 = vmatpush1.bf16.msra.mxu0 0
        %1888 = vmatprep.subr.bf16.mxu0 0
        %1889 = vmatpush1.bf16.msra.mxu0 0
        %1890 = vmatprep.subr.bf16.mxu0 0
        %1891 = vmatpush1.bf16.msra.mxu0 0
        %1892 = vmatprep.subr.bf16.mxu0 0
        %1893 = vmatpush1.bf16.msra.mxu0 0
        %1894 = vmatprep.subr.bf16.mxu0 0
        %1895 = vmatpush1.bf16.msra.mxu0 0
        %1896 = vmatprep.subr.bf16.mxu0 0
        %1897 = vmatpush1.bf16.msra.mxu0 0
        %1898 = vmatprep.subr.bf16.mxu0 0
        %1899 = vmatpush1.bf16.msra.mxu0 0
        %1900 = vmatprep.subr.bf16.mxu0 0
        %1901 = vmatpush1.bf16.msra.mxu0 0
        %1902 = vmatprep.subr.bf16.mxu0 0
        %1903 = vmatpush1.bf16.msra.mxu0 0
        %1904 = vmatprep.subr.bf16.mxu0 0
        %1905 = vmatpush1.bf16.msra.mxu0 0
        %1906 = vmatprep.subr.bf16.mxu0 0
        %1907 = vmatpush1.bf16.msra.mxu0 0
        %1908 = vmatprep.subr.bf16.mxu0 0
        %1909 = vmatpush1.bf16.msra.mxu0 0
        %1910 = vmatprep.subr.bf16.mxu0 0
        %1911 = vmatpush1.bf16.msra.mxu0 0
        %1912 = vmatprep.subr.bf16.mxu0 0
        %1913 = vmatpush1.bf16.msra.mxu0 0
        %1914 = vmatprep.subr.bf16.mxu0 0
        %1915 = vmatpush1.bf16.msra.mxu0 0
        %1916 = vmatprep.mubr.bf16.mxu0 0
        %1917 = vmatmul.mubr.bf16.gmra.mrb[0].mxu0 %v1879
        %v1918 = vpop.f32.mrb[0].mxu0
        %v1919 = vadd.f32 0.0, %v1918
        %v1920 = vpop.f32.mrb[0].mxu0
        %v1921 = vpop.f32.mrb[0].mxu0
        %v1922 = vpop.f32.mrb[0].mxu0
        %1923 = vdwg.mxu0
        %v1924 = vadd.f32 %v1862, %v1919
        %v1925 = vld [vmem:[%s955] sm:$0x3]
        %v1926 = vmul.f32 %v689, %v1871
        %v1927 = vpack.c.bf16 %v1926, %v1926
        %1929 = vrot.lane.b32.xlu0 %v1927, 120
        %v1930 = vpop.permute.xlu0 %1929
        %v1932 = vsel %vm531, %v1925, 0
        %v1935 = vsel %vm535, %v1930, 0
        %1937 = vmatprep.subr.bf16.mxu0 0
        %1938 = vmatpush1.bf16.msra.mxu0 %v1935
        %1939 = vmatprep.subr.bf16.mxu0 0
        %1940 = vmatpush1.bf16.msra.mxu0 0
        %1941 = vmatprep.subr.bf16.mxu0 0
        %1942 = vmatpush1.bf16.msra.mxu0 0
        %1943 = vmatprep.subr.bf16.mxu0 0
        %1944 = vmatpush1.bf16.msra.mxu0 0
        %1945 = vmatprep.subr.bf16.mxu0 0
        %1946 = vmatpush1.bf16.msra.mxu0 0
        %1947 = vmatprep.subr.bf16.mxu0 0
        %1948 = vmatpush1.bf16.msra.mxu0 0
        %1949 = vmatprep.subr.bf16.mxu0 0
        %1950 = vmatpush1.bf16.msra.mxu0 0
        %1951 = vmatprep.subr.bf16.mxu0 0
        %1952 = vmatpush1.bf16.msra.mxu0 0
        %1953 = vmatprep.subr.bf16.mxu0 0
        %1954 = vmatpush1.bf16.msra.mxu0 0
        %1955 = vmatprep.subr.bf16.mxu0 0
        %1956 = vmatpush1.bf16.msra.mxu0 0
        %1957 = vmatprep.subr.bf16.mxu0 0
        %1958 = vmatpush1.bf16.msra.mxu0 0
        %1959 = vmatprep.subr.bf16.mxu0 0
        %1960 = vmatpush1.bf16.msra.mxu0 0
        %1961 = vmatprep.subr.bf16.mxu0 0
        %1962 = vmatpush1.bf16.msra.mxu0 0
        %1963 = vmatprep.subr.bf16.mxu0 0
        %1964 = vmatpush1.bf16.msra.mxu0 0
        %1965 = vmatprep.subr.bf16.mxu0 0
        %1966 = vmatpush1.bf16.msra.mxu0 0
        %1967 = vmatprep.subr.bf16.mxu0 0
        %1968 = vmatpush1.bf16.msra.mxu0 0
        %1969 = vmatprep.mubr.bf16.mxu0 0
        %1970 = vmatmul.mubr.bf16.gmra.mrb[0].mxu0 %v1932
        %v1971 = vpop.f32.mrb[0].mxu0
        %v1972 = vadd.f32 0.0, %v1971
        %v1973 = vpop.f32.mrb[0].mxu0
        %v1974 = vpop.f32.mrb[0].mxu0
        %v1975 = vpop.f32.mrb[0].mxu0
        %1976 = vdwg.mxu0
        %v1977 = vadd.f32 %v1924, %v1972
        %v1978 = vld [vmem:[%s3] sm:$0xf]
        %1980 = vset.pattern.permute.xlu0 0
        %1981 = vperm.xlu0 %1980, %v1978
        %v1982 = vpop.permute.xlu0 %1981
        %v1984 = vadd.f32 %v1977, %v1982
        %s1985 = sld [smem:[#allocation4]]
        %vm1986 = vcmp.ge.f32.partialorder %v1984, 0.0
        %v1987 = vstv %s1985
        %v1988 = vmul.f32 %v1987, %v1984
        %v1989 = vsel %vm1986, %v1984, %v1988
        %1990 = vst.msk [vmem:[#allocation2 + $0x8] sm:$0xf] %vm1017, %v1989
        %v1991 = vld [vmem:[%s2] sm:$0x3]
        %v1992 = vld [vmem:[%s509] sm:$0x3]
        %v1994 = vsel %vm531, %v1992, 0
        %1996 = vmatprep.subr.bf16.mxu0 0
        %1997 = vmatpush1.bf16.msra.mxu0 %v808
        %1998 = vmatprep.subr.bf16.mxu0 0
        %1999 = vmatpush1.bf16.msra.mxu0 0
        %2000 = vmatprep.subr.bf16.mxu0 0
        %2001 = vmatpush1.bf16.msra.mxu0 0
        %2002 = vmatprep.subr.bf16.mxu0 0
        %2003 = vmatpush1.bf16.msra.mxu0 0
        %2004 = vmatprep.subr.bf16.mxu0 0
        %2005 = vmatpush1.bf16.msra.mxu0 0
        %2006 = vmatprep.subr.bf16.mxu0 0
        %2007 = vmatpush1.bf16.msra.mxu0 0
        %2008 = vmatprep.subr.bf16.mxu0 0
        %2009 = vmatpush1.bf16.msra.mxu0 0
        %2010 = vmatprep.subr.bf16.mxu0 0
        %2011 = vmatpush1.bf16.msra.mxu0 0
        %2012 = vmatprep.subr.bf16.mxu0 0
        %2013 = vmatpush1.bf16.msra.mxu0 0
        %2014 = vmatprep.subr.bf16.mxu0 0
        %2015 = vmatpush1.bf16.msra.mxu0 0
        %2016 = vmatprep.subr.bf16.mxu0 0
        %2017 = vmatpush1.bf16.msra.mxu0 0
        %2018 = vmatprep.subr.bf16.mxu0 0
        %2019 = vmatpush1.bf16.msra.mxu0 0
        %2020 = vmatprep.subr.bf16.mxu0 0
        %2021 = vmatpush1.bf16.msra.mxu0 0
        %2022 = vmatprep.subr.bf16.mxu0 0
        %2023 = vmatpush1.bf16.msra.mxu0 0
        %2024 = vmatprep.subr.bf16.mxu0 0
        %2025 = vmatpush1.bf16.msra.mxu0 0
        %2026 = vmatprep.subr.bf16.mxu0 0
        %2027 = vmatpush1.bf16.msra.mxu0 0
        %2028 = vmatprep.mubr.bf16.mxu0 0
        %2029 = vmatmul.mubr.bf16.gmra.mrb[0].mxu0 %v1994
        %v2030 = vpop.f32.mrb[0].mxu0
        %v2031 = vadd.f32 0.0, %v2030
        %v2032 = vpop.f32.mrb[0].mxu0
        %v2033 = vpop.f32.mrb[0].mxu0
        %v2034 = vpop.f32.mrb[0].mxu0
        %2035 = vdwg.mxu0
        %v2037 = vsel %vm531, %v1991, 0
        %2039 = vmatprep.subr.bf16.mxu0 0
        %2040 = vmatpush1.bf16.msra.mxu0 %v758
        %2041 = vmatprep.subr.bf16.mxu0 0
        %2042 = vmatpush1.bf16.msra.mxu0 0
        %2043 = vmatprep.subr.bf16.mxu0 0
        %2044 = vmatpush1.bf16.msra.mxu0 0
        %2045 = vmatprep.subr.bf16.mxu0 0
        %2046 = vmatpush1.bf16.msra.mxu0 0
        %2047 = vmatprep.subr.bf16.mxu0 0
        %2048 = vmatpush1.bf16.msra.mxu0 0
        %2049 = vmatprep.subr.bf16.mxu0 0
        %2050 = vmatpush1.bf16.msra.mxu0 0
        %2051 = vmatprep.subr.bf16.mxu0 0
        %2052 = vmatpush1.bf16.msra.mxu0 0
        %2053 = vmatprep.subr.bf16.mxu0 0
        %2054 = vmatpush1.bf16.msra.mxu0 0
        %2055 = vmatprep.subr.bf16.mxu0 0
        %2056 = vmatpush1.bf16.msra.mxu0 0
        %2057 = vmatprep.subr.bf16.mxu0 0
        %2058 = vmatpush1.bf16.msra.mxu0 0
        %2059 = vmatprep.subr.bf16.mxu0 0
        %2060 = vmatpush1.bf16.msra.mxu0 0
        %2061 = vmatprep.subr.bf16.mxu0 0
        %2062 = vmatpush1.bf16.msra.mxu0 0
        %2063 = vmatprep.subr.bf16.mxu0 0
        %2064 = vmatpush1.bf16.msra.mxu0 0
        %2065 = vmatprep.subr.bf16.mxu0 0
        %2066 = vmatpush1.bf16.msra.mxu0 0
        %2067 = vmatprep.subr.bf16.mxu0 0
        %2068 = vmatpush1.bf16.msra.mxu0 0
        %2069 = vmatprep.subr.bf16.mxu0 0
        %2070 = vmatpush1.bf16.msra.mxu0 0
        %2071 = vmatprep.mubr.bf16.mxu0 0
        %2072 = vmatmul.mubr.bf16.gmra.mrb[0].mxu0 %v2037
        %v2073 = vpop.f32.mrb[0].mxu0
        %v2074 = vadd.f32 %v2031, %v2073
        %v2075 = vpop.f32.mrb[0].mxu0
        %v2076 = vpop.f32.mrb[0].mxu0
        %v2077 = vpop.f32.mrb[0].mxu0
        %2078 = vdwg.mxu0
        %v2079 = vld [vmem:[%s628] sm:$0x3]
        %v2080 = vld [vmem:[%s1 + $0x4] sm:$0x1]
        %v2081 = vlaneseq
        %v2082 = vshrl.u32 %v2081, 7
        %v2083 = vsub.s32 0, %v2082
        %v2084 = vrot.slane %v2080, %v2083
        %2086 = vrot.lane.b32.xlu0 %v2084, 1
        %v2087 = vpop.permute.xlu0 %2086
        %v2089 = vmul.f32 %v1290, %v2087
        %v2090 = vpack.c.bf16 %v2089, %v2089
        %2092 = vrot.lane.b32.xlu0 %v2090, 127
        %v2093 = vpop.permute.xlu0 %2092
        %v2095 = vsel %vm531, %v2079, 0
        %v2098 = vsel %vm535, %v2093, 0
        %2100 = vmatprep.subr.bf16.mxu0 0
        %2101 = vmatpush1.bf16.msra.mxu0 %v2098
        %2102 = vmatprep.subr.bf16.mxu0 0
        %2103 = vmatpush1.bf16.msra.mxu0 0
        %2104 = vmatprep.subr.bf16.mxu0 0
        %2105 = vmatpush1.bf16.msra.mxu0 0
        %2106 = vmatprep.subr.bf16.mxu0 0
        %2107 = vmatpush1.bf16.msra.mxu0 0
        %2108 = vmatprep.subr.bf16.mxu0 0
        %2109 = vmatpush1.bf16.msra.mxu0 0
        %2110 = vmatprep.subr.bf16.mxu0 0
        %2111 = vmatpush1.bf16.msra.mxu0 0
        %2112 = vmatprep.subr.bf16.mxu0 0
        %2113 = vmatpush1.bf16.msra.mxu0 0
        %2114 = vmatprep.subr.bf16.mxu0 0
        %2115 = vmatpush1.bf16.msra.mxu0 0
        %2116 = vmatprep.subr.bf16.mxu0 0
        %2117 = vmatpush1.bf16.msra.mxu0 0
        %2118 = vmatprep.subr.bf16.mxu0 0
        %2119 = vmatpush1.bf16.msra.mxu0 0
        %2120 = vmatprep.subr.bf16.mxu0 0
        %2121 = vmatpush1.bf16.msra.mxu0 0
        %2122 = vmatprep.subr.bf16.mxu0 0
        %2123 = vmatpush1.bf16.msra.mxu0 0
        %2124 = vmatprep.subr.bf16.mxu0 0
        %2125 = vmatpush1.bf16.msra.mxu0 0
        %2126 = vmatprep.subr.bf16.mxu0 0
        %2127 = vmatpush1.bf16.msra.mxu0 0
        %2128 = vmatprep.subr.bf16.mxu0 0
        %2129 = vmatpush1.bf16.msra.mxu0 0
        %2130 = vmatprep.subr.bf16.mxu0 0
        %2131 = vmatpush1.bf16.msra.mxu0 0
        %2132 = vmatprep.mubr.bf16.mxu0 0
        %2133 = vmatmul.mubr.bf16.gmra.mrb[0].mxu0 %v2095
        %v2134 = vpop.f32.mrb[0].mxu0
        %v2135 = vadd.f32 0.0, %v2134
        %v2136 = vpop.f32.mrb[0].mxu0
        %v2137 = vpop.f32.mrb[0].mxu0
        %v2138 = vpop.f32.mrb[0].mxu0
        %2139 = vdwg.mxu0
        %v2140 = vadd.f32 %v2074, %v2135
        %v2141 = vld [vmem:[%s682] sm:$0x3]
        %v2143 = vsel %vm531, %v2141, 0
        %2145 = vmatprep.subr.bf16.mxu0 0
        %2146 = vmatpush1.bf16.msra.mxu0 %v912
        %2147 = vmatprep.subr.bf16.mxu0 0
        %2148 = vmatpush1.bf16.msra.mxu0 0
        %2149 = vmatprep.subr.bf16.mxu0 0
        %2150 = vmatpush1.bf16.msra.mxu0 0
        %2151 = vmatprep.subr.bf16.mxu0 0
        %2152 = vmatpush1.bf16.msra.mxu0 0
        %2153 = vmatprep.subr.bf16.mxu0 0
        %2154 = vmatpush1.bf16.msra.mxu0 0
        %2155 = vmatprep.subr.bf16.mxu0 0
        %2156 = vmatpush1.bf16.msra.mxu0 0
        %2157 = vmatprep.subr.bf16.mxu0 0
        %2158 = vmatpush1.bf16.msra.mxu0 0
        %2159 = vmatprep.subr.bf16.mxu0 0
        %2160 = vmatpush1.bf16.msra.mxu0 0
        %2161 = vmatprep.subr.bf16.mxu0 0
        %2162 = vmatpush1.bf16.msra.mxu0 0
        %2163 = vmatprep.subr.bf16.mxu0 0
        %2164 = vmatpush1.bf16.msra.mxu0 0
        %2165 = vmatprep.subr.bf16.mxu0 0
        %2166 = vmatpush1.bf16.msra.mxu0 0
        %2167 = vmatprep.subr.bf16.mxu0 0
        %2168 = vmatpush1.bf16.msra.mxu0 0
        %2169 = vmatprep.subr.bf16.mxu0 0
        %2170 = vmatpush1.bf16.msra.mxu0 0
        %2171 = vmatprep.subr.bf16.mxu0 0
        %2172 = vmatpush1.bf16.msra.mxu0 0
        %2173 = vmatprep.subr.bf16.mxu0 0
        %2174 = vmatpush1.bf16.msra.mxu0 0
        %2175 = vmatprep.subr.bf16.mxu0 0
        %2176 = vmatpush1.bf16.msra.mxu0 0
        %2177 = vmatprep.mubr.bf16.mxu0 0
        %2178 = vmatmul.mubr.bf16.gmra.mrb[0].mxu0 %v2143
        %v2179 = vpop.f32.mrb[0].mxu0
        %v2180 = vadd.f32 0.0, %v2179
        %v2181 = vpop.f32.mrb[0].mxu0
        %v2182 = vpop.f32.mrb[0].mxu0
        %v2183 = vpop.f32.mrb[0].mxu0
        %2184 = vdwg.mxu0
        %v2185 = vadd.f32 %v2140, %v2180
        %v2186 = vld [vmem:[%s751] sm:$0x3]
        %v2188 = vsel %vm531, %v2186, 0
        %2190 = vmatprep.subr.bf16.mxu0 0
        %2191 = vmatpush1.bf16.msra.mxu0 %v962
        %2192 = vmatprep.subr.bf16.mxu0 0
        %2193 = vmatpush1.bf16.msra.mxu0 0
        %2194 = vmatprep.subr.bf16.mxu0 0
        %2195 = vmatpush1.bf16.msra.mxu0 0
        %2196 = vmatprep.subr.bf16.mxu0 0
        %2197 = vmatpush1.bf16.msra.mxu0 0
        %2198 = vmatprep.subr.bf16.mxu0 0
        %2199 = vmatpush1.bf16.msra.mxu0 0
        %2200 = vmatprep.subr.bf16.mxu0 0
        %2201 = vmatpush1.bf16.msra.mxu0 0
        %2202 = vmatprep.subr.bf16.mxu0 0
        %2203 = vmatpush1.bf16.msra.mxu0 0
        %2204 = vmatprep.subr.bf16.mxu0 0
        %2205 = vmatpush1.bf16.msra.mxu0 0
        %2206 = vmatprep.subr.bf16.mxu0 0
        %2207 = vmatpush1.bf16.msra.mxu0 0
        %2208 = vmatprep.subr.bf16.mxu0 0
        %2209 = vmatpush1.bf16.msra.mxu0 0
        %2210 = vmatprep.subr.bf16.mxu0 0
        %2211 = vmatpush1.bf16.msra.mxu0 0
        %2212 = vmatprep.subr.bf16.mxu0 0
        %2213 = vmatpush1.bf16.msra.mxu0 0
        %2214 = vmatprep.subr.bf16.mxu0 0
        %2215 = vmatpush1.bf16.msra.mxu0 0
        %2216 = vmatprep.subr.bf16.mxu0 0
        %2217 = vmatpush1.bf16.msra.mxu0 0
        %2218 = vmatprep.subr.bf16.mxu0 0
        %2219 = vmatpush1.bf16.msra.mxu0 0
        %2220 = vmatprep.subr.bf16.mxu0 0
        %2221 = vmatpush1.bf16.msra.mxu0 0
        %2222 = vmatprep.mubr.bf16.mxu0 0
        %2223 = vmatmul.mubr.bf16.gmra.mrb[0].mxu0 %v2188
        %v2224 = vpop.f32.mrb[0].mxu0
        %v2225 = vadd.f32 0.0, %v2224
        %v2226 = vpop.f32.mrb[0].mxu0
        %v2227 = vpop.f32.mrb[0].mxu0
        %v2228 = vpop.f32.mrb[0].mxu0
        %2229 = vdwg.mxu0
        %v2230 = vadd.f32 %v2185, %v2225
        %v2231 = vld [vmem:[%s801] sm:$0x3]
        %v2232 = vmul.f32 %v516, %v2087
        %v2233 = vpack.c.bf16 %v2232, %v2232
        %2235 = vrot.lane.b32.xlu0 %v2233, 127
        %v2236 = vpop.permute.xlu0 %2235
        %v2238 = vsel %vm531, %v2231, 0
        %v2241 = vsel %vm535, %v2236, 0
        %2243 = vmatprep.subr.bf16.mxu0 0
        %2244 = vmatpush1.bf16.msra.mxu0 %v2241
        %2245 = vmatprep.subr.bf16.mxu0 0
        %2246 = vmatpush1.bf16.msra.mxu0 0
        %2247 = vmatprep.subr.bf16.mxu0 0
        %2248 = vmatpush1.bf16.msra.mxu0 0
        %2249 = vmatprep.subr.bf16.mxu0 0
        %2250 = vmatpush1.bf16.msra.mxu0 0
        %2251 = vmatprep.subr.bf16.mxu0 0
        %2252 = vmatpush1.bf16.msra.mxu0 0
        %2253 = vmatprep.subr.bf16.mxu0 0
        %2254 = vmatpush1.bf16.msra.mxu0 0
        %2255 = vmatprep.subr.bf16.mxu0 0
        %2256 = vmatpush1.bf16.msra.mxu0 0
        %2257 = vmatprep.subr.bf16.mxu0 0
        %2258 = vmatpush1.bf16.msra.mxu0 0
        %2259 = vmatprep.subr.bf16.mxu0 0
        %2260 = vmatpush1.bf16.msra.mxu0 0
        %2261 = vmatprep.subr.bf16.mxu0 0
        %2262 = vmatpush1.bf16.msra.mxu0 0
        %2263 = vmatprep.subr.bf16.mxu0 0
        %2264 = vmatpush1.bf16.msra.mxu0 0
        %2265 = vmatprep.subr.bf16.mxu0 0
        %2266 = vmatpush1.bf16.msra.mxu0 0
        %2267 = vmatprep.subr.bf16.mxu0 0
        %2268 = vmatpush1.bf16.msra.mxu0 0
        %2269 = vmatprep.subr.bf16.mxu0 0
        %2270 = vmatpush1.bf16.msra.mxu0 0
        %2271 = vmatprep.subr.bf16.mxu0 0
        %2272 = vmatpush1.bf16.msra.mxu0 0
        %2273 = vmatprep.subr.bf16.mxu0 0
        %2274 = vmatpush1.bf16.msra.mxu0 0
        %2275 = vmatprep.mubr.bf16.mxu0 0
        %2276 = vmatmul.mubr.bf16.gmra.mrb[0].mxu0 %v2238
        %v2277 = vpop.f32.mrb[0].mxu0
        %v2278 = vadd.f32 0.0, %v2277
        %v2279 = vpop.f32.mrb[0].mxu0
        %v2280 = vpop.f32.mrb[0].mxu0
        %v2281 = vpop.f32.mrb[0].mxu0
        %2282 = vdwg.mxu0
        %v2283 = vadd.f32 %v2230, %v2278
        %v2284 = vld [vmem:[%s851] sm:$0x3]
        %v2285 = vld [vmem:[%s1 + $0x6] sm:$0x1]
        %v2286 = vlaneseq
        %v2287 = vshrl.u32 %v2286, 7
        %v2288 = vsub.s32 0, %v2287
        %v2289 = vrot.slane %v2285, %v2288
        %2291 = vrot.lane.b32.xlu0 %v2289, 8
        %v2292 = vpop.permute.xlu0 %2291
        %v2294 = vmul.f32 %v1290, %v2292
        %v2295 = vpack.c.bf16 %v2294, %v2294
        %2297 = vrot.lane.b32.xlu0 %v2295, 120
        %v2298 = vpop.permute.xlu0 %2297
        %v2300 = vsel %vm531, %v2284, 0
        %v2303 = vsel %vm535, %v2298, 0
        %2305 = vmatprep.subr.bf16.mxu0 0
        %2306 = vmatpush1.bf16.msra.mxu0 %v2303
        %2307 = vmatprep.subr.bf16.mxu0 0
        %2308 = vmatpush1.bf16.msra.mxu0 0
        %2309 = vmatprep.subr.bf16.mxu0 0
        %2310 = vmatpush1.bf16.msra.mxu0 0
        %2311 = vmatprep.subr.bf16.mxu0 0
        %2312 = vmatpush1.bf16.msra.mxu0 0
        %2313 = vmatprep.subr.bf16.mxu0 0
        %2314 = vmatpush1.bf16.msra.mxu0 0
        %2315 = vmatprep.subr.bf16.mxu0 0
        %2316 = vmatpush1.bf16.msra.mxu0 0
        %2317 = vmatprep.subr.bf16.mxu0 0
        %2318 = vmatpush1.bf16.msra.mxu0 0
        %2319 = vmatprep.subr.bf16.mxu0 0
        %2320 = vmatpush1.bf16.msra.mxu0 0
        %2321 = vmatprep.subr.bf16.mxu0 0
        %2322 = vmatpush1.bf16.msra.mxu0 0
        %2323 = vmatprep.subr.bf16.mxu0 0
        %2324 = vmatpush1.bf16.msra.mxu0 0
        %2325 = vmatprep.subr.bf16.mxu0 0
        %2326 = vmatpush1.bf16.msra.mxu0 0
        %2327 = vmatprep.subr.bf16.mxu0 0
        %2328 = vmatpush1.bf16.msra.mxu0 0
        %2329 = vmatprep.subr.bf16.mxu0 0
        %2330 = vmatpush1.bf16.msra.mxu0 0
        %2331 = vmatprep.subr.bf16.mxu0 0
        %2332 = vmatpush1.bf16.msra.mxu0 0
        %2333 = vmatprep.subr.bf16.mxu0 0
        %2334 = vmatpush1.bf16.msra.mxu0 0
        %2335 = vmatprep.subr.bf16.mxu0 0
        %2336 = vmatpush1.bf16.msra.mxu0 0
        %2337 = vmatprep.mubr.bf16.mxu0 0
        %2338 = vmatmul.mubr.bf16.gmra.mrb[0].mxu0 %v2300
        %v2339 = vpop.f32.mrb[0].mxu0
        %v2340 = vadd.f32 0.0, %v2339
        %v2341 = vpop.f32.mrb[0].mxu0
        %v2342 = vpop.f32.mrb[0].mxu0
        %v2343 = vpop.f32.mrb[0].mxu0
        %2344 = vdwg.mxu0
        %v2345 = vadd.f32 %v2283, %v2340
        %v2346 = vld [vmem:[%s905] sm:$0x3]
        %v2347 = vmul.f32 %v689, %v2292
        %v2348 = vpack.c.bf16 %v2347, %v2347
        %2350 = vrot.lane.b32.xlu0 %v2348, 120
        %v2351 = vpop.permute.xlu0 %2350
        %v2353 = vsel %vm531, %v2346, 0
        %v2356 = vsel %vm535, %v2351, 0
        %2358 = vmatprep.subr.bf16.mxu0 0
        %2359 = vmatpush1.bf16.msra.mxu0 %v2356
        %2360 = vmatprep.subr.bf16.mxu0 0
        %2361 = vmatpush1.bf16.msra.mxu0 0
        %2362 = vmatprep.subr.bf16.mxu0 0
        %2363 = vmatpush1.bf16.msra.mxu0 0
        %2364 = vmatprep.subr.bf16.mxu0 0
        %2365 = vmatpush1.bf16.msra.mxu0 0
        %2366 = vmatprep.subr.bf16.mxu0 0
        %2367 = vmatpush1.bf16.msra.mxu0 0
        %2368 = vmatprep.subr.bf16.mxu0 0
        %2369 = vmatpush1.bf16.msra.mxu0 0
        %2370 = vmatprep.subr.bf16.mxu0 0
        %2371 = vmatpush1.bf16.msra.mxu0 0
        %2372 = vmatprep.subr.bf16.mxu0 0
        %2373 = vmatpush1.bf16.msra.mxu0 0
        %2374 = vmatprep.subr.bf16.mxu0 0
        %2375 = vmatpush1.bf16.msra.mxu0 0
        %2376 = vmatprep.subr.bf16.mxu0 0
        %2377 = vmatpush1.bf16.msra.mxu0 0
        %2378 = vmatprep.subr.bf16.mxu0 0
        %2379 = vmatpush1.bf16.msra.mxu0 0
        %2380 = vmatprep.subr.bf16.mxu0 0
        %2381 = vmatpush1.bf16.msra.mxu0 0
        %2382 = vmatprep.subr.bf16.mxu0 0
        %2383 = vmatpush1.bf16.msra.mxu0 0
        %2384 = vmatprep.subr.bf16.mxu0 0
        %2385 = vmatpush1.bf16.msra.mxu0 0
        %2386 = vmatprep.subr.bf16.mxu0 0
        %2387 = vmatpush1.bf16.msra.mxu0 0
        %2388 = vmatprep.subr.bf16.mxu0 0
        %2389 = vmatpush1.bf16.msra.mxu0 0
        %2390 = vmatprep.mubr.bf16.mxu0 0
        %2391 = vmatmul.mubr.bf16.gmra.mrb[0].mxu0 %v2353
        %v2392 = vpop.f32.mrb[0].mxu0
        %v2393 = vadd.f32 0.0, %v2392
        %v2394 = vpop.f32.mrb[0].mxu0
        %v2395 = vpop.f32.mrb[0].mxu0
        %v2396 = vpop.f32.mrb[0].mxu0
        %2397 = vdwg.mxu0
        %v2398 = vadd.f32 %v2345, %v2393
        %v2399 = vld [vmem:[%s955] sm:$0x3]
        %v2400 = vld [vmem:[%s1 + $0x7] sm:$0x1]
        %v2401 = vlaneseq
        %v2402 = vshrl.u32 %v2401, 7
        %v2403 = vsub.s32 0, %v2402
        %v2404 = vrot.slane %v2400, %v2403
        %2406 = vrot.lane.b32.xlu0 %v2404, 9
        %v2407 = vpop.permute.xlu0 %2406
        %v2409 = vmul.f32 %v1290, %v2407
        %v2410 = vpack.c.bf16 %v2409, %v2409
        %2412 = vrot.lane.b32.xlu0 %v2410, 119
        %v2413 = vpop.permute.xlu0 %2412
        %v2415 = vsel %vm531, %v2399, 0
        %v2418 = vsel %vm535, %v2413, 0
        %2420 = vmatprep.subr.bf16.mxu0 0
        %2421 = vmatpush1.bf16.msra.mxu0 %v2418
        %2422 = vmatprep.subr.bf16.mxu0 0
        %2423 = vmatpush1.bf16.msra.mxu0 0
        %2424 = vmatprep.subr.bf16.mxu0 0
        %2425 = vmatpush1.bf16.msra.mxu0 0
        %2426 = vmatprep.subr.bf16.mxu0 0
        %2427 = vmatpush1.bf16.msra.mxu0 0
        %2428 = vmatprep.subr.bf16.mxu0 0
        %2429 = vmatpush1.bf16.msra.mxu0 0
        %2430 = vmatprep.subr.bf16.mxu0 0
        %2431 = vmatpush1.bf16.msra.mxu0 0
        %2432 = vmatprep.subr.bf16.mxu0 0
        %2433 = vmatpush1.bf16.msra.mxu0 0
        %2434 = vmatprep.subr.bf16.mxu0 0
        %2435 = vmatpush1.bf16.msra.mxu0 0
        %2436 = vmatprep.subr.bf16.mxu0 0
        %2437 = vmatpush1.bf16.msra.mxu0 0
        %2438 = vmatprep.subr.bf16.mxu0 0
        %2439 = vmatpush1.bf16.msra.mxu0 0
        %2440 = vmatprep.subr.bf16.mxu0 0
        %2441 = vmatpush1.bf16.msra.mxu0 0
        %2442 = vmatprep.subr.bf16.mxu0 0
        %2443 = vmatpush1.bf16.msra.mxu0 0
        %2444 = vmatprep.subr.bf16.mxu0 0
        %2445 = vmatpush1.bf16.msra.mxu0 0
        %2446 = vmatprep.subr.bf16.mxu0 0
        %2447 = vmatpush1.bf16.msra.mxu0 0
        %2448 = vmatprep.subr.bf16.mxu0 0
        %2449 = vmatpush1.bf16.msra.mxu0 0
        %2450 = vmatprep.subr.bf16.mxu0 0
        %2451 = vmatpush1.bf16.msra.mxu0 0
        %2452 = vmatprep.mubr.bf16.mxu0 0
        %2453 = vmatmul.mubr.bf16.gmra.mrb[0].mxu0 %v2415
        %v2454 = vpop.f32.mrb[0].mxu0
        %v2455 = vadd.f32 0.0, %v2454
        %v2456 = vpop.f32.mrb[0].mxu0
        %v2457 = vpop.f32.mrb[0].mxu0
        %v2458 = vpop.f32.mrb[0].mxu0
        %2459 = vdwg.mxu0
        %v2460 = vadd.f32 %v2398, %v2455
        %v2461 = vld [vmem:[%s3] sm:$0xf]
        %2463 = vset.pattern.permute.xlu0 0
        %2464 = vperm.xlu0 %2463, %v2461
        %v2465 = vpop.permute.xlu0 %2464
        %v2467 = vadd.f32 %v2460, %v2465
        %s2468 = sld [smem:[#allocation4]]
        %vm2469 = vcmp.ge.f32.partialorder %v2467, 0.0
        %v2470 = vstv %s2468
        %v2471 = vmul.f32 %v2470, %v2467
        %v2472 = vsel %vm2469, %v2467, %v2471
        %2473 = vst.msk [vmem:[#allocation2 + $0xc] sm:$0xf] %vm1017, %v2472
        %v2474 = vld [vmem:[#allocation2] sm:$0xff]
        %v2475 = vld [vmem:[#allocation2 + $0x8] sm:$0xff]
        %v2476 = vpack.c.bf16 %v2475, %v2474
        %v2477 = vld [vmem:[%s4] sm:$0xf]
        %v2478 = vld [vmem:[%s7] sm:$0xff]
        %2480 = vset.pattern.permute.xlu0 0
        %2481 = vperm.xlu0 %2480, %v2478
        %v2482 = vpop.permute.xlu0 %2481
        %vm2484 = vcmask 130048
        %v2486 = vsel %vm2484, %v2477, 0
        %2488 = vmatprep.subr.bf16.mxu0 0
        %2489 = vmatpush1.bf16.msra.mxu0 %v2476
        %2490 = vmatprep.subr.bf16.mxu0 0
        %2491 = vmatpush1.bf16.msra.mxu0 0
        %2492 = vmatprep.subr.bf16.mxu0 0
        %2493 = vmatpush1.bf16.msra.mxu0 0
        %2494 = vmatprep.subr.bf16.mxu0 0
        %2495 = vmatpush1.bf16.msra.mxu0 0
        %2496 = vmatprep.subr.bf16.mxu0 0
        %2497 = vmatpush1.bf16.msra.mxu0 0
        %2498 = vmatprep.subr.bf16.mxu0 0
        %2499 = vmatpush1.bf16.msra.mxu0 0
        %2500 = vmatprep.subr.bf16.mxu0 0
        %2501 = vmatpush1.bf16.msra.mxu0 0
        %2502 = vmatprep.subr.bf16.mxu0 0
        %2503 = vmatpush1.bf16.msra.mxu0 0
        %2504 = vmatprep.subr.bf16.mxu0 0
        %2505 = vmatpush1.bf16.msra.mxu0 0
        %2506 = vmatprep.subr.bf16.mxu0 0
        %2507 = vmatpush1.bf16.msra.mxu0 0
        %2508 = vmatprep.subr.bf16.mxu0 0
        %2509 = vmatpush1.bf16.msra.mxu0 0
        %2510 = vmatprep.subr.bf16.mxu0 0
        %2511 = vmatpush1.bf16.msra.mxu0 0
        %2512 = vmatprep.subr.bf16.mxu0 0
        %2513 = vmatpush1.bf16.msra.mxu0 0
        %2514 = vmatprep.subr.bf16.mxu0 0
        %2515 = vmatpush1.bf16.msra.mxu0 0
        %2516 = vmatprep.subr.bf16.mxu0 0
        %2517 = vmatpush1.bf16.msra.mxu0 0
        %2518 = vmatprep.subr.bf16.mxu0 0
        %2519 = vmatpush1.bf16.msra.mxu0 0
        %2520 = vmatprep.mubr.bf16.mxu0 0
        %2521 = vmatmul.mubr.bf16.gmra.mrb[0].mxu0 %v2486
        %v2522 = vpop.f32.mrb[0].mxu0
        %v2523 = vadd.f32 %v2482, %v2522
        %v2524 = vpop.f32.mrb[0].mxu0
        %v2525 = vpop.f32.mrb[0].mxu0
        %v2526 = vpop.f32.mrb[0].mxu0
        %2527 = vdwg.mxu0
        %s2528 = sld [smem:[#allocation4 + $0x1]]
        %vm2529 = vcmp.ge.f32.partialorder %v2523, 0.0
        %v2530 = vstv %s2528
        %v2531 = vmul.f32 %v2530, %v2523
        %v2532 = vsel %vm2529, %v2523, %v2531
        %vm2533 = vcmask 523264
        %2534 = vst.msk [vmem:[#allocation3] sm:$0xff] %vm2533, %v2532
        %v2535 = vld [vmem:[%s5] sm:$0xf]
        %2536 = vrot.lane.b32.xlu0 %v2474, 64
        %v2537 = vpop.permute.xlu0 %2536
        %v2538 = vsel %vm491, %v2537, %v2474
        %2539 = vrot.lane.b32.xlu0 %v2475, 64
        %v2540 = vpop.permute.xlu0 %2539
        %v2541 = vsel %vm491, %v2540, %v2475
        %2542 = vrot.lane.b32.xlu0 %v2538, 64
        %v2543 = vpop.permute.xlu0 %2542
        %2544 = vrot.lane.b32.xlu0 %v2541, 64
        %v2545 = vpop.permute.xlu0 %2544
        %v2546 = vsel %vm491, %v2543, %v2474
        %v2547 = vsel %vm491, %v2545, %v2475
        %v2548 = vld [vmem:[%s1] sm:$0x1]
        %v2549 = vlaneseq
        %v2550 = vshrl.u32 %v2549, 7
        %v2551 = vsub.s32 0, %v2550
        %v2552 = vrot.slane %v2548, %v2551
        %2554 = vrot.lane.b32.xlu0 %v2552, 55
        %v2555 = vpop.permute.xlu0 %2554
        %v2557 = vmul.f32 %v2546, %v2555
        %v2558 = vmul.f32 %v2547, %v2555
        %v2559 = vpack.c.bf16 %v2558, %v2557
        %s2560 = scalar_lea.vmem %s5, 4
        %v2561 = vld [vmem:[%s2560] sm:$0xf]
        %v2562 = vld [vmem:[%s1 + $0x1] sm:$0x1]
        %v2563 = vlaneseq
        %v2564 = vshrl.u32 %v2563, 7
        %v2565 = vsub.s32 0, %v2564
        %v2566 = vrot.slane %v2562, %v2565
        %2568 = vrot.lane.b32.xlu0 %v2566, 56
        %v2569 = vpop.permute.xlu0 %2568
        %v2571 = vmul.f32 %v2546, %v2569
        %v2572 = vmul.f32 %v2547, %v2569
        %v2573 = vpack.c.bf16 %v2572, %v2571
        %2575 = vrot.lane.b32.xlu0 %v2573, 72
        %v2576 = vpop.permute.xlu0 %2575
        %v2579 = vsel %vm2484, %v2561, 0
        %2581 = vmatprep.subr.bf16.mxu0 0
        %2582 = vmatpush1.bf16.msra.mxu0 %v2576
        %2583 = vmatprep.subr.bf16.mxu0 0
        %2584 = vmatpush1.bf16.msra.mxu0 0
        %2585 = vmatprep.subr.bf16.mxu0 0
        %2586 = vmatpush1.bf16.msra.mxu0 0
        %2587 = vmatprep.subr.bf16.mxu0 0
        %2588 = vmatpush1.bf16.msra.mxu0 0
        %2589 = vmatprep.subr.bf16.mxu0 0
        %2590 = vmatpush1.bf16.msra.mxu0 0
        %2591 = vmatprep.subr.bf16.mxu0 0
        %2592 = vmatpush1.bf16.msra.mxu0 0
        %2593 = vmatprep.subr.bf16.mxu0 0
        %2594 = vmatpush1.bf16.msra.mxu0 0
        %2595 = vmatprep.subr.bf16.mxu0 0
        %2596 = vmatpush1.bf16.msra.mxu0 0
        %2597 = vmatprep.subr.bf16.mxu0 0
        %2598 = vmatpush1.bf16.msra.mxu0 0
        %2599 = vmatprep.subr.bf16.mxu0 0
        %2600 = vmatpush1.bf16.msra.mxu0 0
        %2601 = vmatprep.subr.bf16.mxu0 0
        %2602 = vmatpush1.bf16.msra.mxu0 0
        %2603 = vmatprep.subr.bf16.mxu0 0
        %2604 = vmatpush1.bf16.msra.mxu0 0
        %2605 = vmatprep.subr.bf16.mxu0 0
        %2606 = vmatpush1.bf16.msra.mxu0 0
        %2607 = vmatprep.subr.bf16.mxu0 0
        %2608 = vmatpush1.bf16.msra.mxu0 0
        %2609 = vmatprep.subr.bf16.mxu0 0
        %2610 = vmatpush1.bf16.msra.mxu0 0
        %2611 = vmatprep.subr.bf16.mxu0 0
        %2612 = vmatpush1.bf16.msra.mxu0 0
        %2613 = vmatprep.mubr.bf16.mxu0 0
        %2614 = vmatmul.mubr.bf16.gmra.mrb[0].mxu0 %v2579
        %v2615 = vpop.f32.mrb[0].mxu0
        %v2616 = vadd.f32 0.0, %v2615
        %v2617 = vpop.f32.mrb[0].mxu0
        %v2618 = vpop.f32.mrb[0].mxu0
        %v2619 = vpop.f32.mrb[0].mxu0
        %2620 = vdwg.mxu0
        %2622 = vrot.lane.b32.xlu0 %v2559, 73
        %v2623 = vpop.permute.xlu0 %2622
        %v2626 = vsel %vm2484, %v2535, 0
        %2628 = vmatprep.subr.bf16.mxu0 0
        %2629 = vmatpush1.bf16.msra.mxu0 %v2623
        %2630 = vmatprep.subr.bf16.mxu0 0
        %2631 = vmatpush1.bf16.msra.mxu0 0
        %2632 = vmatprep.subr.bf16.mxu0 0
        %2633 = vmatpush1.bf16.msra.mxu0 0
        %2634 = vmatprep.subr.bf16.mxu0 0
        %2635 = vmatpush1.bf16.msra.mxu0 0
        %2636 = vmatprep.subr.bf16.mxu0 0
        %2637 = vmatpush1.bf16.msra.mxu0 0
        %2638 = vmatprep.subr.bf16.mxu0 0
        %2639 = vmatpush1.bf16.msra.mxu0 0
        %2640 = vmatprep.subr.bf16.mxu0 0
        %2641 = vmatpush1.bf16.msra.mxu0 0
        %2642 = vmatprep.subr.bf16.mxu0 0
        %2643 = vmatpush1.bf16.msra.mxu0 0
        %2644 = vmatprep.subr.bf16.mxu0 0
        %2645 = vmatpush1.bf16.msra.mxu0 0
        %2646 = vmatprep.subr.bf16.mxu0 0
        %2647 = vmatpush1.bf16.msra.mxu0 0
        %2648 = vmatprep.subr.bf16.mxu0 0
        %2649 = vmatpush1.bf16.msra.mxu0 0
        %2650 = vmatprep.subr.bf16.mxu0 0
        %2651 = vmatpush1.bf16.msra.mxu0 0
        %2652 = vmatprep.subr.bf16.mxu0 0
        %2653 = vmatpush1.bf16.msra.mxu0 0
        %2654 = vmatprep.subr.bf16.mxu0 0
        %2655 = vmatpush1.bf16.msra.mxu0 0
        %2656 = vmatprep.subr.bf16.mxu0 0
        %2657 = vmatpush1.bf16.msra.mxu0 0
        %2658 = vmatprep.subr.bf16.mxu0 0
        %2659 = vmatpush1.bf16.msra.mxu0 0
        %2660 = vmatprep.mubr.bf16.mxu0 0
        %2661 = vmatmul.mubr.bf16.gmra.mrb[0].mxu0 %v2626
        %v2662 = vpop.f32.mrb[0].mxu0
        %v2663 = vadd.f32 %v2616, %v2662
        %v2664 = vpop.f32.mrb[0].mxu0
        %v2665 = vpop.f32.mrb[0].mxu0
        %v2666 = vpop.f32.mrb[0].mxu0
        %2667 = vdwg.mxu0
        %s2668 = scalar_lea.vmem %s5, 8
        %v2669 = vld [vmem:[%s2668] sm:$0xf]
        %v2670 = vld [vmem:[%s1 + $0x3] sm:$0x1]
        %v2671 = vlaneseq
        %v2672 = vshrl.u32 %v2671, 7
        %v2673 = vsub.s32 0, %v2672
        %v2674 = vrot.slane %v2670, %v2673
        %2676 = vrot.lane.b32.xlu0 %v2674, 57
        %v2677 = vpop.permute.xlu0 %2676
        %v2679 = vmul.f32 %v2546, %v2677
        %v2680 = vmul.f32 %v2547, %v2677
        %v2681 = vpack.c.bf16 %v2680, %v2679
        %2683 = vrot.lane.b32.xlu0 %v2681, 71
        %v2684 = vpop.permute.xlu0 %2683
        %v2687 = vsel %vm2484, %v2669, 0
        %2689 = vmatprep.subr.bf16.mxu0 0
        %2690 = vmatpush1.bf16.msra.mxu0 %v2684
        %2691 = vmatprep.subr.bf16.mxu0 0
        %2692 = vmatpush1.bf16.msra.mxu0 0
        %2693 = vmatprep.subr.bf16.mxu0 0
        %2694 = vmatpush1.bf16.msra.mxu0 0
        %2695 = vmatprep.subr.bf16.mxu0 0
        %2696 = vmatpush1.bf16.msra.mxu0 0
        %2697 = vmatprep.subr.bf16.mxu0 0
        %2698 = vmatpush1.bf16.msra.mxu0 0
        %2699 = vmatprep.subr.bf16.mxu0 0
        %2700 = vmatpush1.bf16.msra.mxu0 0
        %2701 = vmatprep.subr.bf16.mxu0 0
        %2702 = vmatpush1.bf16.msra.mxu0 0
        %2703 = vmatprep.subr.bf16.mxu0 0
        %2704 = vmatpush1.bf16.msra.mxu0 0
        %2705 = vmatprep.subr.bf16.mxu0 0
        %2706 = vmatpush1.bf16.msra.mxu0 0
        %2707 = vmatprep.subr.bf16.mxu0 0
        %2708 = vmatpush1.bf16.msra.mxu0 0
        %2709 = vmatprep.subr.bf16.mxu0 0
        %2710 = vmatpush1.bf16.msra.mxu0 0
        %2711 = vmatprep.subr.bf16.mxu0 0
        %2712 = vmatpush1.bf16.msra.mxu0 0
        %2713 = vmatprep.subr.bf16.mxu0 0
        %2714 = vmatpush1.bf16.msra.mxu0 0
        %2715 = vmatprep.subr.bf16.mxu0 0
        %2716 = vmatpush1.bf16.msra.mxu0 0
        %2717 = vmatprep.subr.bf16.mxu0 0
        %2718 = vmatpush1.bf16.msra.mxu0 0
        %2719 = vmatprep.subr.bf16.mxu0 0
        %2720 = vmatpush1.bf16.msra.mxu0 0
        %2721 = vmatprep.mubr.bf16.mxu0 0
        %2722 = vmatmul.mubr.bf16.gmra.mrb[0].mxu0 %v2687
        %v2723 = vpop.f32.mrb[0].mxu0
        %v2724 = vadd.f32 0.0, %v2723
        %v2725 = vpop.f32.mrb[0].mxu0
        %v2726 = vpop.f32.mrb[0].mxu0
        %v2727 = vpop.f32.mrb[0].mxu0
        %2728 = vdwg.mxu0
        %v2729 = vadd.f32 %v2663, %v2724
        %s2730 = scalar_lea.vmem %s5, 12
        %v2731 = vld [vmem:[%s2730] sm:$0xf]
        %v2732 = vld [vmem:[%s1 + $0x2] sm:$0x1]
        %v2733 = vlaneseq
        %v2734 = vshrl.u32 %v2733, 7
        %v2735 = vsub.s32 0, %v2734
        %v2736 = vrot.slane %v2732, %v2735
        %2738 = vrot.lane.b32.xlu0 %v2736, 63
        %v2739 = vpop.permute.xlu0 %2738
        %v2741 = vmul.f32 %v2546, %v2739
        %v2742 = vmul.f32 %v2547, %v2739
        %v2743 = vpack.c.bf16 %v2742, %v2741
        %2745 = vrot.lane.b32.xlu0 %v2743, 65
        %v2746 = vpop.permute.xlu0 %2745
        %v2749 = vsel %vm2484, %v2731, 0
        %2751 = vmatprep.subr.bf16.mxu0 0
        %2752 = vmatpush1.bf16.msra.mxu0 %v2746
        %2753 = vmatprep.subr.bf16.mxu0 0
        %2754 = vmatpush1.bf16.msra.mxu0 0
        %2755 = vmatprep.subr.bf16.mxu0 0
        %2756 = vmatpush1.bf16.msra.mxu0 0
        %2757 = vmatprep.subr.bf16.mxu0 0
        %2758 = vmatpush1.bf16.msra.mxu0 0
        %2759 = vmatprep.subr.bf16.mxu0 0
        %2760 = vmatpush1.bf16.msra.mxu0 0
        %2761 = vmatprep.subr.bf16.mxu0 0
        %2762 = vmatpush1.bf16.msra.mxu0 0
        %2763 = vmatprep.subr.bf16.mxu0 0
        %2764 = vmatpush1.bf16.msra.mxu0 0
        %2765 = vmatprep.subr.bf16.mxu0 0
        %2766 = vmatpush1.bf16.msra.mxu0 0
        %2767 = vmatprep.subr.bf16.mxu0 0
        %2768 = vmatpush1.bf16.msra.mxu0 0
        %2769 = vmatprep.subr.bf16.mxu0 0
        %2770 = vmatpush1.bf16.msra.mxu0 0
        %2771 = vmatprep.subr.bf16.mxu0 0
        %2772 = vmatpush1.bf16.msra.mxu0 0
        %2773 = vmatprep.subr.bf16.mxu0 0
        %2774 = vmatpush1.bf16.msra.mxu0 0
        %2775 = vmatprep.subr.bf16.mxu0 0
        %2776 = vmatpush1.bf16.msra.mxu0 0
        %2777 = vmatprep.subr.bf16.mxu0 0
        %2778 = vmatpush1.bf16.msra.mxu0 0
        %2779 = vmatprep.subr.bf16.mxu0 0
        %2780 = vmatpush1.bf16.msra.mxu0 0
        %2781 = vmatprep.subr.bf16.mxu0 0
        %2782 = vmatpush1.bf16.msra.mxu0 0
        %2783 = vmatprep.mubr.bf16.mxu0 0
        %2784 = vmatmul.mubr.bf16.gmra.mrb[0].mxu0 %v2749
        %v2785 = vpop.f32.mrb[0].mxu0
        %v2786 = vadd.f32 0.0, %v2785
        %v2787 = vpop.f32.mrb[0].mxu0
        %v2788 = vpop.f32.mrb[0].mxu0
        %v2789 = vpop.f32.mrb[0].mxu0
        %2790 = vdwg.mxu0
        %v2791 = vadd.f32 %v2729, %v2786
        %s2792 = scalar_lea.vmem %s5, 16
        %v2793 = vld [vmem:[%s2792] sm:$0xf]
        %v2795 = vsel %vm2484, %v2793, 0
        %2797 = vmatprep.subr.bf16.mxu0 0
        %2798 = vmatpush1.bf16.msra.mxu0 %v2476
        %2799 = vmatprep.subr.bf16.mxu0 0
        %2800 = vmatpush1.bf16.msra.mxu0 0
        %2801 = vmatprep.subr.bf16.mxu0 0
        %2802 = vmatpush1.bf16.msra.mxu0 0
        %2803 = vmatprep.subr.bf16.mxu0 0
        %2804 = vmatpush1.bf16.msra.mxu0 0
        %2805 = vmatprep.subr.bf16.mxu0 0
        %2806 = vmatpush1.bf16.msra.mxu0 0
        %2807 = vmatprep.subr.bf16.mxu0 0
        %2808 = vmatpush1.bf16.msra.mxu0 0
        %2809 = vmatprep.subr.bf16.mxu0 0
        %2810 = vmatpush1.bf16.msra.mxu0 0
        %2811 = vmatprep.subr.bf16.mxu0 0
        %2812 = vmatpush1.bf16.msra.mxu0 0
        %2813 = vmatprep.subr.bf16.mxu0 0
        %2814 = vmatpush1.bf16.msra.mxu0 0
        %2815 = vmatprep.subr.bf16.mxu0 0
        %2816 = vmatpush1.bf16.msra.mxu0 0
        %2817 = vmatprep.subr.bf16.mxu0 0
        %2818 = vmatpush1.bf16.msra.mxu0 0
        %2819 = vmatprep.subr.bf16.mxu0 0
        %2820 = vmatpush1.bf16.msra.mxu0 0
        %2821 = vmatprep.subr.bf16.mxu0 0
        %2822 = vmatpush1.bf16.msra.mxu0 0
        %2823 = vmatprep.subr.bf16.mxu0 0
        %2824 = vmatpush1.bf16.msra.mxu0 0
        %2825 = vmatprep.subr.bf16.mxu0 0
        %2826 = vmatpush1.bf16.msra.mxu0 0
        %2827 = vmatprep.subr.bf16.mxu0 0
        %2828 = vmatpush1.bf16.msra.mxu0 0
        %2829 = vmatprep.mubr.bf16.mxu0 0
        %2830 = vmatmul.mubr.bf16.gmra.mrb[0].mxu0 %v2795
        %v2831 = vpop.f32.mrb[0].mxu0
        %v2832 = vadd.f32 0.0, %v2831
        %v2833 = vpop.f32.mrb[0].mxu0
        %v2834 = vpop.f32.mrb[0].mxu0
        %v2835 = vpop.f32.mrb[0].mxu0
        %2836 = vdwg.mxu0
        %v2837 = vadd.f32 %v2791, %v2832
        %s2838 = scalar_lea.vmem %s5, 20
        %v2839 = vld [vmem:[%s2838] sm:$0xf]
        %v2840 = vld [vmem:[%s1 + $0x4] sm:$0x1]
        %v2841 = vlaneseq
        %v2842 = vshrl.u32 %v2841, 7
        %v2843 = vsub.s32 0, %v2842
        %v2844 = vrot.slane %v2840, %v2843
        %2846 = vrot.lane.b32.xlu0 %v2844, 1
        %v2847 = vpop.permute.xlu0 %2846
        %v2849 = vmul.f32 %v2546, %v2847
        %v2850 = vmul.f32 %v2547, %v2847
        %v2851 = vpack.c.bf16 %v2850, %v2849
        %2853 = vrot.lane.b32.xlu0 %v2851, 127
        %v2854 = vpop.permute.xlu0 %2853
        %v2857 = vsel %vm2484, %v2839, 0
        %2859 = vmatprep.subr.bf16.mxu0 0
        %2860 = vmatpush1.bf16.msra.mxu0 %v2854
        %2861 = vmatprep.subr.bf16.mxu0 0
        %2862 = vmatpush1.bf16.msra.mxu0 0
        %2863 = vmatprep.subr.bf16.mxu0 0
        %2864 = vmatpush1.bf16.msra.mxu0 0
        %2865 = vmatprep.subr.bf16.mxu0 0
        %2866 = vmatpush1.bf16.msra.mxu0 0
        %2867 = vmatprep.subr.bf16.mxu0 0
        %2868 = vmatpush1.bf16.msra.mxu0 0
        %2869 = vmatprep.subr.bf16.mxu0 0
        %2870 = vmatpush1.bf16.msra.mxu0 0
        %2871 = vmatprep.subr.bf16.mxu0 0
        %2872 = vmatpush1.bf16.msra.mxu0 0
        %2873 = vmatprep.subr.bf16.mxu0 0
        %2874 = vmatpush1.bf16.msra.mxu0 0
        %2875 = vmatprep.subr.bf16.mxu0 0
        %2876 = vmatpush1.bf16.msra.mxu0 0
        %2877 = vmatprep.subr.bf16.mxu0 0
        %2878 = vmatpush1.bf16.msra.mxu0 0
        %2879 = vmatprep.subr.bf16.mxu0 0
        %2880 = vmatpush1.bf16.msra.mxu0 0
        %2881 = vmatprep.subr.bf16.mxu0 0
        %2882 = vmatpush1.bf16.msra.mxu0 0
        %2883 = vmatprep.subr.bf16.mxu0 0
        %2884 = vmatpush1.bf16.msra.mxu0 0
        %2885 = vmatprep.subr.bf16.mxu0 0
        %2886 = vmatpush1.bf16.msra.mxu0 0
        %2887 = vmatprep.subr.bf16.mxu0 0
        %2888 = vmatpush1.bf16.msra.mxu0 0
        %2889 = vmatprep.subr.bf16.mxu0 0
        %2890 = vmatpush1.bf16.msra.mxu0 0
        %2891 = vmatprep.mubr.bf16.mxu0 0
        %2892 = vmatmul.mubr.bf16.gmra.mrb[0].mxu0 %v2857
        %v2893 = vpop.f32.mrb[0].mxu0
        %v2894 = vadd.f32 0.0, %v2893
        %v2895 = vpop.f32.mrb[0].mxu0
        %v2896 = vpop.f32.mrb[0].mxu0
        %v2897 = vpop.f32.mrb[0].mxu0
        %2898 = vdwg.mxu0
        %v2899 = vadd.f32 %v2837, %v2894
        %s2900 = scalar_lea.vmem %s5, 24
        %v2901 = vld [vmem:[%s2900] sm:$0xf]
        %v2902 = vld [vmem:[%s1 + $0x5] sm:$0x1]
        %v2903 = vlaneseq
        %v2904 = vshrl.u32 %v2903, 7
        %v2905 = vsub.s32 0, %v2904
        %v2906 = vrot.slane %v2902, %v2905
        %2908 = vrot.lane.b32.xlu0 %v2906, 7
        %v2909 = vpop.permute.xlu0 %2908
        %v2911 = vmul.f32 %v2546, %v2909
        %v2912 = vmul.f32 %v2547, %v2909
        %v2913 = vpack.c.bf16 %v2912, %v2911
        %2915 = vrot.lane.b32.xlu0 %v2913, 121
        %v2916 = vpop.permute.xlu0 %2915
        %v2919 = vsel %vm2484, %v2901, 0
        %2921 = vmatprep.subr.bf16.mxu0 0
        %2922 = vmatpush1.bf16.msra.mxu0 %v2916
        %2923 = vmatprep.subr.bf16.mxu0 0
        %2924 = vmatpush1.bf16.msra.mxu0 0
        %2925 = vmatprep.subr.bf16.mxu0 0
        %2926 = vmatpush1.bf16.msra.mxu0 0
        %2927 = vmatprep.subr.bf16.mxu0 0
        %2928 = vmatpush1.bf16.msra.mxu0 0
        %2929 = vmatprep.subr.bf16.mxu0 0
        %2930 = vmatpush1.bf16.msra.mxu0 0
        %2931 = vmatprep.subr.bf16.mxu0 0
        %2932 = vmatpush1.bf16.msra.mxu0 0
        %2933 = vmatprep.subr.bf16.mxu0 0
        %2934 = vmatpush1.bf16.msra.mxu0 0
        %2935 = vmatprep.subr.bf16.mxu0 0
        %2936 = vmatpush1.bf16.msra.mxu0 0
        %2937 = vmatprep.subr.bf16.mxu0 0
        %2938 = vmatpush1.bf16.msra.mxu0 0
        %2939 = vmatprep.subr.bf16.mxu0 0
        %2940 = vmatpush1.bf16.msra.mxu0 0
        %2941 = vmatprep.subr.bf16.mxu0 0
        %2942 = vmatpush1.bf16.msra.mxu0 0
        %2943 = vmatprep.subr.bf16.mxu0 0
        %2944 = vmatpush1.bf16.msra.mxu0 0
        %2945 = vmatprep.subr.bf16.mxu0 0
        %2946 = vmatpush1.bf16.msra.mxu0 0
        %2947 = vmatprep.subr.bf16.mxu0 0
        %2948 = vmatpush1.bf16.msra.mxu0 0
        %2949 = vmatprep.subr.bf16.mxu0 0
        %2950 = vmatpush1.bf16.msra.mxu0 0
        %2951 = vmatprep.subr.bf16.mxu0 0
        %2952 = vmatpush1.bf16.msra.mxu0 0
        %2953 = vmatprep.mubr.bf16.mxu0 0
        %2954 = vmatmul.mubr.bf16.gmra.mrb[0].mxu0 %v2919
        %v2955 = vpop.f32.mrb[0].mxu0
        %v2956 = vadd.f32 0.0, %v2955
        %v2957 = vpop.f32.mrb[0].mxu0
        %v2958 = vpop.f32.mrb[0].mxu0
        %v2959 = vpop.f32.mrb[0].mxu0
        %2960 = vdwg.mxu0
        %v2961 = vadd.f32 %v2899, %v2956
        %s2962 = scalar_lea.vmem %s5, 28
        %v2963 = vld [vmem:[%s2962] sm:$0xf]
        %v2964 = vld [vmem:[%s1 + $0x6] sm:$0x1]
        %v2965 = vlaneseq
        %v2966 = vshrl.u32 %v2965, 7
        %v2967 = vsub.s32 0, %v2966
        %v2968 = vrot.slane %v2964, %v2967
        %2970 = vrot.lane.b32.xlu0 %v2968, 8
        %v2971 = vpop.permute.xlu0 %2970
        %v2973 = vmul.f32 %v2546, %v2971
        %v2974 = vmul.f32 %v2547, %v2971
        %v2975 = vpack.c.bf16 %v2974, %v2973
        %2977 = vrot.lane.b32.xlu0 %v2975, 120
        %v2978 = vpop.permute.xlu0 %2977
        %v2981 = vsel %vm2484, %v2963, 0
        %2983 = vmatprep.subr.bf16.mxu0 0
        %2984 = vmatpush1.bf16.msra.mxu0 %v2978
        %2985 = vmatprep.subr.bf16.mxu0 0
        %2986 = vmatpush1.bf16.msra.mxu0 0
        %2987 = vmatprep.subr.bf16.mxu0 0
        %2988 = vmatpush1.bf16.msra.mxu0 0
        %2989 = vmatprep.subr.bf16.mxu0 0
        %2990 = vmatpush1.bf16.msra.mxu0 0
        %2991 = vmatprep.subr.bf16.mxu0 0
        %2992 = vmatpush1.bf16.msra.mxu0 0
        %2993 = vmatprep.subr.bf16.mxu0 0
        %2994 = vmatpush1.bf16.msra.mxu0 0
        %2995 = vmatprep.subr.bf16.mxu0 0
        %2996 = vmatpush1.bf16.msra.mxu0 0
        %2997 = vmatprep.subr.bf16.mxu0 0
        %2998 = vmatpush1.bf16.msra.mxu0 0
        %2999 = vmatprep.subr.bf16.mxu0 0
        %3000 = vmatpush1.bf16.msra.mxu0 0
        %3001 = vmatprep.subr.bf16.mxu0 0
        %3002 = vmatpush1.bf16.msra.mxu0 0
        %3003 = vmatprep.subr.bf16.mxu0 0
        %3004 = vmatpush1.bf16.msra.mxu0 0
        %3005 = vmatprep.subr.bf16.mxu0 0
        %3006 = vmatpush1.bf16.msra.mxu0 0
        %3007 = vmatprep.subr.bf16.mxu0 0
        %3008 = vmatpush1.bf16.msra.mxu0 0
        %3009 = vmatprep.subr.bf16.mxu0 0
        %3010 = vmatpush1.bf16.msra.mxu0 0
        %3011 = vmatprep.subr.bf16.mxu0 0
        %3012 = vmatpush1.bf16.msra.mxu0 0
        %3013 = vmatprep.subr.bf16.mxu0 0
        %3014 = vmatpush1.bf16.msra.mxu0 0
        %3015 = vmatprep.mubr.bf16.mxu0 0
        %3016 = vmatmul.mubr.bf16.gmra.mrb[0].mxu0 %v2981
        %v3017 = vpop.f32.mrb[0].mxu0
        %v3018 = vadd.f32 0.0, %v3017
        %v3019 = vpop.f32.mrb[0].mxu0
        %v3020 = vpop.f32.mrb[0].mxu0
        %v3021 = vpop.f32.mrb[0].mxu0
        %3022 = vdwg.mxu0
        %v3023 = vadd.f32 %v2961, %v3018
        %s3024 = scalar_lea.vmem %s5, 32
        %v3025 = vld [vmem:[%s3024] sm:$0xf]
        %v3026 = vld [vmem:[%s1 + $0x7] sm:$0x1]
        %v3027 = vlaneseq
        %v3028 = vshrl.u32 %v3027, 7
        %v3029 = vsub.s32 0, %v3028
        %v3030 = vrot.slane %v3026, %v3029
        %3032 = vrot.lane.b32.xlu0 %v3030, 9
        %v3033 = vpop.permute.xlu0 %3032
        %v3035 = vmul.f32 %v2546, %v3033
        %v3036 = vmul.f32 %v2547, %v3033
        %v3037 = vpack.c.bf16 %v3036, %v3035
        %3039 = vrot.lane.b32.xlu0 %v3037, 119
        %v3040 = vpop.permute.xlu0 %3039
        %v3043 = vsel %vm2484, %v3025, 0
        %3045 = vmatprep.subr.bf16.mxu0 0
        %3046 = vmatpush1.bf16.msra.mxu0 %v3040
        %3047 = vmatprep.subr.bf16.mxu0 0
        %3048 = vmatpush1.bf16.msra.mxu0 0
        %3049 = vmatprep.subr.bf16.mxu0 0
        %3050 = vmatpush1.bf16.msra.mxu0 0
        %3051 = vmatprep.subr.bf16.mxu0 0
        %3052 = vmatpush1.bf16.msra.mxu0 0
        %3053 = vmatprep.subr.bf16.mxu0 0
        %3054 = vmatpush1.bf16.msra.mxu0 0
        %3055 = vmatprep.subr.bf16.mxu0 0
        %3056 = vmatpush1.bf16.msra.mxu0 0
        %3057 = vmatprep.subr.bf16.mxu0 0
        %3058 = vmatpush1.bf16.msra.mxu0 0
        %3059 = vmatprep.subr.bf16.mxu0 0
        %3060 = vmatpush1.bf16.msra.mxu0 0
        %3061 = vmatprep.subr.bf16.mxu0 0
        %3062 = vmatpush1.bf16.msra.mxu0 0
        %3063 = vmatprep.subr.bf16.mxu0 0
        %3064 = vmatpush1.bf16.msra.mxu0 0
        %3065 = vmatprep.subr.bf16.mxu0 0
        %3066 = vmatpush1.bf16.msra.mxu0 0
        %3067 = vmatprep.subr.bf16.mxu0 0
        %3068 = vmatpush1.bf16.msra.mxu0 0
        %3069 = vmatprep.subr.bf16.mxu0 0
        %3070 = vmatpush1.bf16.msra.mxu0 0
        %3071 = vmatprep.subr.bf16.mxu0 0
        %3072 = vmatpush1.bf16.msra.mxu0 0
        %3073 = vmatprep.subr.bf16.mxu0 0
        %3074 = vmatpush1.bf16.msra.mxu0 0
        %3075 = vmatprep.subr.bf16.mxu0 0
        %3076 = vmatpush1.bf16.msra.mxu0 0
        %3077 = vmatprep.mubr.bf16.mxu0 0
        %3078 = vmatmul.mubr.bf16.gmra.mrb[0].mxu0 %v3043
        %v3079 = vpop.f32.mrb[0].mxu0
        %v3080 = vadd.f32 0.0, %v3079
        %v3081 = vpop.f32.mrb[0].mxu0
        %v3082 = vpop.f32.mrb[0].mxu0
        %v3083 = vpop.f32.mrb[0].mxu0
        %3084 = vdwg.mxu0
        %v3085 = vadd.f32 %v3023, %v3080
        %s3086 = scalar_lea.vmem %s7, 8
        %v3087 = vld [vmem:[%s3086] sm:$0xff]
        %3089 = vset.pattern.permute.xlu0 0
        %3090 = vperm.xlu0 %3089, %v3087
        %v3091 = vpop.permute.xlu0 %3090
        %v3093 = vadd.f32 %v3085, %v3091
        %s3094 = sld [smem:[#allocation4 + $0x2]]
        %vm3095 = vcmp.ge.f32.partialorder %v3093, 0.0
        %v3096 = vstv %s3094
        %v3097 = vmul.f32 %v3096, %v3093
        %v3098 = vsel %vm3095, %v3093, %v3097
        %3099 = vst.msk [vmem:[#allocation3 + $0x8] sm:$0xff] %vm2533, %v3098
        %s3100 = scalar_lea.vmem %s5, 36
        %v3101 = vld [vmem:[%s3100] sm:$0xf]
        %v3102 = vld [vmem:[%s1 + $0x8] sm:$0x1]
        %v3103 = vlaneseq
        %v3104 = vshrl.u32 %v3103, 7
        %v3105 = vsub.s32 0, %v3104
        %v3106 = vrot.slane %v3102, %v3105
        %3108 = vrot.lane.b32.xlu0 %v3106, 28
        %v3109 = vpop.permute.xlu0 %3108
        %v3111 = vmul.f32 %v2546, %v3109
        %v3112 = vmul.f32 %v2547, %v3109
        %v3113 = vpack.c.bf16 %v3112, %v3111
        %s3114 = scalar_lea.vmem %s5, 40
        %v3115 = vld [vmem:[%s3114] sm:$0xf]
        %v3116 = vld [vmem:[%s1 + $0x9] sm:$0x1]
        %v3117 = vlaneseq
        %v3118 = vshrl.u32 %v3117, 7
        %v3119 = vsub.s32 0, %v3118
        %v3120 = vrot.slane %v3116, %v3119
        %3122 = vrot.lane.b32.xlu0 %v3120, 32
        %v3123 = vpop.permute.xlu0 %3122
        %v3125 = vmul.f32 %v2546, %v3123
        %v3126 = vmul.f32 %v2547, %v3123
        %v3127 = vpack.c.bf16 %v3126, %v3125
        %3129 = vrot.lane.b32.xlu0 %v3127, 96
        %v3130 = vpop.permute.xlu0 %3129
        %v3133 = vsel %vm2484, %v3115, 0
        %3135 = vmatprep.subr.bf16.mxu0 0
        %3136 = vmatpush1.bf16.msra.mxu0 %v3130
        %3137 = vmatprep.subr.bf16.mxu0 0
        %3138 = vmatpush1.bf16.msra.mxu0 0
        %3139 = vmatprep.subr.bf16.mxu0 0
        %3140 = vmatpush1.bf16.msra.mxu0 0
        %3141 = vmatprep.subr.bf16.mxu0 0
        %3142 = vmatpush1.bf16.msra.mxu0 0
        %3143 = vmatprep.subr.bf16.mxu0 0
        %3144 = vmatpush1.bf16.msra.mxu0 0
        %3145 = vmatprep.subr.bf16.mxu0 0
        %3146 = vmatpush1.bf16.msra.mxu0 0
        %3147 = vmatprep.subr.bf16.mxu0 0
        %3148 = vmatpush1.bf16.msra.mxu0 0
        %3149 = vmatprep.subr.bf16.mxu0 0
        %3150 = vmatpush1.bf16.msra.mxu0 0
        %3151 = vmatprep.subr.bf16.mxu0 0
        %3152 = vmatpush1.bf16.msra.mxu0 0
        %3153 = vmatprep.subr.bf16.mxu0 0
        %3154 = vmatpush1.bf16.msra.mxu0 0
        %3155 = vmatprep.subr.bf16.mxu0 0
        %3156 = vmatpush1.bf16.msra.mxu0 0
        %3157 = vmatprep.subr.bf16.mxu0 0
        %3158 = vmatpush1.bf16.msra.mxu0 0
        %3159 = vmatprep.subr.bf16.mxu0 0
        %3160 = vmatpush1.bf16.msra.mxu0 0
        %3161 = vmatprep.subr.bf16.mxu0 0
        %3162 = vmatpush1.bf16.msra.mxu0 0
        %3163 = vmatprep.subr.bf16.mxu0 0
        %3164 = vmatpush1.bf16.msra.mxu0 0
        %3165 = vmatprep.subr.bf16.mxu0 0
        %3166 = vmatpush1.bf16.msra.mxu0 0
        %3167 = vmatprep.mubr.bf16.mxu0 0
        %3168 = vmatmul.mubr.bf16.gmra.mrb[0].mxu0 %v3133
        %v3169 = vpop.f32.mrb[0].mxu0
        %v3170 = vadd.f32 0.0, %v3169
        %v3171 = vpop.f32.mrb[0].mxu0
        %v3172 = vpop.f32.mrb[0].mxu0
        %v3173 = vpop.f32.mrb[0].mxu0
        %3174 = vdwg.mxu0
        %3176 = vrot.lane.b32.xlu0 %v3113, 100
        %v3177 = vpop.permute.xlu0 %3176
        %v3180 = vsel %vm2484, %v3101, 0
        %3182 = vmatprep.subr.bf16.mxu0 0
        %3183 = vmatpush1.bf16.msra.mxu0 %v3177
        %3184 = vmatprep.subr.bf16.mxu0 0
        %3185 = vmatpush1.bf16.msra.mxu0 0
        %3186 = vmatprep.subr.bf16.mxu0 0
        %3187 = vmatpush1.bf16.msra.mxu0 0
        %3188 = vmatprep.subr.bf16.mxu0 0
        %3189 = vmatpush1.bf16.msra.mxu0 0
        %3190 = vmatprep.subr.bf16.mxu0 0
        %3191 = vmatpush1.bf16.msra.mxu0 0
        %3192 = vmatprep.subr.bf16.mxu0 0
        %3193 = vmatpush1.bf16.msra.mxu0 0
        %3194 = vmatprep.subr.bf16.mxu0 0
        %3195 = vmatpush1.bf16.msra.mxu0 0
        %3196 = vmatprep.subr.bf16.mxu0 0
        %3197 = vmatpush1.bf16.msra.mxu0 0
        %3198 = vmatprep.subr.bf16.mxu0 0
        %3199 = vmatpush1.bf16.msra.mxu0 0
        %3200 = vmatprep.subr.bf16.mxu0 0
        %3201 = vmatpush1.bf16.msra.mxu0 0
        %3202 = vmatprep.subr.bf16.mxu0 0
        %3203 = vmatpush1.bf16.msra.mxu0 0
        %3204 = vmatprep.subr.bf16.mxu0 0
        %3205 = vmatpush1.bf16.msra.mxu0 0
        %3206 = vmatprep.subr.bf16.mxu0 0
        %3207 = vmatpush1.bf16.msra.mxu0 0
        %3208 = vmatprep.subr.bf16.mxu0 0
        %3209 = vmatpush1.bf16.msra.mxu0 0
        %3210 = vmatprep.subr.bf16.mxu0 0
        %3211 = vmatpush1.bf16.msra.mxu0 0
        %3212 = vmatprep.subr.bf16.mxu0 0
        %3213 = vmatpush1.bf16.msra.mxu0 0
        %3214 = vmatprep.mubr.bf16.mxu0 0
        %3215 = vmatmul.mubr.bf16.gmra.mrb[0].mxu0 %v3180
        %v3216 = vpop.f32.mrb[0].mxu0
        %v3217 = vadd.f32 %v3170, %v3216
        %v3218 = vpop.f32.mrb[0].mxu0
        %v3219 = vpop.f32.mrb[0].mxu0
        %v3220 = vpop.f32.mrb[0].mxu0
        %3221 = vdwg.mxu0
        %s3222 = scalar_lea.vmem %s5, 44
        %v3223 = vld [vmem:[%s3222] sm:$0xf]
        %v3224 = vld [vmem:[%s1 + $0xa] sm:$0x1]
        %v3225 = vlaneseq
        %v3226 = vshrl.u32 %v3225, 7
        %v3227 = vsub.s32 0, %v3226
        %v3228 = vrot.slane %v3224, %v3227
        %3230 = vrot.lane.b32.xlu0 %v3228, 36
        %v3231 = vpop.permute.xlu0 %3230
        %v3233 = vmul.f32 %v2546, %v3231
        %v3234 = vmul.f32 %v2547, %v3231
        %v3235 = vpack.c.bf16 %v3234, %v3233
        %3237 = vrot.lane.b32.xlu0 %v3235, 92
        %v3238 = vpop.permute.xlu0 %3237
        %v3241 = vsel %vm2484, %v3223, 0
        %3243 = vmatprep.subr.bf16.mxu0 0
        %3244 = vmatpush1.bf16.msra.mxu0 %v3238
        %3245 = vmatprep.subr.bf16.mxu0 0
        %3246 = vmatpush1.bf16.msra.mxu0 0
        %3247 = vmatprep.subr.bf16.mxu0 0
        %3248 = vmatpush1.bf16.msra.mxu0 0
        %3249 = vmatprep.subr.bf16.mxu0 0
        %3250 = vmatpush1.bf16.msra.mxu0 0
        %3251 = vmatprep.subr.bf16.mxu0 0
        %3252 = vmatpush1.bf16.msra.mxu0 0
        %3253 = vmatprep.subr.bf16.mxu0 0
        %3254 = vmatpush1.bf16.msra.mxu0 0
        %3255 = vmatprep.subr.bf16.mxu0 0
        %3256 = vmatpush1.bf16.msra.mxu0 0
        %3257 = vmatprep.subr.bf16.mxu0 0
        %3258 = vmatpush1.bf16.msra.mxu0 0
        %3259 = vmatprep.subr.bf16.mxu0 0
        %3260 = vmatpush1.bf16.msra.mxu0 0
        %3261 = vmatprep.subr.bf16.mxu0 0
        %3262 = vmatpush1.bf16.msra.mxu0 0
        %3263 = vmatprep.subr.bf16.mxu0 0
        %3264 = vmatpush1.bf16.msra.mxu0 0
        %3265 = vmatprep.subr.bf16.mxu0 0
        %3266 = vmatpush1.bf16.msra.mxu0 0
        %3267 = vmatprep.subr.bf16.mxu0 0
        %3268 = vmatpush1.bf16.msra.mxu0 0
        %3269 = vmatprep.subr.bf16.mxu0 0
        %3270 = vmatpush1.bf16.msra.mxu0 0
        %3271 = vmatprep.subr.bf16.mxu0 0
        %3272 = vmatpush1.bf16.msra.mxu0 0
        %3273 = vmatprep.subr.bf16.mxu0 0
        %3274 = vmatpush1.bf16.msra.mxu0 0
        %3275 = vmatprep.mubr.bf16.mxu0 0
        %3276 = vmatmul.mubr.bf16.gmra.mrb[0].mxu0 %v3241
        %v3277 = vpop.f32.mrb[0].mxu0
        %v3278 = vadd.f32 0.0, %v3277
        %v3279 = vpop.f32.mrb[0].mxu0
        %v3280 = vpop.f32.mrb[0].mxu0
        %v3281 = vpop.f32.mrb[0].mxu0
        %3282 = vdwg.mxu0
        %v3283 = vadd.f32 %v3217, %v3278
        %s3284 = scalar_lea.vmem %s5, 48
        %v3285 = vld [vmem:[%s3284] sm:$0xf]
        %v3286 = vld [vmem:[%s1 + $0xb] sm:$0x1]
        %v3287 = vlaneseq
        %v3288 = vshrl.u32 %v3287, 7
        %v3289 = vsub.s32 0, %v3288
        %v3290 = vrot.slane %v3286, %v3289
        %3292 = vrot.lane.b32.xlu0 %v3290, 60
        %v3293 = vpop.permute.xlu0 %3292
        %v3295 = vmul.f32 %v2546, %v3293
        %v3296 = vmul.f32 %v2547, %v3293
        %v3297 = vpack.c.bf16 %v3296, %v3295
        %3299 = vrot.lane.b32.xlu0 %v3297, 68
        %v3300 = vpop.permute.xlu0 %3299
        %v3303 = vsel %vm2484, %v3285, 0
        %3305 = vmatprep.subr.bf16.mxu0 0
        %3306 = vmatpush1.bf16.msra.mxu0 %v3300
        %3307 = vmatprep.subr.bf16.mxu0 0
        %3308 = vmatpush1.bf16.msra.mxu0 0
        %3309 = vmatprep.subr.bf16.mxu0 0
        %3310 = vmatpush1.bf16.msra.mxu0 0
        %3311 = vmatprep.subr.bf16.mxu0 0
        %3312 = vmatpush1.bf16.msra.mxu0 0
        %3313 = vmatprep.subr.bf16.mxu0 0
        %3314 = vmatpush1.bf16.msra.mxu0 0
        %3315 = vmatprep.subr.bf16.mxu0 0
        %3316 = vmatpush1.bf16.msra.mxu0 0
        %3317 = vmatprep.subr.bf16.mxu0 0
        %3318 = vmatpush1.bf16.msra.mxu0 0
        %3319 = vmatprep.subr.bf16.mxu0 0
        %3320 = vmatpush1.bf16.msra.mxu0 0
        %3321 = vmatprep.subr.bf16.mxu0 0
        %3322 = vmatpush1.bf16.msra.mxu0 0
        %3323 = vmatprep.subr.bf16.mxu0 0
        %3324 = vmatpush1.bf16.msra.mxu0 0
        %3325 = vmatprep.subr.bf16.mxu0 0
        %3326 = vmatpush1.bf16.msra.mxu0 0
        %3327 = vmatprep.subr.bf16.mxu0 0
        %3328 = vmatpush1.bf16.msra.mxu0 0
        %3329 = vmatprep.subr.bf16.mxu0 0
        %3330 = vmatpush1.bf16.msra.mxu0 0
        %3331 = vmatprep.subr.bf16.mxu0 0
        %3332 = vmatpush1.bf16.msra.mxu0 0
        %3333 = vmatprep.subr.bf16.mxu0 0
        %3334 = vmatpush1.bf16.msra.mxu0 0
        %3335 = vmatprep.subr.bf16.mxu0 0
        %3336 = vmatpush1.bf16.msra.mxu0 0
        %3337 = vmatprep.mubr.bf16.mxu0 0
        %3338 = vmatmul.mubr.bf16.gmra.mrb[0].mxu0 %v3303
        %v3339 = vpop.f32.mrb[0].mxu0
        %v3340 = vadd.f32 0.0, %v3339
        %v3341 = vpop.f32.mrb[0].mxu0
        %v3342 = vpop.f32.mrb[0].mxu0
        %v3343 = vpop.f32.mrb[0].mxu0
        %3344 = vdwg.mxu0
        %v3345 = vadd.f32 %v3283, %v3340
        %s3346 = scalar_lea.vmem %s5, 52
        %v3347 = vld [vmem:[%s3346] sm:$0xf]
        %v3349 = vsel %vm2484, %v3347, 0
        %3351 = vmatprep.subr.bf16.mxu0 0
        %3352 = vmatpush1.bf16.msra.mxu0 %v2476
        %3353 = vmatprep.subr.bf16.mxu0 0
        %3354 = vmatpush1.bf16.msra.mxu0 0
        %3355 = vmatprep.subr.bf16.mxu0 0
        %3356 = vmatpush1.bf16.msra.mxu0 0
        %3357 = vmatprep.subr.bf16.mxu0 0
        %3358 = vmatpush1.bf16.msra.mxu0 0
        %3359 = vmatprep.subr.bf16.mxu0 0
        %3360 = vmatpush1.bf16.msra.mxu0 0
        %3361 = vmatprep.subr.bf16.mxu0 0
        %3362 = vmatpush1.bf16.msra.mxu0 0
        %3363 = vmatprep.subr.bf16.mxu0 0
        %3364 = vmatpush1.bf16.msra.mxu0 0
        %3365 = vmatprep.subr.bf16.mxu0 0
        %3366 = vmatpush1.bf16.msra.mxu0 0
        %3367 = vmatprep.subr.bf16.mxu0 0
        %3368 = vmatpush1.bf16.msra.mxu0 0
        %3369 = vmatprep.subr.bf16.mxu0 0
        %3370 = vmatpush1.bf16.msra.mxu0 0
        %3371 = vmatprep.subr.bf16.mxu0 0
        %3372 = vmatpush1.bf16.msra.mxu0 0
        %3373 = vmatprep.subr.bf16.mxu0 0
        %3374 = vmatpush1.bf16.msra.mxu0 0
        %3375 = vmatprep.subr.bf16.mxu0 0
        %3376 = vmatpush1.bf16.msra.mxu0 0
        %3377 = vmatprep.subr.bf16.mxu0 0
        %3378 = vmatpush1.bf16.msra.mxu0 0
        %3379 = vmatprep.subr.bf16.mxu0 0
        %3380 = vmatpush1.bf16.msra.mxu0 0
        %3381 = vmatprep.subr.bf16.mxu0 0
        %3382 = vmatpush1.bf16.msra.mxu0 0
        %3383 = vmatprep.mubr.bf16.mxu0 0
        %3384 = vmatmul.mubr.bf16.gmra.mrb[0].mxu0 %v3349
        %v3385 = vpop.f32.mrb[0].mxu0
        %v3386 = vadd.f32 0.0, %v3385
        %v3387 = vpop.f32.mrb[0].mxu0
        %v3388 = vpop.f32.mrb[0].mxu0
        %v3389 = vpop.f32.mrb[0].mxu0
        %3390 = vdwg.mxu0
        %v3391 = vadd.f32 %v3345, %v3386
        %s3392 = scalar_lea.vmem %s5, 56
        %v3393 = vld [vmem:[%s3392] sm:$0xf]
        %v3394 = vld [vmem:[%s1 + $0xc] sm:$0x1]
        %v3395 = vlaneseq
        %v3396 = vshrl.u32 %v3395, 7
        %v3397 = vsub.s32 0, %v3396
        %v3398 = vrot.slane %v3394, %v3397
        %3400 = vrot.lane.b32.xlu0 %v3398, 4
        %v3401 = vpop.permute.xlu0 %3400
        %v3403 = vmul.f32 %v2546, %v3401
        %v3404 = vmul.f32 %v2547, %v3401
        %v3405 = vpack.c.bf16 %v3404, %v3403
        %3407 = vrot.lane.b32.xlu0 %v3405, 124
        %v3408 = vpop.permute.xlu0 %3407
        %v3411 = vsel %vm2484, %v3393, 0
        %3413 = vmatprep.subr.bf16.mxu0 0
        %3414 = vmatpush1.bf16.msra.mxu0 %v3408
        %3415 = vmatprep.subr.bf16.mxu0 0
        %3416 = vmatpush1.bf16.msra.mxu0 0
        %3417 = vmatprep.subr.bf16.mxu0 0
        %3418 = vmatpush1.bf16.msra.mxu0 0
        %3419 = vmatprep.subr.bf16.mxu0 0
        %3420 = vmatpush1.bf16.msra.mxu0 0
        %3421 = vmatprep.subr.bf16.mxu0 0
        %3422 = vmatpush1.bf16.msra.mxu0 0
        %3423 = vmatprep.subr.bf16.mxu0 0
        %3424 = vmatpush1.bf16.msra.mxu0 0
        %3425 = vmatprep.subr.bf16.mxu0 0
        %3426 = vmatpush1.bf16.msra.mxu0 0
        %3427 = vmatprep.subr.bf16.mxu0 0
        %3428 = vmatpush1.bf16.msra.mxu0 0
        %3429 = vmatprep.subr.bf16.mxu0 0
        %3430 = vmatpush1.bf16.msra.mxu0 0
        %3431 = vmatprep.subr.bf16.mxu0 0
        %3432 = vmatpush1.bf16.msra.mxu0 0
        %3433 = vmatprep.subr.bf16.mxu0 0
        %3434 = vmatpush1.bf16.msra.mxu0 0
        %3435 = vmatprep.subr.bf16.mxu0 0
        %3436 = vmatpush1.bf16.msra.mxu0 0
        %3437 = vmatprep.subr.bf16.mxu0 0
        %3438 = vmatpush1.bf16.msra.mxu0 0
        %3439 = vmatprep.subr.bf16.mxu0 0
        %3440 = vmatpush1.bf16.msra.mxu0 0
        %3441 = vmatprep.subr.bf16.mxu0 0
        %3442 = vmatpush1.bf16.msra.mxu0 0
        %3443 = vmatprep.subr.bf16.mxu0 0
        %3444 = vmatpush1.bf16.msra.mxu0 0
        %3445 = vmatprep.mubr.bf16.mxu0 0
        %3446 = vmatmul.mubr.bf16.gmra.mrb[0].mxu0 %v3411
        %v3447 = vpop.f32.mrb[0].mxu0
        %v3448 = vadd.f32 0.0, %v3447
        %v3449 = vpop.f32.mrb[0].mxu0
        %v3450 = vpop.f32.mrb[0].mxu0
        %v3451 = vpop.f32.mrb[0].mxu0
        %3452 = vdwg.mxu0
        %v3453 = vadd.f32 %v3391, %v3448
        %s3454 = scalar_lea.vmem %s5, 60
        %v3455 = vld [vmem:[%s3454] sm:$0xf]
        %v3456 = vld [vmem:[%s1 + $0xd] sm:$0x1]
        %v3457 = vlaneseq
        %v3458 = vshrl.u32 %v3457, 7
        %v3459 = vsub.s32 0, %v3458
        %v3460 = vrot.slane %v3456, %v3459
        %3462 = vrot.lane.b32.xlu0 %v3460, 28
        %v3463 = vpop.permute.xlu0 %3462
        %v3465 = vmul.f32 %v2546, %v3463
        %v3466 = vmul.f32 %v2547, %v3463
        %v3467 = vpack.c.bf16 %v3466, %v3465
        %3469 = vrot.lane.b32.xlu0 %v3467, 100
        %v3470 = vpop.permute.xlu0 %3469
        %v3473 = vsel %vm2484, %v3455, 0
        %3475 = vmatprep.subr.bf16.mxu0 0
        %3476 = vmatpush1.bf16.msra.mxu0 %v3470
        %3477 = vmatprep.subr.bf16.mxu0 0
        %3478 = vmatpush1.bf16.msra.mxu0 0
        %3479 = vmatprep.subr.bf16.mxu0 0
        %3480 = vmatpush1.bf16.msra.mxu0 0
        %3481 = vmatprep.subr.bf16.mxu0 0
        %3482 = vmatpush1.bf16.msra.mxu0 0
        %3483 = vmatprep.subr.bf16.mxu0 0
        %3484 = vmatpush1.bf16.msra.mxu0 0
        %3485 = vmatprep.subr.bf16.mxu0 0
        %3486 = vmatpush1.bf16.msra.mxu0 0
        %3487 = vmatprep.subr.bf16.mxu0 0
        %3488 = vmatpush1.bf16.msra.mxu0 0
        %3489 = vmatprep.subr.bf16.mxu0 0
        %3490 = vmatpush1.bf16.msra.mxu0 0
        %3491 = vmatprep.subr.bf16.mxu0 0
        %3492 = vmatpush1.bf16.msra.mxu0 0
        %3493 = vmatprep.subr.bf16.mxu0 0
        %3494 = vmatpush1.bf16.msra.mxu0 0
        %3495 = vmatprep.subr.bf16.mxu0 0
        %3496 = vmatpush1.bf16.msra.mxu0 0
        %3497 = vmatprep.subr.bf16.mxu0 0
        %3498 = vmatpush1.bf16.msra.mxu0 0
        %3499 = vmatprep.subr.bf16.mxu0 0
        %3500 = vmatpush1.bf16.msra.mxu0 0
        %3501 = vmatprep.subr.bf16.mxu0 0
        %3502 = vmatpush1.bf16.msra.mxu0 0
        %3503 = vmatprep.subr.bf16.mxu0 0
        %3504 = vmatpush1.bf16.msra.mxu0 0
        %3505 = vmatprep.subr.bf16.mxu0 0
        %3506 = vmatpush1.bf16.msra.mxu0 0
        %3507 = vmatprep.mubr.bf16.mxu0 0
        %3508 = vmatmul.mubr.bf16.gmra.mrb[0].mxu0 %v3473
        %v3509 = vpop.f32.mrb[0].mxu0
        %v3510 = vadd.f32 0.0, %v3509
        %v3511 = vpop.f32.mrb[0].mxu0
        %v3512 = vpop.f32.mrb[0].mxu0
        %v3513 = vpop.f32.mrb[0].mxu0
        %3514 = vdwg.mxu0
        %v3515 = vadd.f32 %v3453, %v3510
        %s3516 = scalar_lea.vmem %s5, 64
        %v3517 = vld [vmem:[%s3516] sm:$0xf]
        %v3518 = vld [vmem:[%s1 + $0xe] sm:$0x1]
        %v3519 = vlaneseq
        %v3520 = vshrl.u32 %v3519, 7
        %v3521 = vsub.s32 0, %v3520
        %v3522 = vrot.slane %v3518, %v3521
        %3524 = vrot.lane.b32.xlu0 %v3522, 32
        %v3525 = vpop.permute.xlu0 %3524
        %v3527 = vmul.f32 %v2546, %v3525
        %v3528 = vmul.f32 %v2547, %v3525
        %v3529 = vpack.c.bf16 %v3528, %v3527
        %3531 = vrot.lane.b32.xlu0 %v3529, 96
        %v3532 = vpop.permute.xlu0 %3531
        %v3535 = vsel %vm2484, %v3517, 0
        %3537 = vmatprep.subr.bf16.mxu0 0
        %3538 = vmatpush1.bf16.msra.mxu0 %v3532
        %3539 = vmatprep.subr.bf16.mxu0 0
        %3540 = vmatpush1.bf16.msra.mxu0 0
        %3541 = vmatprep.subr.bf16.mxu0 0
        %3542 = vmatpush1.bf16.msra.mxu0 0
        %3543 = vmatprep.subr.bf16.mxu0 0
        %3544 = vmatpush1.bf16.msra.mxu0 0
        %3545 = vmatprep.subr.bf16.mxu0 0
        %3546 = vmatpush1.bf16.msra.mxu0 0
        %3547 = vmatprep.subr.bf16.mxu0 0
        %3548 = vmatpush1.bf16.msra.mxu0 0
        %3549 = vmatprep.subr.bf16.mxu0 0
        %3550 = vmatpush1.bf16.msra.mxu0 0
        %3551 = vmatprep.subr.bf16.mxu0 0
        %3552 = vmatpush1.bf16.msra.mxu0 0
        %3553 = vmatprep.subr.bf16.mxu0 0
        %3554 = vmatpush1.bf16.msra.mxu0 0
        %3555 = vmatprep.subr.bf16.mxu0 0
        %3556 = vmatpush1.bf16.msra.mxu0 0
        %3557 = vmatprep.subr.bf16.mxu0 0
        %3558 = vmatpush1.bf16.msra.mxu0 0
        %3559 = vmatprep.subr.bf16.mxu0 0
        %3560 = vmatpush1.bf16.msra.mxu0 0
        %3561 = vmatprep.subr.bf16.mxu0 0
        %3562 = vmatpush1.bf16.msra.mxu0 0
        %3563 = vmatprep.subr.bf16.mxu0 0
        %3564 = vmatpush1.bf16.msra.mxu0 0
        %3565 = vmatprep.subr.bf16.mxu0 0
        %3566 = vmatpush1.bf16.msra.mxu0 0
        %3567 = vmatprep.subr.bf16.mxu0 0
        %3568 = vmatpush1.bf16.msra.mxu0 0
        %3569 = vmatprep.mubr.bf16.mxu0 0
        %3570 = vmatmul.mubr.bf16.gmra.mrb[0].mxu0 %v3535
        %v3571 = vpop.f32.mrb[0].mxu0
        %v3572 = vadd.f32 0.0, %v3571
        %v3573 = vpop.f32.mrb[0].mxu0
        %v3574 = vpop.f32.mrb[0].mxu0
        %v3575 = vpop.f32.mrb[0].mxu0
        %3576 = vdwg.mxu0
        %v3577 = vadd.f32 %v3515, %v3572
        %s3578 = scalar_lea.vmem %s5, 68
        %v3579 = vld [vmem:[%s3578] sm:$0xf]
        %v3580 = vld [vmem:[%s1 + $0xf] sm:$0x1]
        %v3581 = vlaneseq
        %v3582 = vshrl.u32 %v3581, 7
        %v3583 = vsub.s32 0, %v3582
        %v3584 = vrot.slane %v3580, %v3583
        %3586 = vrot.lane.b32.xlu0 %v3584, 36
        %v3587 = vpop.permute.xlu0 %3586
        %v3589 = vmul.f32 %v2546, %v3587
        %v3590 = vmul.f32 %v2547, %v3587
        %v3591 = vpack.c.bf16 %v3590, %v3589
        %3593 = vrot.lane.b32.xlu0 %v3591, 92
        %v3594 = vpop.permute.xlu0 %3593
        %v3597 = vsel %vm2484, %v3579, 0
        %3599 = vmatprep.subr.bf16.mxu0 0
        %3600 = vmatpush1.bf16.msra.mxu0 %v3594
        %3601 = vmatprep.subr.bf16.mxu0 0
        %3602 = vmatpush1.bf16.msra.mxu0 0
        %3603 = vmatprep.subr.bf16.mxu0 0
        %3604 = vmatpush1.bf16.msra.mxu0 0
        %3605 = vmatprep.subr.bf16.mxu0 0
        %3606 = vmatpush1.bf16.msra.mxu0 0
        %3607 = vmatprep.subr.bf16.mxu0 0
        %3608 = vmatpush1.bf16.msra.mxu0 0
        %3609 = vmatprep.subr.bf16.mxu0 0
        %3610 = vmatpush1.bf16.msra.mxu0 0
        %3611 = vmatprep.subr.bf16.mxu0 0
        %3612 = vmatpush1.bf16.msra.mxu0 0
        %3613 = vmatprep.subr.bf16.mxu0 0
        %3614 = vmatpush1.bf16.msra.mxu0 0
        %3615 = vmatprep.subr.bf16.mxu0 0
        %3616 = vmatpush1.bf16.msra.mxu0 0
        %3617 = vmatprep.subr.bf16.mxu0 0
        %3618 = vmatpush1.bf16.msra.mxu0 0
        %3619 = vmatprep.subr.bf16.mxu0 0
        %3620 = vmatpush1.bf16.msra.mxu0 0
        %3621 = vmatprep.subr.bf16.mxu0 0
        %3622 = vmatpush1.bf16.msra.mxu0 0
        %3623 = vmatprep.subr.bf16.mxu0 0
        %3624 = vmatpush1.bf16.msra.mxu0 0
        %3625 = vmatprep.subr.bf16.mxu0 0
        %3626 = vmatpush1.bf16.msra.mxu0 0
        %3627 = vmatprep.subr.bf16.mxu0 0
        %3628 = vmatpush1.bf16.msra.mxu0 0
        %3629 = vmatprep.subr.bf16.mxu0 0
        %3630 = vmatpush1.bf16.msra.mxu0 0
        %3631 = vmatprep.mubr.bf16.mxu0 0
        %3632 = vmatmul.mubr.bf16.gmra.mrb[0].mxu0 %v3597
        %v3633 = vpop.f32.mrb[0].mxu0
        %v3634 = vadd.f32 0.0, %v3633
        %v3635 = vpop.f32.mrb[0].mxu0
        %v3636 = vpop.f32.mrb[0].mxu0
        %v3637 = vpop.f32.mrb[0].mxu0
        %3638 = vdwg.mxu0
        %v3639 = vadd.f32 %v3577, %v3634
        %s3640 = scalar_lea.vmem %s7, 16
        %v3641 = vld [vmem:[%s3640] sm:$0xff]
        %3643 = vset.pattern.permute.xlu0 0
        %3644 = vperm.xlu0 %3643, %v3641
        %v3645 = vpop.permute.xlu0 %3644
        %v3647 = vadd.f32 %v3639, %v3645
        %s3648 = sld [smem:[#allocation4 + $0x3]]
        %vm3649 = vcmp.ge.f32.partialorder %v3647, 0.0
        %v3650 = vstv %s3648
        %v3651 = vmul.f32 %v3650, %v3647
        %v3652 = vsel %vm3649, %v3647, %v3651
        %3653 = vst.msk [vmem:[#allocation3 + $0x10] sm:$0xff] %vm2533, %v3652
        %s3654 = scalar_lea.vmem %s5, 72
        %v3655 = vld [vmem:[%s3654] sm:$0xf]
        %v3656 = vld [vmem:[%s1 + $0x10] sm:$0x1]
        %v3657 = vlaneseq
        %v3658 = vshrl.u32 %v3657, 7
        %v3659 = vsub.s32 0, %v3658
        %v3660 = vrot.slane %v3656, %v3659
        %3662 = vrot.lane.b32.xlu0 %v3660, 10
        %v3663 = vpop.permute.xlu0 %3662
        %v3665 = vmul.f32 %v2546, %v3663
        %v3666 = vmul.f32 %v2547, %v3663
        %v3667 = vpack.c.bf16 %v3666, %v3665
        %s3668 = scalar_lea.vmem %s5, 76
        %v3669 = vld [vmem:[%s3668] sm:$0xf]
        %v3670 = vld [vmem:[%s1 + $0x11] sm:$0x1]
        %v3671 = vlaneseq
        %v3672 = vshrl.u32 %v3671, 7
        %v3673 = vsub.s32 0, %v3672
        %v3674 = vrot.slane %v3670, %v3673
        %3676 = vrot.lane.b32.xlu0 %v3674, 16
        %v3677 = vpop.permute.xlu0 %3676
        %v3679 = vmul.f32 %v2546, %v3677
        %v3680 = vmul.f32 %v2547, %v3677
        %v3681 = vpack.c.bf16 %v3680, %v3679
        %3683 = vrot.lane.b32.xlu0 %v3681, 112
        %v3684 = vpop.permute.xlu0 %3683
        %v3687 = vsel %vm2484, %v3669, 0
        %3689 = vmatprep.subr.bf16.mxu0 0
        %3690 = vmatpush1.bf16.msra.mxu0 %v3684
        %3691 = vmatprep.subr.bf16.mxu0 0
        %3692 = vmatpush1.bf16.msra.mxu0 0
        %3693 = vmatprep.subr.bf16.mxu0 0
        %3694 = vmatpush1.bf16.msra.mxu0 0
        %3695 = vmatprep.subr.bf16.mxu0 0
        %3696 = vmatpush1.bf16.msra.mxu0 0
        %3697 = vmatprep.subr.bf16.mxu0 0
        %3698 = vmatpush1.bf16.msra.mxu0 0
        %3699 = vmatprep.subr.bf16.mxu0 0
        %3700 = vmatpush1.bf16.msra.mxu0 0
        %3701 = vmatprep.subr.bf16.mxu0 0
        %3702 = vmatpush1.bf16.msra.mxu0 0
        %3703 = vmatprep.subr.bf16.mxu0 0
        %3704 = vmatpush1.bf16.msra.mxu0 0
        %3705 = vmatprep.subr.bf16.mxu0 0
        %3706 = vmatpush1.bf16.msra.mxu0 0
        %3707 = vmatprep.subr.bf16.mxu0 0
        %3708 = vmatpush1.bf16.msra.mxu0 0
        %3709 = vmatprep.subr.bf16.mxu0 0
        %3710 = vmatpush1.bf16.msra.mxu0 0
        %3711 = vmatprep.subr.bf16.mxu0 0
        %3712 = vmatpush1.bf16.msra.mxu0 0
        %3713 = vmatprep.subr.bf16.mxu0 0
        %3714 = vmatpush1.bf16.msra.mxu0 0
        %3715 = vmatprep.subr.bf16.mxu0 0
        %3716 = vmatpush1.bf16.msra.mxu0 0
        %3717 = vmatprep.subr.bf16.mxu0 0
        %3718 = vmatpush1.bf16.msra.mxu0 0
        %3719 = vmatprep.subr.bf16.mxu0 0
        %3720 = vmatpush1.bf16.msra.mxu0 0
        %3721 = vmatprep.mubr.bf16.mxu0 0
        %3722 = vmatmul.mubr.bf16.gmra.mrb[0].mxu0 %v3687
        %v3723 = vpop.f32.mrb[0].mxu0
        %v3724 = vadd.f32 0.0, %v3723
        %v3725 = vpop.f32.mrb[0].mxu0
        %v3726 = vpop.f32.mrb[0].mxu0
        %v3727 = vpop.f32.mrb[0].mxu0
        %3728 = vdwg.mxu0
        %3730 = vrot.lane.b32.xlu0 %v3667, 118
        %v3731 = vpop.permute.xlu0 %3730
        %v3734 = vsel %vm2484, %v3655, 0
        %3736 = vmatprep.subr.bf16.mxu0 0
        %3737 = vmatpush1.bf16.msra.mxu0 %v3731
        %3738 = vmatprep.subr.bf16.mxu0 0
        %3739 = vmatpush1.bf16.msra.mxu0 0
        %3740 = vmatprep.subr.bf16.mxu0 0
        %3741 = vmatpush1.bf16.msra.mxu0 0
        %3742 = vmatprep.subr.bf16.mxu0 0
        %3743 = vmatpush1.bf16.msra.mxu0 0
        %3744 = vmatprep.subr.bf16.mxu0 0
        %3745 = vmatpush1.bf16.msra.mxu0 0
        %3746 = vmatprep.subr.bf16.mxu0 0
        %3747 = vmatpush1.bf16.msra.mxu0 0
        %3748 = vmatprep.subr.bf16.mxu0 0
        %3749 = vmatpush1.bf16.msra.mxu0 0
        %3750 = vmatprep.subr.bf16.mxu0 0
        %3751 = vmatpush1.bf16.msra.mxu0 0
        %3752 = vmatprep.subr.bf16.mxu0 0
        %3753 = vmatpush1.bf16.msra.mxu0 0
        %3754 = vmatprep.subr.bf16.mxu0 0
        %3755 = vmatpush1.bf16.msra.mxu0 0
        %3756 = vmatprep.subr.bf16.mxu0 0
        %3757 = vmatpush1.bf16.msra.mxu0 0
        %3758 = vmatprep.subr.bf16.mxu0 0
        %3759 = vmatpush1.bf16.msra.mxu0 0
        %3760 = vmatprep.subr.bf16.mxu0 0
        %3761 = vmatpush1.bf16.msra.mxu0 0
        %3762 = vmatprep.subr.bf16.mxu0 0
        %3763 = vmatpush1.bf16.msra.mxu0 0
        %3764 = vmatprep.subr.bf16.mxu0 0
        %3765 = vmatpush1.bf16.msra.mxu0 0
        %3766 = vmatprep.subr.bf16.mxu0 0
        %3767 = vmatpush1.bf16.msra.mxu0 0
        %3768 = vmatprep.mubr.bf16.mxu0 0
        %3769 = vmatmul.mubr.bf16.gmra.mrb[0].mxu0 %v3734
        %v3770 = vpop.f32.mrb[0].mxu0
        %v3771 = vadd.f32 %v3724, %v3770
        %v3772 = vpop.f32.mrb[0].mxu0
        %v3773 = vpop.f32.mrb[0].mxu0
        %v3774 = vpop.f32.mrb[0].mxu0
        %3775 = vdwg.mxu0
        %s3776 = scalar_lea.vmem %s5, 80
        %v3777 = vld [vmem:[%s3776] sm:$0xf]
        %v3778 = vld [vmem:[%s1 + $0x12] sm:$0x1]
        %v3779 = vlaneseq
        %v3780 = vshrl.u32 %v3779, 7
        %v3781 = vsub.s32 0, %v3780
        %v3782 = vrot.slane %v3778, %v3781
        %3784 = vrot.lane.b32.xlu0 %v3782, 22
        %v3785 = vpop.permute.xlu0 %3784
        %v3787 = vmul.f32 %v2546, %v3785
        %v3788 = vmul.f32 %v2547, %v3785
        %v3789 = vpack.c.bf16 %v3788, %v3787
        %3791 = vrot.lane.b32.xlu0 %v3789, 106
        %v3792 = vpop.permute.xlu0 %3791
        %v3795 = vsel %vm2484, %v3777, 0
        %3797 = vmatprep.subr.bf16.mxu0 0
        %3798 = vmatpush1.bf16.msra.mxu0 %v3792
        %3799 = vmatprep.subr.bf16.mxu0 0
        %3800 = vmatpush1.bf16.msra.mxu0 0
        %3801 = vmatprep.subr.bf16.mxu0 0
        %3802 = vmatpush1.bf16.msra.mxu0 0
        %3803 = vmatprep.subr.bf16.mxu0 0
        %3804 = vmatpush1.bf16.msra.mxu0 0
        %3805 = vmatprep.subr.bf16.mxu0 0
        %3806 = vmatpush1.bf16.msra.mxu0 0
        %3807 = vmatprep.subr.bf16.mxu0 0
        %3808 = vmatpush1.bf16.msra.mxu0 0
        %3809 = vmatprep.subr.bf16.mxu0 0
        %3810 = vmatpush1.bf16.msra.mxu0 0
        %3811 = vmatprep.subr.bf16.mxu0 0
        %3812 = vmatpush1.bf16.msra.mxu0 0
        %3813 = vmatprep.subr.bf16.mxu0 0
        %3814 = vmatpush1.bf16.msra.mxu0 0
        %3815 = vmatprep.subr.bf16.mxu0 0
        %3816 = vmatpush1.bf16.msra.mxu0 0
        %3817 = vmatprep.subr.bf16.mxu0 0
        %3818 = vmatpush1.bf16.msra.mxu0 0
        %3819 = vmatprep.subr.bf16.mxu0 0
        %3820 = vmatpush1.bf16.msra.mxu0 0
        %3821 = vmatprep.subr.bf16.mxu0 0
        %3822 = vmatpush1.bf16.msra.mxu0 0
        %3823 = vmatprep.subr.bf16.mxu0 0
        %3824 = vmatpush1.bf16.msra.mxu0 0
        %3825 = vmatprep.subr.bf16.mxu0 0
        %3826 = vmatpush1.bf16.msra.mxu0 0
        %3827 = vmatprep.subr.bf16.mxu0 0
        %3828 = vmatpush1.bf16.msra.mxu0 0
        %3829 = vmatprep.mubr.bf16.mxu0 0
        %3830 = vmatmul.mubr.bf16.gmra.mrb[0].mxu0 %v3795
        %v3831 = vpop.f32.mrb[0].mxu0
        %v3832 = vadd.f32 0.0, %v3831
        %v3833 = vpop.f32.mrb[0].mxu0
        %v3834 = vpop.f32.mrb[0].mxu0
        %v3835 = vpop.f32.mrb[0].mxu0
        %3836 = vdwg.mxu0
        %v3837 = vadd.f32 %v3771, %v3832
        %s3838 = scalar_lea.vmem %s5, 84
        %v3839 = vld [vmem:[%s3838] sm:$0xf]
        %v3840 = vld [vmem:[%s1 + $0x13] sm:$0x1]
        %v3841 = vlaneseq
        %v3842 = vshrl.u32 %v3841, 7
        %v3843 = vsub.s32 0, %v3842
        %v3844 = vrot.slane %v3840, %v3843
        %3846 = vrot.lane.b32.xlu0 %v3844, 58
        %v3847 = vpop.permute.xlu0 %3846
        %v3849 = vmul.f32 %v2546, %v3847
        %v3850 = vmul.f32 %v2547, %v3847
        %v3851 = vpack.c.bf16 %v3850, %v3849
        %3853 = vrot.lane.b32.xlu0 %v3851, 70
        %v3854 = vpop.permute.xlu0 %3853
        %v3857 = vsel %vm2484, %v3839, 0
        %3859 = vmatprep.subr.bf16.mxu0 0
        %3860 = vmatpush1.bf16.msra.mxu0 %v3854
        %3861 = vmatprep.subr.bf16.mxu0 0
        %3862 = vmatpush1.bf16.msra.mxu0 0
        %3863 = vmatprep.subr.bf16.mxu0 0
        %3864 = vmatpush1.bf16.msra.mxu0 0
        %3865 = vmatprep.subr.bf16.mxu0 0
        %3866 = vmatpush1.bf16.msra.mxu0 0
        %3867 = vmatprep.subr.bf16.mxu0 0
        %3868 = vmatpush1.bf16.msra.mxu0 0
        %3869 = vmatprep.subr.bf16.mxu0 0
        %3870 = vmatpush1.bf16.msra.mxu0 0
        %3871 = vmatprep.subr.bf16.mxu0 0
        %3872 = vmatpush1.bf16.msra.mxu0 0
        %3873 = vmatprep.subr.bf16.mxu0 0
        %3874 = vmatpush1.bf16.msra.mxu0 0
        %3875 = vmatprep.subr.bf16.mxu0 0
        %3876 = vmatpush1.bf16.msra.mxu0 0
        %3877 = vmatprep.subr.bf16.mxu0 0
        %3878 = vmatpush1.bf16.msra.mxu0 0
        %3879 = vmatprep.subr.bf16.mxu0 0
        %3880 = vmatpush1.bf16.msra.mxu0 0
        %3881 = vmatprep.subr.bf16.mxu0 0
        %3882 = vmatpush1.bf16.msra.mxu0 0
        %3883 = vmatprep.subr.bf16.mxu0 0
        %3884 = vmatpush1.bf16.msra.mxu0 0
        %3885 = vmatprep.subr.bf16.mxu0 0
        %3886 = vmatpush1.bf16.msra.mxu0 0
        %3887 = vmatprep.subr.bf16.mxu0 0
        %3888 = vmatpush1.bf16.msra.mxu0 0
        %3889 = vmatprep.subr.bf16.mxu0 0
        %3890 = vmatpush1.bf16.msra.mxu0 0
        %3891 = vmatprep.mubr.bf16.mxu0 0
        %3892 = vmatmul.mubr.bf16.gmra.mrb[0].mxu0 %v3857
        %v3893 = vpop.f32.mrb[0].mxu0
        %v3894 = vadd.f32 0.0, %v3893
        %v3895 = vpop.f32.mrb[0].mxu0
        %v3896 = vpop.f32.mrb[0].mxu0
        %v3897 = vpop.f32.mrb[0].mxu0
        %3898 = vdwg.mxu0
        %v3899 = vadd.f32 %v3837, %v3894
        %s3900 = scalar_lea.vmem %s5, 88
        %v3901 = vld [vmem:[%s3900] sm:$0xf]
        %v3903 = vsel %vm2484, %v3901, 0
        %3905 = vmatprep.subr.bf16.mxu0 0
        %3906 = vmatpush1.bf16.msra.mxu0 %v2476
        %3907 = vmatprep.subr.bf16.mxu0 0
        %3908 = vmatpush1.bf16.msra.mxu0 0
        %3909 = vmatprep.subr.bf16.mxu0 0
        %3910 = vmatpush1.bf16.msra.mxu0 0
        %3911 = vmatprep.subr.bf16.mxu0 0
        %3912 = vmatpush1.bf16.msra.mxu0 0
        %3913 = vmatprep.subr.bf16.mxu0 0
        %3914 = vmatpush1.bf16.msra.mxu0 0
        %3915 = vmatprep.subr.bf16.mxu0 0
        %3916 = vmatpush1.bf16.msra.mxu0 0
        %3917 = vmatprep.subr.bf16.mxu0 0
        %3918 = vmatpush1.bf16.msra.mxu0 0
        %3919 = vmatprep.subr.bf16.mxu0 0
        %3920 = vmatpush1.bf16.msra.mxu0 0
        %3921 = vmatprep.subr.bf16.mxu0 0
        %3922 = vmatpush1.bf16.msra.mxu0 0
        %3923 = vmatprep.subr.bf16.mxu0 0
        %3924 = vmatpush1.bf16.msra.mxu0 0
        %3925 = vmatprep.subr.bf16.mxu0 0
        %3926 = vmatpush1.bf16.msra.mxu0 0
        %3927 = vmatprep.subr.bf16.mxu0 0
        %3928 = vmatpush1.bf16.msra.mxu0 0
        %3929 = vmatprep.subr.bf16.mxu0 0
        %3930 = vmatpush1.bf16.msra.mxu0 0
        %3931 = vmatprep.subr.bf16.mxu0 0
        %3932 = vmatpush1.bf16.msra.mxu0 0
        %3933 = vmatprep.subr.bf16.mxu0 0
        %3934 = vmatpush1.bf16.msra.mxu0 0
        %3935 = vmatprep.subr.bf16.mxu0 0
        %3936 = vmatpush1.bf16.msra.mxu0 0
        %3937 = vmatprep.mubr.bf16.mxu0 0
        %3938 = vmatmul.mubr.bf16.gmra.mrb[0].mxu0 %v3903
        %v3939 = vpop.f32.mrb[0].mxu0
        %v3940 = vadd.f32 0.0, %v3939
        %v3941 = vpop.f32.mrb[0].mxu0
        %v3942 = vpop.f32.mrb[0].mxu0
        %v3943 = vpop.f32.mrb[0].mxu0
        %3944 = vdwg.mxu0
        %v3945 = vadd.f32 %v3899, %v3940
        %s3946 = scalar_lea.vmem %s5, 92
        %v3947 = vld [vmem:[%s3946] sm:$0xf]
        %v3948 = vld [vmem:[%s1 + $0x14] sm:$0x1]
        %v3949 = vlaneseq
        %v3950 = vshrl.u32 %v3949, 7
        %v3951 = vsub.s32 0, %v3950
        %v3952 = vrot.slane %v3948, %v3951
        %3954 = vrot.lane.b32.xlu0 %v3952, 6
        %v3955 = vpop.permute.xlu0 %3954
        %v3957 = vmul.f32 %v2546, %v3955
        %v3958 = vmul.f32 %v2547, %v3955
        %v3959 = vpack.c.bf16 %v3958, %v3957
        %3961 = vrot.lane.b32.xlu0 %v3959, 122
        %v3962 = vpop.permute.xlu0 %3961
        %v3965 = vsel %vm2484, %v3947, 0
        %3967 = vmatprep.subr.bf16.mxu0 0
        %3968 = vmatpush1.bf16.msra.mxu0 %v3962
        %3969 = vmatprep.subr.bf16.mxu0 0
        %3970 = vmatpush1.bf16.msra.mxu0 0
        %3971 = vmatprep.subr.bf16.mxu0 0
        %3972 = vmatpush1.bf16.msra.mxu0 0
        %3973 = vmatprep.subr.bf16.mxu0 0
        %3974 = vmatpush1.bf16.msra.mxu0 0
        %3975 = vmatprep.subr.bf16.mxu0 0
        %3976 = vmatpush1.bf16.msra.mxu0 0
        %3977 = vmatprep.subr.bf16.mxu0 0
        %3978 = vmatpush1.bf16.msra.mxu0 0
        %3979 = vmatprep.subr.bf16.mxu0 0
        %3980 = vmatpush1.bf16.msra.mxu0 0
        %3981 = vmatprep.subr.bf16.mxu0 0
        %3982 = vmatpush1.bf16.msra.mxu0 0
        %3983 = vmatprep.subr.bf16.mxu0 0
        %3984 = vmatpush1.bf16.msra.mxu0 0
        %3985 = vmatprep.subr.bf16.mxu0 0
        %3986 = vmatpush1.bf16.msra.mxu0 0
        %3987 = vmatprep.subr.bf16.mxu0 0
        %3988 = vmatpush1.bf16.msra.mxu0 0
        %3989 = vmatprep.subr.bf16.mxu0 0
        %3990 = vmatpush1.bf16.msra.mxu0 0
        %3991 = vmatprep.subr.bf16.mxu0 0
        %3992 = vmatpush1.bf16.msra.mxu0 0
        %3993 = vmatprep.subr.bf16.mxu0 0
        %3994 = vmatpush1.bf16.msra.mxu0 0
        %3995 = vmatprep.subr.bf16.mxu0 0
        %3996 = vmatpush1.bf16.msra.mxu0 0
        %3997 = vmatprep.subr.bf16.mxu0 0
        %3998 = vmatpush1.bf16.msra.mxu0 0
        %3999 = vmatprep.mubr.bf16.mxu0 0
        %4000 = vmatmul.mubr.bf16.gmra.mrb[0].mxu0 %v3965
        %v4001 = vpop.f32.mrb[0].mxu0
        %v4002 = vadd.f32 0.0, %v4001
        %v4003 = vpop.f32.mrb[0].mxu0
        %v4004 = vpop.f32.mrb[0].mxu0
        %v4005 = vpop.f32.mrb[0].mxu0
        %4006 = vdwg.mxu0
        %v4007 = vadd.f32 %v3945, %v4002
        %s4008 = scalar_lea.vmem %s5, 96
        %v4009 = vld [vmem:[%s4008] sm:$0xf]
        %v4010 = vld [vmem:[%s1 + $0x15] sm:$0x1]
        %v4011 = vlaneseq
        %v4012 = vshrl.u32 %v4011, 7
        %v4013 = vsub.s32 0, %v4012
        %v4014 = vrot.slane %v4010, %v4013
        %4016 = vrot.lane.b32.xlu0 %v4014, 42
        %v4017 = vpop.permute.xlu0 %4016
        %v4019 = vmul.f32 %v2546, %v4017
        %v4020 = vmul.f32 %v2547, %v4017
        %v4021 = vpack.c.bf16 %v4020, %v4019
        %4023 = vrot.lane.b32.xlu0 %v4021, 86
        %v4024 = vpop.permute.xlu0 %4023
        %v4027 = vsel %vm2484, %v4009, 0
        %4029 = vmatprep.subr.bf16.mxu0 0
        %4030 = vmatpush1.bf16.msra.mxu0 %v4024
        %4031 = vmatprep.subr.bf16.mxu0 0
        %4032 = vmatpush1.bf16.msra.mxu0 0
        %4033 = vmatprep.subr.bf16.mxu0 0
        %4034 = vmatpush1.bf16.msra.mxu0 0
        %4035 = vmatprep.subr.bf16.mxu0 0
        %4036 = vmatpush1.bf16.msra.mxu0 0
        %4037 = vmatprep.subr.bf16.mxu0 0
        %4038 = vmatpush1.bf16.msra.mxu0 0
        %4039 = vmatprep.subr.bf16.mxu0 0
        %4040 = vmatpush1.bf16.msra.mxu0 0
        %4041 = vmatprep.subr.bf16.mxu0 0
        %4042 = vmatpush1.bf16.msra.mxu0 0
        %4043 = vmatprep.subr.bf16.mxu0 0
        %4044 = vmatpush1.bf16.msra.mxu0 0
        %4045 = vmatprep.subr.bf16.mxu0 0
        %4046 = vmatpush1.bf16.msra.mxu0 0
        %4047 = vmatprep.subr.bf16.mxu0 0
        %4048 = vmatpush1.bf16.msra.mxu0 0
        %4049 = vmatprep.subr.bf16.mxu0 0
        %4050 = vmatpush1.bf16.msra.mxu0 0
        %4051 = vmatprep.subr.bf16.mxu0 0
        %4052 = vmatpush1.bf16.msra.mxu0 0
        %4053 = vmatprep.subr.bf16.mxu0 0
        %4054 = vmatpush1.bf16.msra.mxu0 0
        %4055 = vmatprep.subr.bf16.mxu0 0
        %4056 = vmatpush1.bf16.msra.mxu0 0
        %4057 = vmatprep.subr.bf16.mxu0 0
        %4058 = vmatpush1.bf16.msra.mxu0 0
        %4059 = vmatprep.subr.bf16.mxu0 0
        %4060 = vmatpush1.bf16.msra.mxu0 0
        %4061 = vmatprep.mubr.bf16.mxu0 0
        %4062 = vmatmul.mubr.bf16.gmra.mrb[0].mxu0 %v4027
        %v4063 = vpop.f32.mrb[0].mxu0
        %v4064 = vadd.f32 0.0, %v4063
        %v4065 = vpop.f32.mrb[0].mxu0
        %v4066 = vpop.f32.mrb[0].mxu0
        %v4067 = vpop.f32.mrb[0].mxu0
        %4068 = vdwg.mxu0
        %v4069 = vadd.f32 %v4007, %v4064
        %s4070 = scalar_lea.vmem %s5, 100
        %v4071 = vld [vmem:[%s4070] sm:$0xf]
        %v4072 = vld [vmem:[%s1 + $0x16] sm:$0x1]
        %v4073 = vlaneseq
        %v4074 = vshrl.u32 %v4073, 7
        %v4075 = vsub.s32 0, %v4074
        %v4076 = vrot.slane %v4072, %v4075
        %4078 = vrot.lane.b32.xlu0 %v4076, 48
        %v4079 = vpop.permute.xlu0 %4078
        %v4081 = vmul.f32 %v2546, %v4079
        %v4082 = vmul.f32 %v2547, %v4079
        %v4083 = vpack.c.bf16 %v4082, %v4081
        %4085 = vrot.lane.b32.xlu0 %v4083, 80
        %v4086 = vpop.permute.xlu0 %4085
        %v4089 = vsel %vm2484, %v4071, 0
        %4091 = vmatprep.subr.bf16.mxu0 0
        %4092 = vmatpush1.bf16.msra.mxu0 %v4086
        %4093 = vmatprep.subr.bf16.mxu0 0
        %4094 = vmatpush1.bf16.msra.mxu0 0
        %4095 = vmatprep.subr.bf16.mxu0 0
        %4096 = vmatpush1.bf16.msra.mxu0 0
        %4097 = vmatprep.subr.bf16.mxu0 0
        %4098 = vmatpush1.bf16.msra.mxu0 0
        %4099 = vmatprep.subr.bf16.mxu0 0
        %4100 = vmatpush1.bf16.msra.mxu0 0
        %4101 = vmatprep.subr.bf16.mxu0 0
        %4102 = vmatpush1.bf16.msra.mxu0 0
        %4103 = vmatprep.subr.bf16.mxu0 0
        %4104 = vmatpush1.bf16.msra.mxu0 0
        %4105 = vmatprep.subr.bf16.mxu0 0
        %4106 = vmatpush1.bf16.msra.mxu0 0
        %4107 = vmatprep.subr.bf16.mxu0 0
        %4108 = vmatpush1.bf16.msra.mxu0 0
        %4109 = vmatprep.subr.bf16.mxu0 0
        %4110 = vmatpush1.bf16.msra.mxu0 0
        %4111 = vmatprep.subr.bf16.mxu0 0
        %4112 = vmatpush1.bf16.msra.mxu0 0
        %4113 = vmatprep.subr.bf16.mxu0 0
        %4114 = vmatpush1.bf16.msra.mxu0 0
        %4115 = vmatprep.subr.bf16.mxu0 0
        %4116 = vmatpush1.bf16.msra.mxu0 0
        %4117 = vmatprep.subr.bf16.mxu0 0
        %4118 = vmatpush1.bf16.msra.mxu0 0
        %4119 = vmatprep.subr.bf16.mxu0 0
        %4120 = vmatpush1.bf16.msra.mxu0 0
        %4121 = vmatprep.subr.bf16.mxu0 0
        %4122 = vmatpush1.bf16.msra.mxu0 0
        %4123 = vmatprep.mubr.bf16.mxu0 0
        %4124 = vmatmul.mubr.bf16.gmra.mrb[0].mxu0 %v4089
        %v4125 = vpop.f32.mrb[0].mxu0
        %v4126 = vadd.f32 0.0, %v4125
        %v4127 = vpop.f32.mrb[0].mxu0
        %v4128 = vpop.f32.mrb[0].mxu0
        %v4129 = vpop.f32.mrb[0].mxu0
        %4130 = vdwg.mxu0
        %v4131 = vadd.f32 %v4069, %v4126
        %s4132 = scalar_lea.vmem %s5, 104
        %v4133 = vld [vmem:[%s4132] sm:$0xf]
        %v4134 = vld [vmem:[%s1 + $0x17] sm:$0x1]
        %v4135 = vlaneseq
        %v4136 = vshrl.u32 %v4135, 7
        %v4137 = vsub.s32 0, %v4136
        %v4138 = vrot.slane %v4134, %v4137
        %4140 = vrot.lane.b32.xlu0 %v4138, 54
        %v4141 = vpop.permute.xlu0 %4140
        %v4143 = vmul.f32 %v2546, %v4141
        %v4144 = vmul.f32 %v2547, %v4141
        %v4145 = vpack.c.bf16 %v4144, %v4143
        %4147 = vrot.lane.b32.xlu0 %v4145, 74
        %v4148 = vpop.permute.xlu0 %4147
        %v4151 = vsel %vm2484, %v4133, 0
        %4153 = vmatprep.subr.bf16.mxu0 0
        %4154 = vmatpush1.bf16.msra.mxu0 %v4148
        %4155 = vmatprep.subr.bf16.mxu0 0
        %4156 = vmatpush1.bf16.msra.mxu0 0
        %4157 = vmatprep.subr.bf16.mxu0 0
        %4158 = vmatpush1.bf16.msra.mxu0 0
        %4159 = vmatprep.subr.bf16.mxu0 0
        %4160 = vmatpush1.bf16.msra.mxu0 0
        %4161 = vmatprep.subr.bf16.mxu0 0
        %4162 = vmatpush1.bf16.msra.mxu0 0
        %4163 = vmatprep.subr.bf16.mxu0 0
        %4164 = vmatpush1.bf16.msra.mxu0 0
        %4165 = vmatprep.subr.bf16.mxu0 0
        %4166 = vmatpush1.bf16.msra.mxu0 0
        %4167 = vmatprep.subr.bf16.mxu0 0
        %4168 = vmatpush1.bf16.msra.mxu0 0
        %4169 = vmatprep.subr.bf16.mxu0 0
        %4170 = vmatpush1.bf16.msra.mxu0 0
        %4171 = vmatprep.subr.bf16.mxu0 0
        %4172 = vmatpush1.bf16.msra.mxu0 0
        %4173 = vmatprep.subr.bf16.mxu0 0
        %4174 = vmatpush1.bf16.msra.mxu0 0
        %4175 = vmatprep.subr.bf16.mxu0 0
        %4176 = vmatpush1.bf16.msra.mxu0 0
        %4177 = vmatprep.subr.bf16.mxu0 0
        %4178 = vmatpush1.bf16.msra.mxu0 0
        %4179 = vmatprep.subr.bf16.mxu0 0
        %4180 = vmatpush1.bf16.msra.mxu0 0
        %4181 = vmatprep.subr.bf16.mxu0 0
        %4182 = vmatpush1.bf16.msra.mxu0 0
        %4183 = vmatprep.subr.bf16.mxu0 0
        %4184 = vmatpush1.bf16.msra.mxu0 0
        %4185 = vmatprep.mubr.bf16.mxu0 0
        %4186 = vmatmul.mubr.bf16.gmra.mrb[0].mxu0 %v4151
        %v4187 = vpop.f32.mrb[0].mxu0
        %v4188 = vadd.f32 0.0, %v4187
        %v4189 = vpop.f32.mrb[0].mxu0
        %v4190 = vpop.f32.mrb[0].mxu0
        %v4191 = vpop.f32.mrb[0].mxu0
        %4192 = vdwg.mxu0
        %v4193 = vadd.f32 %v4131, %v4188
        %s4194 = scalar_lea.vmem %s7, 24
        %v4195 = vld [vmem:[%s4194] sm:$0xff]
        %4197 = vset.pattern.permute.xlu0 0
        %4198 = vperm.xlu0 %4197, %v4195
        %v4199 = vpop.permute.xlu0 %4198
        %v4201 = vadd.f32 %v4193, %v4199
        %s4202 = sld [smem:[#allocation4 + $0x4]]
        %vm4203 = vcmp.ge.f32.partialorder %v4201, 0.0
        %v4204 = vstv %s4202
        %v4205 = vmul.f32 %v4204, %v4201
        %v4206 = vsel %vm4203, %v4201, %v4205
        %4207 = vst.msk [vmem:[#allocation3 + $0x18] sm:$0xff] %vm2533, %v4206
        %v4208 = vsel %vm2533, %v2474, 0.0
        %4209 = vadd.xlane.f32.xlu0 %v4208
        %v4210 = vpop.xlane.xlu0 %4209
        %v4211 = vsel %vm2533, %v2475, 0.0
        %4212 = vadd.xlane.f32.xlu0 %v4211
        %v4213 = vpop.xlane.xlu0 %4212
        %v4214 = vrcp.pop 64.0
        %v4215 = vmul.f32 %v4210, %v4214
        %v4216 = vmul.f32 %v4213, %v4214
        %v4217 = vld [vmem:[%s6] sm:$0xf]
        %v4218 = vpack.c.bf16 %v4216, %v4215
        %s4219 = scalar_lea.vmem %s7, 32
        %v4220 = vld [vmem:[%s4219] sm:$0xff]
        %v4222 = vsel %vm2484, %v4217, 0
        %4224 = vmatprep.subr.bf16.mxu0 0
        %4225 = vmatpush1.bf16.msra.mxu0 %v4218
        %4226 = vmatprep.subr.bf16.mxu0 0
        %4227 = vmatpush1.bf16.msra.mxu0 0
        %4228 = vmatprep.subr.bf16.mxu0 0
        %4229 = vmatpush1.bf16.msra.mxu0 0
        %4230 = vmatprep.subr.bf16.mxu0 0
        %4231 = vmatpush1.bf16.msra.mxu0 0
        %4232 = vmatprep.subr.bf16.mxu0 0
        %4233 = vmatpush1.bf16.msra.mxu0 0
        %4234 = vmatprep.subr.bf16.mxu0 0
        %4235 = vmatpush1.bf16.msra.mxu0 0
        %4236 = vmatprep.subr.bf16.mxu0 0
        %4237 = vmatpush1.bf16.msra.mxu0 0
        %4238 = vmatprep.subr.bf16.mxu0 0
        %4239 = vmatpush1.bf16.msra.mxu0 0
        %4240 = vmatprep.subr.bf16.mxu0 0
        %4241 = vmatpush1.bf16.msra.mxu0 0
        %4242 = vmatprep.subr.bf16.mxu0 0
        %4243 = vmatpush1.bf16.msra.mxu0 0
        %4244 = vmatprep.subr.bf16.mxu0 0
        %4245 = vmatpush1.bf16.msra.mxu0 0
        %4246 = vmatprep.subr.bf16.mxu0 0
        %4247 = vmatpush1.bf16.msra.mxu0 0
        %4248 = vmatprep.subr.bf16.mxu0 0
        %4249 = vmatpush1.bf16.msra.mxu0 0
        %4250 = vmatprep.subr.bf16.mxu0 0
        %4251 = vmatpush1.bf16.msra.mxu0 0
        %4252 = vmatprep.subr.bf16.mxu0 0
        %4253 = vmatpush1.bf16.msra.mxu0 0
        %4254 = vmatprep.subr.bf16.mxu0 0
        %4255 = vmatpush1.bf16.msra.mxu0 0
        %4256 = vmatprep.mubr.bf16.mxu0 0
        %4257 = vmatmul.mubr.bf16.gmra.mrb[0].mxu0 %v4222
        %v4258 = vpop.f32.mrb[0].mxu0
        %v4259 = vadd.f32 %v4220, %v4258
        %v4260 = vpop.f32.mrb[0].mxu0
        %v4261 = vpop.f32.mrb[0].mxu0
        %v4262 = vpop.f32.mrb[0].mxu0
        %4263 = vdwg.mxu0
        %s4264 = sld [smem:[#allocation4 + $0x5]]
        %vm4265 = vcmp.ge.f32.partialorder %v4259, 0.0
        %v4266 = vstv %s4264
        %v4267 = vmul.f32 %v4266, %v4259
        %v4268 = vsel %vm4265, %v4259, %v4267
        %v4269 = vld [vmem:[#allocation3] sm:$0xff]
        %v4270 = vld [vmem:[#allocation3 + $0x8] sm:$0xff]
        %v4271 = vld [vmem:[#allocation3 + $0x10] sm:$0xff]
        %v4272 = vld [vmem:[#allocation3 + $0x18] sm:$0xff]
        %v4273 = vpack.c.bf16 %v4270, %v4269
        %v4274 = vpack.c.bf16 %v4272, %v4271
        %v4275 = vld [vmem:[%s8] sm:$0xf]
        %v4276 = vld [vmem:[%s8 + $0x4] sm:$0xf]
        %v4277 = vld [vmem:[%s9] sm:$0xf]
        %v4278 = vld [vmem:[%s9 + $0x4] sm:$0xf]
        %v4279 = vpack.c.bf16 %v4268, %v4268
        %v4282 = vunpack.c.l.b16 %v4277
        %v4283 = vunpack.c.l.b16 %v4278
        %v4284 = vpack.c.b16 %v4283, %v4282
        %vm4285 = vcmask 64512
        %v4287 = vsel %vm4285, %v4284, 0
        %vm4289 = vcmask 1043456
        %v4291 = vsel %vm4289, %v4279, 0
        %4293 = vmatprep.subr.bf16.mxu0 0
        %4294 = vmatpush1.bf16.msra.mxu0 %v4291
        %4295 = vmatprep.subr.bf16.mxu0 0
        %4296 = vmatpush1.bf16.msra.mxu0 0
        %4297 = vmatprep.subr.bf16.mxu0 0
        %4298 = vmatpush1.bf16.msra.mxu0 0
        %4299 = vmatprep.subr.bf16.mxu0 0
        %4300 = vmatpush1.bf16.msra.mxu0 0
        %4301 = vmatprep.subr.bf16.mxu0 0
        %4302 = vmatpush1.bf16.msra.mxu0 0
        %4303 = vmatprep.subr.bf16.mxu0 0
        %4304 = vmatpush1.bf16.msra.mxu0 0
        %4305 = vmatprep.subr.bf16.mxu0 0
        %4306 = vmatpush1.bf16.msra.mxu0 0
        %4307 = vmatprep.subr.bf16.mxu0 0
        %4308 = vmatpush1.bf16.msra.mxu0 0
        %4309 = vmatprep.subr.bf16.mxu0 0
        %4310 = vmatpush1.bf16.msra.mxu0 0
        %4311 = vmatprep.subr.bf16.mxu0 0
        %4312 = vmatpush1.bf16.msra.mxu0 0
        %4313 = vmatprep.subr.bf16.mxu0 0
        %4314 = vmatpush1.bf16.msra.mxu0 0
        %4315 = vmatprep.subr.bf16.mxu0 0
        %4316 = vmatpush1.bf16.msra.mxu0 0
        %4317 = vmatprep.subr.bf16.mxu0 0
        %4318 = vmatpush1.bf16.msra.mxu0 0
        %4319 = vmatprep.subr.bf16.mxu0 0
        %4320 = vmatpush1.bf16.msra.mxu0 0
        %4321 = vmatprep.subr.bf16.mxu0 0
        %4322 = vmatpush1.bf16.msra.mxu0 0
        %4323 = vmatprep.subr.bf16.mxu0 0
        %4324 = vmatpush1.bf16.msra.mxu0 0
        %4325 = vmatprep.mubr.bf16.mxu0 0
        %4326 = vmatmul.mubr.bf16.gmra.mrb[0].mxu0 %v4287
        %v4327 = vpop.f32.mrb[0].mxu0
        %v4328 = vadd.f32 0.0, %v4327
        %v4329 = vpop.f32.mrb[0].mxu0
        %v4330 = vpop.f32.mrb[0].mxu0
        %v4331 = vadd.f32 0.0, %v4330
        %v4332 = vpop.f32.mrb[0].mxu0
        %4333 = vdwg.mxu0
        %4335 = vset.pattern.permute.xlu0 0
        %4336 = vperm.xlu0 %4335, %v4328
        %v4337 = vpop.permute.xlu0 %4336
        %4340 = vset.pattern.permute.xlu0 0
        %4341 = vperm.xlu0 %4340, %v4331
        %v4342 = vpop.permute.xlu0 %4341
        %v4346 = vunpack.c.l.b16 %v4275
        %v4347 = vunpack.c.l.b16 %v4276
        %v4348 = vpack.c.b16 %v4347, %v4346
        %vm4349 = vcmask 261120
        %v4351 = vsel %vm4349, %v4348, 0
        %4353 = vmatprep.subr.bf16.mxu0 0
        %4354 = vmatpush1.bf16.msra.mxu0 %v4273
        %4355 = vmatprep.subr.bf16.mxu0 0
        %4356 = vmatpush1.bf16.msra.mxu0 %v4274
        %4357 = vmatprep.subr.bf16.mxu0 0
        %4358 = vmatpush1.bf16.msra.mxu0 0
        %4359 = vmatprep.subr.bf16.mxu0 0
        %4360 = vmatpush1.bf16.msra.mxu0 0
        %4361 = vmatprep.subr.bf16.mxu0 0
        %4362 = vmatpush1.bf16.msra.mxu0 0
        %4363 = vmatprep.subr.bf16.mxu0 0
        %4364 = vmatpush1.bf16.msra.mxu0 0
        %4365 = vmatprep.subr.bf16.mxu0 0
        %4366 = vmatpush1.bf16.msra.mxu0 0
        %4367 = vmatprep.subr.bf16.mxu0 0
        %4368 = vmatpush1.bf16.msra.mxu0 0
        %4369 = vmatprep.subr.bf16.mxu0 0
        %4370 = vmatpush1.bf16.msra.mxu0 0
        %4371 = vmatprep.subr.bf16.mxu0 0
        %4372 = vmatpush1.bf16.msra.mxu0 0
        %4373 = vmatprep.subr.bf16.mxu0 0
        %4374 = vmatpush1.bf16.msra.mxu0 0
        %4375 = vmatprep.subr.bf16.mxu0 0
        %4376 = vmatpush1.bf16.msra.mxu0 0
        %4377 = vmatprep.subr.bf16.mxu0 0
        %4378 = vmatpush1.bf16.msra.mxu0 0
        %4379 = vmatprep.subr.bf16.mxu0 0
        %4380 = vmatpush1.bf16.msra.mxu0 0
        %4381 = vmatprep.subr.bf16.mxu0 0
        %4382 = vmatpush1.bf16.msra.mxu0 0
        %4383 = vmatprep.subr.bf16.mxu0 0
        %4384 = vmatpush1.bf16.msra.mxu0 0
        %4385 = vmatprep.mubr.bf16.mxu0 0
        %4386 = vmatmul.mubr.bf16.gmra.mrb[0].mxu0 %v4351
        %v4387 = vpop.f32.mrb[0].mxu0
        %v4388 = vadd.f32 %v4337, %v4387
        %v4389 = vpop.f32.mrb[0].mxu0
        %v4390 = vpop.f32.mrb[0].mxu0
        %v4391 = vadd.f32 %v4342, %v4390
        %v4392 = vpop.f32.mrb[0].mxu0
        %4393 = vdwg.mxu0
        %v4394 = vld [vmem:[%s10] sm:$0xff]
        %v4395 = vld [vmem:[%s10 + $0x8] sm:$0xff]
        %4397 = vset.pattern.permute.xlu0 0
        %4398 = vperm.xlu0 %4397, %v4394
        %v4399 = vpop.permute.xlu0 %4398
        %4402 = vset.pattern.permute.xlu0 0
        %4403 = vperm.xlu0 %4402, %v4395
        %v4404 = vpop.permute.xlu0 %4403
        %v4406 = vadd.f32 %v4388, %v4399
        %v4407 = vadd.f32 %v4391, %v4404
        %s4408 = sld [smem:[#allocation4 + $0x6]]
        %vm4409 = vcmp.ge.f32.partialorder %v4406, 0.0
        %vm4410 = vcmp.ge.f32.partialorder %v4407, 0.0
        %v4411 = vstv %s4408
        %v4412 = vmul.f32 %v4411, %v4406
        %v4413 = vmul.f32 %v4411, %v4407
        %v4414 = vsel %vm4409, %v4406, %v4412
        %v4415 = vsel %vm4410, %v4407, %v4413
        %v4416 = vld [vmem:[%s11] sm:$0xf]
        %v4417 = vld [vmem:[%s11 + $0x4] sm:$0xf]
        %v4418 = vpack.c.bf16 %v4415, %v4414
        %v4419 = vld [vmem:[%s12] sm:$0xff]
        %v4420 = vld [vmem:[%s12 + $0x8] sm:$0xff]
        %4422 = vset.pattern.permute.xlu0 0
        %4423 = vperm.xlu0 %4422, %v4419
        %v4424 = vpop.permute.xlu0 %4423
        %4427 = vset.pattern.permute.xlu0 0
        %4428 = vperm.xlu0 %4427, %v4420
        %v4429 = vpop.permute.xlu0 %4428
        %v4433 = vunpack.c.l.b16 %v4416
        %v4434 = vunpack.c.l.b16 %v4417
        %v4435 = vpack.c.b16 %v4434, %v4433
        %v4437 = vsel %vm2484, %v4435, 0
        %4439 = vmatprep.subr.bf16.mxu0 0
        %4440 = vmatpush1.bf16.msra.mxu0 %v4418
        %4441 = vmatprep.subr.bf16.mxu0 0
        %4442 = vmatpush1.bf16.msra.mxu0 0
        %4443 = vmatprep.subr.bf16.mxu0 0
        %4444 = vmatpush1.bf16.msra.mxu0 0
        %4445 = vmatprep.subr.bf16.mxu0 0
        %4446 = vmatpush1.bf16.msra.mxu0 0
        %4447 = vmatprep.subr.bf16.mxu0 0
        %4448 = vmatpush1.bf16.msra.mxu0 0
        %4449 = vmatprep.subr.bf16.mxu0 0
        %4450 = vmatpush1.bf16.msra.mxu0 0
        %4451 = vmatprep.subr.bf16.mxu0 0
        %4452 = vmatpush1.bf16.msra.mxu0 0
        %4453 = vmatprep.subr.bf16.mxu0 0
        %4454 = vmatpush1.bf16.msra.mxu0 0
        %4455 = vmatprep.subr.bf16.mxu0 0
        %4456 = vmatpush1.bf16.msra.mxu0 0
        %4457 = vmatprep.subr.bf16.mxu0 0
        %4458 = vmatpush1.bf16.msra.mxu0 0
        %4459 = vmatprep.subr.bf16.mxu0 0
        %4460 = vmatpush1.bf16.msra.mxu0 0
        %4461 = vmatprep.subr.bf16.mxu0 0
        %4462 = vmatpush1.bf16.msra.mxu0 0
        %4463 = vmatprep.subr.bf16.mxu0 0
        %4464 = vmatpush1.bf16.msra.mxu0 0
        %4465 = vmatprep.subr.bf16.mxu0 0
        %4466 = vmatpush1.bf16.msra.mxu0 0
        %4467 = vmatprep.subr.bf16.mxu0 0
        %4468 = vmatpush1.bf16.msra.mxu0 0
        %4469 = vmatprep.subr.bf16.mxu0 0
        %4470 = vmatpush1.bf16.msra.mxu0 0
        %4471 = vmatprep.mubr.bf16.mxu0 0
        %4472 = vmatmul.mubr.bf16.gmra.mrb[0].mxu0 %v4437
        %v4473 = vpop.f32.mrb[0].mxu0
        %v4474 = vadd.f32 %v4424, %v4473
        %v4475 = vpop.f32.mrb[0].mxu0
        %v4476 = vpop.f32.mrb[0].mxu0
        %v4477 = vadd.f32 %v4429, %v4476
        %v4478 = vpop.f32.mrb[0].mxu0
        %4479 = vdwg.mxu0
        %4480 = vst.msk [vmem:[%s481] sm:$0xff] %vm2533, %v4474
        %4481 = vst.msk [vmem:[%s481 + $0x8] sm:$0xff] %vm2533, %v4477
        %p4482 = scmp.lt.s32.totalorder %s26, 1
        %s4483 = scalar_select %p4482, %s26, 1
        %s4484 = smul.addr %s4483, 2
        %s4485 = smul.addr %s4484, 8
        %s4486 = scalar_lea.vmem %s14, %s4485
        // Predicated region
        $region81: #{foldconv_aspp_forward.1} parent=75 // pred_check
          %p4487 = pneg %p343
        $region82: #{foldconv_aspp_forward.1} parent=75 // pred_check_branch
          %4489 = sbr.rel (%p4487) target = $region84
        $region83: #{foldconv_aspp_forward.1} parent=75 // pred_region
          _
        $region84: #{foldconv_aspp_forward.1} parent=75 // pred_fallthru
          _
      $region76: #{foldconv_aspp_forward.1} parent=5 // pred_fallthru
        _
      %p4490 = scmp.le.s32.totalorder 2, %s21
      // Predicated region
      $region85: #{foldconv_aspp_forward.1} parent=5 // pred_check
        %p4491 = pneg %p4490
      $region86: #{foldconv_aspp_forward.1} parent=5 // pred_check_branch
        %4493 = sbr.rel (%p4491) target = $region88
      $region87: #{foldconv_aspp_forward.1} parent=5 // pred_region
        %s4494 = ssub.s32 %s21, 2
        // Predicated region
        $region89: #{foldconv_aspp_forward.1} parent=87 // pred_check
          %p4495 = pneg %p349
        $region90: #{foldconv_aspp_forward.1} parent=87 // pred_check_branch
          %4497 = sbr.rel (%p4495) target = $region92
        $region91: #{foldconv_aspp_forward.1} parent=87 // pred_region
          %p4498 = scmp.lt.s32.totalorder %s27, 1
          %s4499 = scalar_select %p4498, %s27, 1
          %s4500 = smul.addr %s4499, 2
          %s4501 = smul.addr %s4500, 8
          %s4502 = scalar_lea.vmem %s14, %s4501
        $region92: #{foldconv_aspp_forward.1} parent=87 // pred_fallthru
          _
      $region88: #{foldconv_aspp_forward.1} parent=5 // pred_fallthru
        _
    $region6: #{foldconv_aspp_forward.1} parent=1 // loop_footer
      %s25 = sadd.s32 1, %s21
    $region7: #{foldconv_aspp_forward.1} parent=1 // loop_footer_branch
      %20 = sbr.rel target = $region3
    $region8: #{foldconv_aspp_forward.1} parent=1 // loop_exit
      _
    %4503 = vsyncpa [#allocation5], 1
    %s4504 = scalar_lea.sflag [#allocation5], 1
    %4505 = vsyncpa %s4504, 1

</llo_original>
